<compile_context>
chip_gen: v5e
topology: v5e:2x2
jax: 0.10.0
libtpu: 0.0.40
codegen_flags: <defaults>
</compile_context>

<pallas_src>
import functools

import jax
import jax.numpy as jnp
import numpy as np
from jax import lax
from jax.experimental import pallas as pl
from jax.experimental.pallas import tpu as pltpu

_LANE = 128            # channels are zero-padded to multiples of the lane width
_BN_EPS = 1e-5
_VMEM_LIMIT = 48 * 1024 * 1024   # > v5e/v6e/v7x scoped defaults, < v7x physical


def _ceil_to(x, m=_LANE):
    return ((x + m - 1) // m) * m


def _pad2(a, rows, cols):
    return jnp.pad(a, ((0, rows - a.shape[0]), (0, cols - a.shape[1])))


def _row_tile(hw, row_bytes):
    """Largest row tile that divides H*W (a tile never spans two images, since
    each image has its own SE gate).  The cap keeps the double-buffered
    h2/x/out tiles well inside v5e's 16 MiB scoped-VMEM default (and v7x's
    64 MiB physical) when the combined channel width gets large."""
    cap = 1024
    while cap > 8 and cap * row_bytes * 2 > (8 << 20):
        cap //= 2
    for t in (1024, 512, 256, 128, 64, 32, 16, 8):
        if t <= cap and hw % t == 0:
            return t
    # No multiple-of-8 divisor of H*W: fall back to one tile per image.  The
    # block dim then equals the full HW axis of the (N, HW, C) array, which is
    # always a legal BlockSpec (fixes the previous N>1 fallback bug).
    return hw


# --------------------------------------------------------------------------
# Pallas kernels
# --------------------------------------------------------------------------
def _head_kernel(x_ref, w1_ref, b1_ref, w2_ref, b2_ref, h2_ref, gap_ref,
                 h1p_ref, *, H, W, Wp, d):
    """conv1(1x1)+BN+ReLU -> conv2(3x3 dilated)+BN+ReLU -> SE squeeze, ONE image.

    The spatially padded conv1 activation lives only in the (Hp, Wp, Cm) VMEM
    scratch (halo stays zero, nothing padded ever hits HBM).  conv2 is a single
    K=3*Cm x N=3*Cm bf16 MXU matmul at padded width Wp; the kx tap offsets are
    folded with two small sublane shifts and one crop back to width W.
    """
    Cm = w1_ref.shape[1]
    HW = H * W
    n = H * Wp                       # rows of the width-padded conv2 workspace

    # ---- conv1 (1x1, BN folded) + ReLU on the HW interior pixels only,
    #      ReLU + bf16 cast fused into the epilogue (no f32 padded copy kept).
    h1 = jnp.dot(x_ref[0], w1_ref[...], preferred_element_type=jnp.float32)
    h1 = jnp.maximum(h1 + b1_ref[...], 0.0).astype(jnp.bfloat16)
    h1 = h1.reshape(H, W, Cm)

    # zero halo rows/cols (cheap VMEM memset), then drop the real rows in.
    h1p_ref[...] = jnp.zeros_like(h1p_ref)
    h1p_ref[d:d + H] = jnp.concatenate(
        [jnp.zeros((H, d, Cm), jnp.bfloat16), h1,
         jnp.zeros((H, Wp - W - d, Cm), jnp.bfloat16)], axis=1)

    # ---- conv2: ONE bf16 MXU matmul with K = N = 3*Cm ------------------------
    # a[:, ky*Cm:(ky+1)*Cm] is the ky-shifted view of h1p; each is a contiguous
    # leading-dim slice of the scratch (Wp is a multiple of 8 so the reshape is
    # layout-free) instead of the previous 9 misaligned slab copies.
    a = jnp.concatenate(
        [h1p_ref[ky * d:ky * d + H].reshape(n, Cm) for ky in range(3)], axis=-1)
    p = jnp.dot(a, w2_ref[...], preferred_element_type=jnp.float32)   # (n, 3*Cm)

    # Fold the kx taps: output row j needs tap kx evaluated at padded row j+kx*d.
    # Accumulate at padded width; rows that would wrap land only in cropped cols.
    acc = p[:, :Cm]
    for kx in (1, 2):
        s = kx * d
        acc = acc + jnp.concatenate(
            [p[s:, kx * Cm:(kx + 1) * Cm],
             jnp.zeros((s, Cm), jnp.float32)], axis=0)

    # crop padded width Wp -> W once, add folded BN bias, ReLU.
    h2 = acc.reshape(H, Wp, Cm)[:, :W, :].reshape(HW, Cm)
    h2 = jnp.maximum(h2 + b2_ref[...], 0.0)

    h2_ref[0] = h2.astype(h2_ref.dtype)
    # SE squeeze: spatial mean of h2 for this image (f32, before the bf16 cast).
    gap_ref[0] = jnp.mean(h2, axis=0, keepdims=True)


def _gate_kernel(gap_ref, w3_ref, b3_ref, fc1w_ref, fc1b_ref, fc2w_ref,
                 fc2b_ref, gate_ref):
    """SE excitation with bf16 MXU operands (no f32 weight upcasts).

    GAP(h3) == GAP(h2) @ w3 + b3 because conv3 is a 1x1 conv with a folded
    affine and no nonlinearity before the pool, so the spatial mean commutes."""
    nb = gap_ref.shape[0]
    pooled = gap_ref[...].reshape(nb, -1)
    p3 = jnp.dot(pooled.astype(jnp.bfloat16), w3_ref[...],
                 preferred_element_type=jnp.float32) + b3_ref[...]
    z = jnp.dot(p3.astype(jnp.bfloat16), fc1w_ref[...],
                preferred_element_type=jnp.float32) + fc1b_ref[...]
    z = jnp.maximum(z, 0.0)
    g = jnp.dot(z.astype(jnp.bfloat16), fc2w_ref[...],
                preferred_element_type=jnp.float32) + fc2b_ref[...]
    gate_ref[...] = jax.nn.sigmoid(g).reshape(nb, 1, -1)


def _tail_proj_kernel(h2_ref, x_ref, gate_ref, w3_ref, b3_ref, wsc_ref,
                      bsc_ref, o_ref):
    """Fused conv3(1x1)+BN + 1x1-projection shortcut+BN + SE scale + residual + ReLU."""
    h3 = jnp.dot(h2_ref[0], w3_ref[...],
                 preferred_element_type=jnp.float32) + b3_ref[...]
    res = jnp.dot(x_ref[0], wsc_ref[...],
                  preferred_element_type=jnp.float32) + bsc_ref[...]
    o_ref[0] = jnp.maximum(h3 * gate_ref[0] + res, 0.0).astype(o_ref.dtype)


def _tail_id_kernel(h2_ref, x_ref, gate_ref, w3_ref, b3_ref, o_ref):
    """Fused conv3(1x1)+BN + identity shortcut + SE scale + residual + ReLU."""
    h3 = jnp.dot(h2_ref[0], w3_ref[...],
                 preferred_element_type=jnp.float32) + b3_ref[...]
    res = x_ref[0].astype(jnp.float32)
    o_ref[0] = jnp.maximum(h3 * gate_ref[0] + res, 0.0).astype(o_ref.dtype)


# --------------------------------------------------------------------------
# BN folding / parameter preparation (layout plumbing, runs outside kernels)
# --------------------------------------------------------------------------
def fold_bn(bn, eps=_BN_EPS):
    scale = bn["gamma"] / jnp.sqrt(bn["var"] + eps)
    bias = bn["beta"] - bn["mean"] * scale
    return scale, bias


def _prep_block(p):
    """Fold BN scales into bf16 weights and zero-pad every channel dim to a
    multiple of 128 so all matmuls / stores are lane dense."""
    cin, mid = p["w1"].shape
    cout = p["w3"].shape[1]
    rdim = p["fc1_w"].shape[1]
    Ci, Cm, Co, Cr = (_ceil_to(c) for c in (cin, mid, cout, rdim))

    s1, b1 = fold_bn(p["bn1"])
    s2, b2 = fold_bn(p["bn2"])
    s3, b3 = fold_bn(p["bn3"])

    k = dict(cin=cin, mid=mid, cout=cout, Ci=Ci, Cm=Cm, Co=Co, Cr=Cr,
             has_proj="w_sc" in p)
    k["w1"] = _pad2((p["w1"] * s1[None, :]).astype(jnp.bfloat16), Ci, Cm)
    k["b1"] = _pad2(b1.reshape(1, mid).astype(jnp.float32), 1, Cm)
    # conv2 taps packed for a single K=3*Cm x N=3*Cm MXU matmul:
    #   w2_packed[ky*Cm + ci, kx*Cm + co] = w2_hwio[ky, kx, ci, co] * bn2_scale[co]
    w2 = (p["w2_hwio"] * s2).astype(jnp.bfloat16)
    w2 = jnp.pad(w2, ((0, 0), (0, 0), (0, Cm - mid), (0, Cm - mid)))
    k["w2"] = jnp.transpose(w2, (0, 2, 1, 3)).reshape(3 * Cm, 3 * Cm)
    k["b2"] = _pad2(b2.reshape(1, mid).astype(jnp.float32), 1, Cm)
    k["w3"] = _pad2((p["w3"] * s3[None, :]).astype(jnp.bfloat16), Cm, Co)
    k["b3"] = _pad2(b3.reshape(1, cout).astype(jnp.float32), 1, Co)
    k["fc1_w"] = _pad2(p["fc1_w"].astype(jnp.bfloat16), Co, Cr)
    k["fc1_b"] = _pad2(p["fc1_b"].reshape(1, rdim).astype(jnp.float32), 1, Cr)
    k["fc2_w"] = _pad2(p["fc2_w"].astype(jnp.bfloat16), Cr, Co)
    k["fc2_b"] = _pad2(p["fc2_b"].reshape(1, cout).astype(jnp.float32), 1, Co)
    if k["has_proj"]:
        ssc, bsc = fold_bn(p["bn_sc"])
        k["w_sc"] = _pad2((p["w_sc"] * ssc[None, :]).astype(jnp.bfloat16), Ci, Co)
        k["b_sc"] = _pad2(bsc.reshape(1, cout).astype(jnp.float32), 1, Co)
    return k


# --------------------------------------------------------------------------
# Forward (Pallas path)
# --------------------------------------------------------------------------
def _block_forward(x3d, N, H, W, kp, se, dilation):
    """One SE bottleneck block on a channel-padded bf16 slab:
    (N, H*W, Ci) -> (N, H*W, Co); padded channels stay exactly zero."""
    Ci, Cm, Co, Cr = kp["Ci"], kp["Cm"], kp["Co"], kp["Cr"]
    d = int(dilation)
    assert d >= 1
    HW = H * W
    Hp = H + 2 * d
    Wp = _ceil_to(W + 2 * d, 8)      # width padded to a sublane multiple

    # ---- head: fused conv1 + conv2 + SE squeeze, one grid step per image ----
    head_flops = 2 * N * (HW * Ci * Cm + (H * Wp) * (3 * Cm) * (3 * Cm))
    head_bytes = (N * (HW * (Ci + Cm) * 2 + Cm * 4)
                  + (Ci * Cm + 9 * Cm * Cm) * 2 + 2 * Cm * 4)
    h2, gap = pl.pallas_call(
        functools.partial(_head_kernel, H=H, W=W, Wp=Wp, d=d),
        out_shape=(jax.ShapeDtypeStruct((N, HW, Cm), jnp.bfloat16),
                   jax.ShapeDtypeStruct((N, 1, Cm), jnp.float32)),
        grid=(N,),
        in_specs=[
            pl.BlockSpec((1, HW, Ci), lambda n: (n, 0, 0)),
            pl.BlockSpec((Ci, Cm), lambda n: (0, 0)),
            pl.BlockSpec((1, Cm), lambda n: (0, 0)),
            pl.BlockSpec((3 * Cm, 3 * Cm), lambda n: (0, 0)),
            pl.BlockSpec((1, Cm), lambda n: (0, 0)),
        ],
        out_specs=(
            pl.BlockSpec((1, HW, Cm), lambda n: (n, 0, 0)),
            pl.BlockSpec((1, 1, Cm), lambda n: (n, 0, 0)),
        ),
        scratch_shapes=[pltpu.VMEM((Hp, Wp, Cm), jnp.bfloat16)],
        compiler_params=pltpu.CompilerParams(
            dimension_semantics=("parallel",),
            vmem_limit_bytes=_VMEM_LIMIT),
        cost_estimate=pl.CostEstimate(flops=int(head_flops), transcendentals=0,
                                      bytes_accessed=int(head_bytes)),
    )(x3d, kp["w1"], kp["b1"], kp["w2"], kp["b2"])

    # ---- SE excitation (tiny; N x 128 lanes, bf16 MXU operands) --------------
    if se:
        gate = pl.pallas_call(
            _gate_kernel,
            out_shape=jax.ShapeDtypeStruct((N, 1, Co), jnp.float32),
            grid=(1,),
            in_specs=[
                pl.BlockSpec((N, 1, Cm), lambda i: (0, 0, 0)),
                pl.BlockSpec((Cm, Co), lambda i: (0, 0)),
                pl.BlockSpec((1, Co), lambda i: (0, 0)),
                pl.BlockSpec((Co, Cr), lambda i: (0, 0)),
                pl.BlockSpec((1, Cr), lambda i: (0, 0)),
                pl.BlockSpec((Cr, Co), lambda i: (0, 0)),
                pl.BlockSpec((1, Co), lambda i: (0, 0)),
            ],
            out_specs=pl.BlockSpec((N, 1, Co), lambda i: (0, 0, 0)),
            compiler_params=pltpu.CompilerParams(
                dimension_semantics=("arbitrary",)),
        )(gap, kp["w3"], kp["b3"], kp["fc1_w"], kp["fc1_b"],
          kp["fc2_w"], kp["fc2_b"])
    else:
        gate = jnp.ones((N, 1, Co), jnp.float32)

    # ---- tail: fused conv3 + shortcut + SE scale + residual + ReLU ----------
    TM = _row_tile(HW, 2 * (Cm + Ci + 2 * Co))
    in_specs = [
        pl.BlockSpec((1, TM, Cm), lambda n, t: (n, t, 0)),
        pl.BlockSpec((1, TM, Ci), lambda n, t: (n, t, 0)),
        pl.BlockSpec((1, 1, Co), lambda n, t: (n, 0, 0)),
        pl.BlockSpec((Cm, Co), lambda n, t: (0, 0)),
        pl.BlockSpec((1, Co), lambda n, t: (0, 0)),
    ]
    tail_flops = 2 * N * HW * Cm * Co
    if kp["has_proj"]:
        kern = _tail_proj_kernel
        in_specs += [pl.BlockSpec((Ci, Co), lambda n, t: (0, 0)),
                     pl.BlockSpec((1, Co), lambda n, t: (0, 0))]
        args = (h2, x3d, gate, kp["w3"], kp["b3"], kp["w_sc"], kp["b_sc"])
        tail_flops += 2 * N * HW * Ci * Co
    else:
        assert Ci == Co  # identity shortcut implies cin == cout
        kern = _tail_id_kernel
        args = (h2, x3d, gate, kp["w3"], kp["b3"])
    tail_bytes = N * HW * (Cm + Ci + Co) * 2 + (Cm + Ci) * Co * 2

    out3d = pl.pallas_call(
        kern,
        out_shape=jax.ShapeDtypeStruct((N, HW, Co), jnp.bfloat16),
        grid=(N, HW // TM),
        in_specs=in_specs,
        out_specs=pl.BlockSpec((1, TM, Co), lambda n, t: (n, t, 0)),
        compiler_params=pltpu.CompilerParams(
            dimension_semantics=("parallel", "parallel"),
            vmem_limit_bytes=_VMEM_LIMIT),
        cost_estimate=pl.CostEstimate(flops=int(tail_flops), transcendentals=0,
                                      bytes_accessed=int(tail_bytes)),
    )(*args)
    return out3d


def senet_forward(x_nchw, params, se=True, dilation=1):
    """SENet forward (inference).  x: NCHW f32, like the PyTorch module."""
    x = jnp.transpose(x_nchw, (0, 2, 3, 1))               # NCHW -> NHWC
    N, H, W, cin = x.shape
    kps = [_prep_block(p) for p in params]
    x3d = jnp.pad(x.reshape(N, H * W, cin),
                  ((0, 0), (0, 0), (0, kps[0]["Ci"] - cin))).astype(jnp.bfloat16)
    for kp in kps:
        x3d = _block_forward(x3d, N, H, W, kp, se=se, dilation=dilation)
    cout = kps[-1]["cout"]
    out = x3d[:, :, :cout].astype(jnp.float32).reshape(N, H, W, cout)
    return jnp.transpose(out, (0, 3, 1, 2))               # NHWC -> NCHW


# --------------------------------------------------------------------------
# Parameter init (deterministic, synthetic) + pure-JAX f32 reference
# --------------------------------------------------------------------------
def _bn_params(key, c):
    k1, k2, k3, k4 = jax.random.split(key, 4)
    return dict(
        gamma=1.0 + 0.1 * jax.random.normal(k1, (c,), jnp.float32),
        beta=0.05 * jax.random.normal(k2, (c,), jnp.float32),
        mean=0.1 * jax.random.normal(k3, (c,), jnp.float32),
        var=jax.random.uniform(k4, (c,), jnp.float32, 0.5, 1.5),
    )


def init_block(key, cin, cout, r):
    assert cout % r == 0, "out_channels must be a multiple of r"
    mid = max(cout // 4, 1)  # bottleneck width
    ks = jax.random.split(key, 12)
    p = {}
    p["w1"] = 0.2 * jax.random.normal(ks[0], (cin, mid), jnp.float32)
    p["bn1"] = _bn_params(ks[1], mid)
    p["w2_hwio"] = 0.2 * jax.random.normal(ks[2], (3, 3, mid, mid), jnp.float32)
    p["bn2"] = _bn_params(ks[3], mid)
    p["w3"] = 0.2 * jax.random.normal(ks[4], (mid, cout), jnp.float32)
    p["bn3"] = _bn_params(ks[5], cout)
    p["fc1_w"] = 0.2 * jax.random.normal(ks[6], (cout, cout // r), jnp.float32)
    p["fc1_b"] = 0.05 * jax.random.normal(ks[7], (cout // r,), jnp.float32)
    p["fc2_w"] = 0.2 * jax.random.normal(ks[8], (cout // r, cout), jnp.float32)
    p["fc2_b"] = 0.05 * jax.random.normal(ks[9], (cout,), jnp.float32)
    if cin != cout:
        p["w_sc"] = 0.2 * jax.random.normal(ks[10], (cin, cout), jnp.float32)
        p["bn_sc"] = _bn_params(ks[11], cout)
    return p


def init_senet_params(key, in_channels, out_channels, blocks=1, r=8):
    params, cin = [], in_channels
    for _ in range(blocks):
        key, sub = jax.random.split(key)
        params.append(init_block(sub, cin, out_channels, r))
        cin = out_channels
    return params


def _ref_block(x_nhwc, p, se=True, dilation=1):
    N, H, W, Cin = x_nhwc.shape
    mid = p["w1"].shape[1]
    Cout = p["w3"].shape[1]

    def affine(y, bn):
        s, b = fold_bn(bn)
        return y * s + b

    h1 = jnp.maximum(affine(x_nhwc.reshape(-1, Cin) @ p["w1"], p["bn1"]), 0.0)
    h1 = h1.reshape(N, H, W, mid)
    h2 = lax.conv_general_dilated(
        h1, p["w2_hwio"], window_strides=(1, 1),
        padding=[(dilation, dilation), (dilation, dilation)],
        rhs_dilation=(dilation, dilation),
        dimension_numbers=("NHWC", "HWIO", "NHWC"))
    h2 = jnp.maximum(affine(h2.reshape(-1, mid), p["bn2"]), 0.0)
    h3 = affine(h2 @ p["w3"], p["bn3"]).reshape(N, H, W, Cout)
    if "w_sc" in p:
        res = affine(x_nhwc.reshape(-1, Cin) @ p["w_sc"],
                     p["bn_sc"]).reshape(N, H, W, Cout)
    else:
        res = x_nhwc
    if se:
        pooled = jnp.mean(h3, axis=(1, 2))
        z = jnp.maximum(pooled @ p["fc1_w"] + p["fc1_b"], 0.0)
        g = jax.nn.sigmoid(z @ p["fc2_w"] + p["fc2_b"])
        h3 = h3 * g[:, None, None, :]
    return jnp.maximum(h3 + res, 0.0)


def senet_reference(x_nchw, params, se=True, dilation=1):
    x = jnp.transpose(x_nchw, (0, 2, 3, 1)).astype(jnp.float32)
    for p in params:
        x = _ref_block(x, p, se=se, dilation=dilation)
    return jnp.transpose(x, (0, 3, 1, 2))


# --------------------------------------------------------------------------
if __name__ == "__main__":
    key = jax.random.PRNGKey(0)
    kx_, kparam = jax.random.split(key)

    # SENet(in_channels=4, out_channels=16, blocks=2, r=8, groups=1, dilation=1, se=True)
    # blocks=2 exercises both the projection (4->16) and identity (16->16) shortcuts.
    x = jax.random.normal(kx_, (2, 4, 16, 16), jnp.float32)       # NCHW, like PyTorch
    params = init_senet_params(kparam, in_channels=4, out_channels=16, blocks=2, r=8)

    out = jax.block_until_ready(senet_forward(x, params, se=True, dilation=1))
    assert out.shape == (2, 16, 16, 16)

    ref = senet_reference(x, params, se=True, dilation=1)
    # bf16 weights/activations vs f32 reference -> a few-percent tolerance.
    np.testing.assert_allclose(np.asarray(out), np.asarray(ref), rtol=3e-2, atol=3e-2)

    print("KERNEL_OK")
</pallas_src>

<mosaic_0001>
module attributes {stable_mosaic.version = 11 : i64} {
  func.func @_head_kernel(%arg0: i32, %arg1: memref<1x256x128xbf16, #tpu.memory_space<vmem>>, %arg2: memref<128x128xbf16, #tpu.memory_space<vmem>>, %arg3: memref<1x128xf32, #tpu.memory_space<vmem>>, %arg4: memref<384x384xbf16, #tpu.memory_space<vmem>>, %arg5: memref<1x128xf32, #tpu.memory_space<vmem>>, %arg6: memref<1x256x128xbf16, #tpu.memory_space<vmem>>, %arg7: memref<1x1x128xf32, #tpu.memory_space<vmem>>, %arg8: memref<18x24x128xbf16, #tpu.memory_space<vmem>>) attributes {dimension_semantics = [#tpu.dimension_semantics<parallel>], iteration_bounds = array<i64: 2>, scalar_prefetch = 0 : i64, scratch_operands = 1 : i64, tpu.core_type = #tpu.core_type<tc>, window_params = [{transform_indices = @transform_0, window_bounds = array<i64: 1, 256, 128>}, {pipeline_mode = #tpu.pipeline_mode<synchronous>, transform_indices = @transform_1, window_bounds = array<i64: 128, 128>}, {pipeline_mode = #tpu.pipeline_mode<synchronous>, transform_indices = @transform_2, window_bounds = array<i64: 1, 128>}, {pipeline_mode = #tpu.pipeline_mode<synchronous>, transform_indices = @transform_3, window_bounds = array<i64: 384, 384>}, {pipeline_mode = #tpu.pipeline_mode<synchronous>, transform_indices = @transform_4, window_bounds = array<i64: 1, 128>}, {transform_indices = @transform_5, window_bounds = array<i64: 1, 256, 128>}, {transform_indices = @transform_6, window_bounds = array<i64: 1, 1, 128>}]} {
    %c0 = arith.constant 0 : index
    %c0_0 = arith.constant 0 : index
    %c0_1 = arith.constant 0 : index
    %0 = vector.load %arg1[%c0, %c0_0, %c0_1] : memref<1x256x128xbf16, #tpu.memory_space<vmem>>, vector<1x256x128xbf16>
    %1 = vector.shape_cast %0 : vector<1x256x128xbf16> to vector<256x128xbf16>
    %c0_2 = arith.constant 0 : index
    %c0_3 = arith.constant 0 : index
    %2 = vector.load %arg2[%c0_2, %c0_3] : memref<128x128xbf16, #tpu.memory_space<vmem>>, vector<128x128xbf16>
    %cst = arith.constant dense<0.000000e+00> : vector<256x128xf32>
    %3 = tpu.matmul %1, %2, %cst {dimension_numbers = #tpu.dot_dimension_numbers<[1], [0], [0], [1], [0, 0, 1, 1], [], []>} : vector<256x128xbf16>, vector<128x128xbf16>, vector<256x128xf32> -> vector<256x128xf32>
    %c0_4 = arith.constant 0 : index
    %c0_5 = arith.constant 0 : index
    %4 = vector.load %arg3[%c0_4, %c0_5] : memref<1x128xf32, #tpu.memory_space<vmem>>, vector<1x128xf32>
    %5 = vector.broadcast %4 : vector<1x128xf32> to vector<256x128xf32>
    %6 = arith.addf %3, %5 : vector<256x128xf32>
    %cst_6 = arith.constant 0.000000e+00 : f32
    %7 = vector.broadcast %cst_6 : f32 to vector<256x128xf32>
    %8 = arith.maximumf %6, %7 : vector<256x128xf32>
    %9 = arith.truncf %8 : vector<256x128xf32> to vector<256x128xbf16>
    %10 = vector.shape_cast %9 : vector<256x128xbf16> to vector<16x16x128xbf16>
    %cst_7 = arith.constant 0.000000e+00 : bf16
    %11 = vector.broadcast %cst_7 : bf16 to vector<18x24x128xbf16>
    %c0_8 = arith.constant 0 : index
    %c0_9 = arith.constant 0 : index
    %c0_10 = arith.constant 0 : index
    %12 = vector.load %arg8[%c0_8, %c0_9, %c0_10] : memref<18x24x128xbf16, #tpu.memory_space<vmem>>, vector<18x24x128xbf16>
    tpu.vector_store %arg8[%c0_8, %c0_9, %c0_10], %11 {strides = array<i32>} : memref<18x24x128xbf16, #tpu.memory_space<vmem>>, vector<18x24x128xbf16>,
    %cst_11 = arith.constant 0.000000e+00 : bf16
    %13 = vector.broadcast %cst_11 : bf16 to vector<16x1x128xbf16>
    %cst_12 = arith.constant 0.000000e+00 : bf16
    %14 = vector.broadcast %cst_12 : bf16 to vector<16x7x128xbf16>
    %15 = tpu.concatenate %13, %10, %14 in 1 : vector<16x1x128xbf16>, vector<16x16x128xbf16>, vector<16x7x128xbf16> -> vector<16x24x128xbf16>
    %c1 = arith.constant 1 : index
    %c0_13 = arith.constant 0 : index
    %c0_14 = arith.constant 0 : index
    %16 = vector.load %arg8[%c1, %c0_13, %c0_14] : memref<18x24x128xbf16, #tpu.memory_space<vmem>>, vector<16x24x128xbf16>
    tpu.vector_store %arg8[%c1, %c0_13, %c0_14], %15 {strides = array<i32>} : memref<18x24x128xbf16, #tpu.memory_space<vmem>>, vector<16x24x128xbf16>,
    %c0_15 = arith.constant 0 : index
    %c0_16 = arith.constant 0 : index
    %c0_17 = arith.constant 0 : index
    %17 = vector.load %arg8[%c0_15, %c0_16, %c0_17] : memref<18x24x128xbf16, #tpu.memory_space<vmem>>, vector<16x24x128xbf16>
    %18 = vector.shape_cast %17 : vector<16x24x128xbf16> to vector<384x128xbf16>
    %c1_18 = arith.constant 1 : index
    %c0_19 = arith.constant 0 : index
    %c0_20 = arith.constant 0 : index
    %19 = vector.load %arg8[%c1_18, %c0_19, %c0_20] : memref<18x24x128xbf16, #tpu.memory_space<vmem>>, vector<16x24x128xbf16>
    %20 = vector.shape_cast %19 : vector<16x24x128xbf16> to vector<384x128xbf16>
    %c2 = arith.constant 2 : index
    %c0_21 = arith.constant 0 : index
    %c0_22 = arith.constant 0 : index
    %21 = vector.load %arg8[%c2, %c0_21, %c0_22] : memref<18x24x128xbf16, #tpu.memory_space<vmem>>, vector<16x24x128xbf16>
    %22 = vector.shape_cast %21 : vector<16x24x128xbf16> to vector<384x128xbf16>
    %23 = tpu.concatenate %18, %20, %22 in 1 : vector<384x128xbf16>, vector<384x128xbf16>, vector<384x128xbf16> -> vector<384x384xbf16>
    %c0_23 = arith.constant 0 : index
    %c0_24 = arith.constant 0 : index
    %24 = vector.load %arg4[%c0_23, %c0_24] : memref<384x384xbf16, #tpu.memory_space<vmem>>, vector<384x384xbf16>
    %cst_25 = arith.constant dense<0.000000e+00> : vector<384x384xf32>
    %25 = tpu.matmul %23, %24, %cst_25 {dimension_numbers = #tpu.dot_dimension_numbers<[1], [0], [0], [1], [0, 0, 1, 1], [], []>} : vector<384x384xbf16>, vector<384x384xbf16>, vector<384x384xf32> -> vector<384x384xf32>
    %26 = vector.extract_strided_slice %25 {offsets = [0, 0], sizes = [384, 128], strides = [1, 1]} : vector<384x384xf32> to vector<384x128xf32>
    %27 = vector.extract_strided_slice %25 {offsets = [1, 128], sizes = [383, 128], strides = [1, 1]} : vector<384x384xf32> to vector<383x128xf32>
    %cst_26 = arith.constant 0.000000e+00 : f32
    %28 = vector.broadcast %cst_26 : f32 to vector<1x128xf32>
    %29 = tpu.concatenate %27, %28 in 0 : vector<383x128xf32>, vector<1x128xf32> -> vector<384x128xf32>
    %30 = arith.addf %26, %29 : vector<384x128xf32>
    %31 = vector.extract_strided_slice %25 {offsets = [2, 256], sizes = [382, 128], strides = [1, 1]} : vector<384x384xf32> to vector<382x128xf32>
    %cst_27 = arith.constant 0.000000e+00 : f32
    %32 = vector.broadcast %cst_27 : f32 to vector<2x128xf32>
    %33 = tpu.concatenate %31, %32 in 0 : vector<382x128xf32>, vector<2x128xf32> -> vector<384x128xf32>
    %34 = arith.addf %30, %33 : vector<384x128xf32>
    %35 = vector.shape_cast %34 : vector<384x128xf32> to vector<16x24x128xf32>
    %36 = vector.extract_strided_slice %35 {offsets = [0, 0, 0], sizes = [16, 16, 128], strides = [1, 1, 1]} : vector<16x24x128xf32> to vector<16x16x128xf32>
    %37 = vector.shape_cast %36 : vector<16x16x128xf32> to vector<256x128xf32>
    %c0_28 = arith.constant 0 : index
    %c0_29 = arith.constant 0 : index
    %38 = vector.load %arg5[%c0_28, %c0_29] : memref<1x128xf32, #tpu.memory_space<vmem>>, vector<1x128xf32>
    %39 = vector.broadcast %38 : vector<1x128xf32> to vector<256x128xf32>
    %40 = arith.addf %37, %39 : vector<256x128xf32>
    %cst_30 = arith.constant 0.000000e+00 : f32
    %41 = vector.broadcast %cst_30 : f32 to vector<256x128xf32>
    %42 = arith.maximumf %40, %41 : vector<256x128xf32>
    %43 = arith.truncf %42 : vector<256x128xf32> to vector<256x128xbf16>
    %c0_31 = arith.constant 0 : index
    %c0_32 = arith.constant 0 : index
    %c0_33 = arith.constant 0 : index
    %44 = vector.load %arg6[%c0_31, %c0_32, %c0_33] : memref<1x256x128xbf16, #tpu.memory_space<vmem>>, vector<1x256x128xbf16>
    %45 = vector.shape_cast %44 : vector<1x256x128xbf16> to vector<256x128xbf16>
    %46 = vector.shape_cast %43 : vector<256x128xbf16> to vector<1x256x128xbf16>
    tpu.vector_store %arg6[%c0_31, %c0_32, %c0_33], %46 {strides = array<i32>} : memref<1x256x128xbf16, #tpu.memory_space<vmem>>, vector<1x256x128xbf16>,
    %cst_34 = arith.constant dense<0.000000e+00> : vector<128xf32>
    %47 = vector.multi_reduction <add>, %42, %cst_34 [0] : vector<256x128xf32> to vector<128xf32>
    %48 = vector.shape_cast %47 : vector<128xf32> to vector<1x128xf32>
    %cst_35 = arith.constant 2.560000e+02 : f32
    %49 = vector.broadcast %cst_35 : f32 to vector<1x128xf32>
    %50 = arith.divf %48, %49 : vector<1x128xf32>
    %c0_36 = arith.constant 0 : index
    %c0_37 = arith.constant 0 : index
    %c0_38 = arith.constant 0 : index
    %51 = vector.load %arg7[%c0_36, %c0_37, %c0_38] : memref<1x1x128xf32, #tpu.memory_space<vmem>>, vector<1x1x128xf32>
    %52 = vector.shape_cast %51 : vector<1x1x128xf32> to vector<1x128xf32>
    %53 = vector.shape_cast %50 : vector<1x128xf32> to vector<1x1x128xf32>
    tpu.vector_store %arg7[%c0_36, %c0_37, %c0_38], %53 {strides = array<i32>} : memref<1x1x128xf32, #tpu.memory_space<vmem>>, vector<1x1x128xf32>,
    return
  }
  func.func @transform_0(%arg0: i32) -> (i32, i32, i32) {
    %c0_i32 = arith.constant 0 : i32
    %c0_i32_0 = arith.constant 0 : i32
    %c0_i32_1 = arith.constant 0 : i32
    return %arg0, %c0_i32, %c0_i32_0 : i32, i32, i32
  }
  func.func @transform_1(%arg0: i32) -> (i32, i32) {
    %c0_i32 = arith.constant 0 : i32
    %c0_i32_0 = arith.constant 0 : i32
    %c0_i32_1 = arith.constant 0 : i32
    return %c0_i32, %c0_i32_0 : i32, i32
  }
  func.func @transform_2(%arg0: i32) -> (i32, i32) {
    %c0_i32 = arith.constant 0 : i32
    %c0_i32_0 = arith.constant 0 : i32
    %c0_i32_1 = arith.constant 0 : i32
    return %c0_i32, %c0_i32_0 : i32, i32
  }
  func.func @transform_3(%arg0: i32) -> (i32, i32) {
    %c0_i32 = arith.constant 0 : i32
    %c0_i32_0 = arith.constant 0 : i32
    %c0_i32_1 = arith.constant 0 : i32
    return %c0_i32, %c0_i32_0 : i32, i32
  }
  func.func @transform_4(%arg0: i32) -> (i32, i32) {
    %c0_i32 = arith.constant 0 : i32
    %c0_i32_0 = arith.constant 0 : i32
    %c0_i32_1 = arith.constant 0 : i32
    return %c0_i32, %c0_i32_0 : i32, i32
  }
  func.func @transform_5(%arg0: i32) -> (i32, i32, i32) {
    %c0_i32 = arith.constant 0 : i32
    %c0_i32_0 = arith.constant 0 : i32
    %c0_i32_1 = arith.constant 0 : i32
    return %arg0, %c0_i32, %c0_i32_0 : i32, i32, i32
  }
  func.func @transform_6(%arg0: i32) -> (i32, i32, i32) {
    %c0_i32 = arith.constant 0 : i32
    %c0_i32_0 = arith.constant 0 : i32
    %c0_i32_1 = arith.constant 0 : i32
    return %arg0, %c0_i32, %c0_i32_0 : i32, i32, i32
  }
}

</mosaic_0001>

<llo_original>
// kernel: tpu_custom_call.1
$region0: #{tpu_custom_call.1}
  #allocation0 [shape = 'u32[]', space=smem, size = 0x4, offset = 0x4, fixed_abs, tag = 'smem constant byte address 0x4 - core index']
  #allocation1 [shape = 'u32[72,128]{1,0:T(1,128)}', space=vmem, size = 0x9000, scoped, tag = 'internal scratch']
  #allocation2 [shape = 'bf16[18,24,128]{2,1,0:T(8,128)(2,1)}', space=vmem, size = 0x1b000, scoped, tag = 'scratch operand']
  %s0 = inlined_call_operand.hbm [shape: bf16[2,256,128], index: 0, kind: input, shape index: {}]
  %s1 = inlined_call_operand.hbm [shape: bf16[128,128], index: 1, kind: input, shape index: {}]
  %s2 = inlined_call_operand.vmem [shape: f32[1,128], index: 2, kind: input, shape index: {}]
  %s3 = inlined_call_operand.hbm [shape: bf16[384,384], index: 3, kind: input, shape index: {}]
  %s4 = inlined_call_operand.vmem [shape: f32[1,128], index: 4, kind: input, shape index: {}]
  %s5 = inlined_call_operand.hbm [shape: bf16[2,256,128], index: 5, kind: output, shape index: {0}]
  %s6 = inlined_call_operand.hbm [shape: f32[2,1,128], index: 6, kind: output, shape index: {1}]
  %7 = xla_tuple %s5, %s6
  %s8 = sld [smem:[#allocation0]]
  $region73: #{tpu_custom_call.1} parent=0
    _
  %s10 = ssub.s32 1, %s8
  %s11 = scalar_select 0, %s10, %s8
  $region1: #{tpu_custom_call.1} parent=0
    #allocation3 [shape = 'u8[131072]{0}', space=vmem, size = 0x20000, scoped, tag = 'input window, operand 0']
    #allocation4 [shape = 's32[2]{0}', space=sflag, size = 0x8, scoped, tag = 'scoped memory for tpu_custom_call.1']
    #allocation5 [shape = 's32[2]{0}', space=sflag, size = 0x8, scoped, tag = 'scoped memory for tpu_custom_call.1']
    #allocation6 [shape = 'u8[32768]{0}', space=vmem, size = 0x8000, scoped, tag = 'input window, operand 1, single buffered']
    #allocation7 [shape = 's32[1]{0}', space=sflag, size = 0x4, scoped, tag = 'scoped memory for tpu_custom_call.1']
    #allocation8 [shape = 'u8[294912]{0}', space=vmem, size = 0x48000, scoped, tag = 'input window, operand 3, single buffered']
    #allocation9 [shape = 'u8[131072]{0}', space=vmem, size = 0x20000, scoped, tag = 'output window, operand 0']
    #allocation10 [shape = 'u8[1024]{0}', space=vmem, size = 0x400, scoped, tag = 'output window, operand 1']
    #allocation11 [shape = 's32[2]{0}', space=sflag, size = 0x8, scoped, tag = 'scoped memory for tpu_custom_call.1']
    %12 = vsyncpa [#allocation4], 0
    %s13 = scalar_lea.sflag [#allocation4], 1
    %14 = vsyncpa %s13, 0
    %15 = vsyncpa [#allocation7], 0
    %16 = vsyncpa [#allocation5], 0
    %s17 = scalar_lea.sflag [#allocation5], 1
    %18 = vsyncpa %s17, 0
    %19 = vsyncpa [#allocation11], 0
    %s20 = scalar_lea.sflag [#allocation11], 1
    %21 = vsyncpa %s20, 0
    loop: start=0, step=1, limit=4
    $region2: #{tpu_custom_call.1} parent=1 // loop_pre_header
      _
    $region3: #{tpu_custom_call.1} parent=1 // loop_header
      %s23 = sphi 0, %s27
      %p24 = scmp.ge.s32.totalorder %s23, 4
      %s33 = sphi 0, %s35
      %s36 = sphi 0, %s33
      %s37 = sphi 0, %s36
      %s53 = sphi 0, %s37
      %s57 = sphi 0, %s57
      %s59 = sphi 0, %s57
      %s60 = sphi 0, %s59
      %s74 = sphi 0, %s60
      %s78 = sphi 0, %s78
      %s80 = sphi 0, %s78
      %s81 = sphi 0, %s80
      %s95 = sphi 0, %s81
      %s99 = sphi 0, %s99
      %s101 = sphi 0, %s99
      %s102 = sphi 0, %s101
      %s116 = sphi 0, %s102
      %s120 = sphi 0, %s120
      %s122 = sphi 0, %s120
      %s123 = sphi 0, %s122
      %s137 = sphi 0, %s123
      %s143 = sphi 0, %s145
      %s146 = sphi 0, %s143
      %s147 = sphi 0, %s146
      %s163 = sphi 0, %s147
      %s169 = sphi 0, %s171
      %s172 = sphi 0, %s169
      %s173 = sphi 0, %s172
      %s189 = sphi 0, %s173
    $region4: #{tpu_custom_call.1} parent=1 // loop_header_branch
      %26 = sbr.rel (%p24) target = $region8
    $region5: #{tpu_custom_call.1} parent=1 // loop_body
      %s28 = ssub.s32 %s23, 1
      %s29 = ssub.s32 %s23, 2
      %s30 = sadd.s32 %s23, 1
      %s31 = ssub.s32 %s23, %s30
      %p32 = scmp.eq.s32.totalorder %s31, 0
      %s34 = sadd.s32 %s33, 1
      %s35 = scalar_select %p32, %s33, %s34
      %p38 = pneg %p32
      %p39 = scmp.eq.s32.totalorder %s23, 1
      %p40 = por %p38, %p39
      %p41 = scmp.ne.s32.totalorder %s33, %s36
      %p42 = scmp.eq.s32.totalorder %s23, 0
      %p43 = por %p41, %p42
      %p44 = scmp.ne.s32.totalorder %s33, %s36
      %p45 = scmp.eq.s32.totalorder %s28, 1
      %p46 = por %p44, %p45
      %p47 = scmp.ne.s32.totalorder %s36, %s37
      %p48 = scmp.eq.s32.totalorder %s28, 0
      %p49 = por %p47, %p48
      %p50 = scmp.ne.s32.totalorder %s36, %s37
      %p51 = scmp.eq.s32.totalorder %s29, 1
      %p52 = por %p50, %p51
      %p54 = scmp.ne.s32.totalorder %s37, %s53
      %p55 = scmp.eq.s32.totalorder %s29, 0
      %p56 = por %p54, %p55
      %s58 = sadd.s32 %s57, 1
      %p61 = scmp.eq.s32.totalorder %s23, 1
      %p62 = scmp.ne.s32.totalorder %s57, %s59
      %p63 = scmp.eq.s32.totalorder %s23, 0
      %p64 = por %p62, %p63
      %p65 = scmp.ne.s32.totalorder %s57, %s59
      %p66 = scmp.eq.s32.totalorder %s28, 1
      %p67 = por %p65, %p66
      %p68 = scmp.ne.s32.totalorder %s59, %s60
      %p69 = scmp.eq.s32.totalorder %s28, 0
      %p70 = por %p68, %p69
      %p71 = scmp.ne.s32.totalorder %s59, %s60
      %p72 = scmp.eq.s32.totalorder %s29, 1
      %p73 = por %p71, %p72
      %p75 = scmp.ne.s32.totalorder %s60, %s74
      %p76 = scmp.eq.s32.totalorder %s29, 0
      %p77 = por %p75, %p76
      %s79 = sadd.s32 %s78, 1
      %p82 = scmp.eq.s32.totalorder %s23, 1
      %p83 = scmp.ne.s32.totalorder %s78, %s80
      %p84 = scmp.eq.s32.totalorder %s23, 0
      %p85 = por %p83, %p84
      %p86 = scmp.ne.s32.totalorder %s78, %s80
      %p87 = scmp.eq.s32.totalorder %s28, 1
      %p88 = por %p86, %p87
      %p89 = scmp.ne.s32.totalorder %s80, %s81
      %p90 = scmp.eq.s32.totalorder %s28, 0
      %p91 = por %p89, %p90
      %p92 = scmp.ne.s32.totalorder %s80, %s81
      %p93 = scmp.eq.s32.totalorder %s29, 1
      %p94 = por %p92, %p93
      %p96 = scmp.ne.s32.totalorder %s81, %s95
      %p97 = scmp.eq.s32.totalorder %s29, 0
      %p98 = por %p96, %p97
      %s100 = sadd.s32 %s99, 1
      %p103 = scmp.eq.s32.totalorder %s23, 1
      %p104 = scmp.ne.s32.totalorder %s99, %s101
      %p105 = scmp.eq.s32.totalorder %s23, 0
      %p106 = por %p104, %p105
      %p107 = scmp.ne.s32.totalorder %s99, %s101
      %p108 = scmp.eq.s32.totalorder %s28, 1
      %p109 = por %p107, %p108
      %p110 = scmp.ne.s32.totalorder %s101, %s102
      %p111 = scmp.eq.s32.totalorder %s28, 0
      %p112 = por %p110, %p111
      %p113 = scmp.ne.s32.totalorder %s101, %s102
      %p114 = scmp.eq.s32.totalorder %s29, 1
      %p115 = por %p113, %p114
      %p117 = scmp.ne.s32.totalorder %s102, %s116
      %p118 = scmp.eq.s32.totalorder %s29, 0
      %p119 = por %p117, %p118
      %s121 = sadd.s32 %s120, 1
      %p124 = scmp.eq.s32.totalorder %s23, 1
      %p125 = scmp.ne.s32.totalorder %s120, %s122
      %p126 = scmp.eq.s32.totalorder %s23, 0
      %p127 = por %p125, %p126
      %p128 = scmp.ne.s32.totalorder %s120, %s122
      %p129 = scmp.eq.s32.totalorder %s28, 1
      %p130 = por %p128, %p129
      %p131 = scmp.ne.s32.totalorder %s122, %s123
      %p132 = scmp.eq.s32.totalorder %s28, 0
      %p133 = por %p131, %p132
      %p134 = scmp.ne.s32.totalorder %s122, %s123
      %p135 = scmp.eq.s32.totalorder %s29, 1
      %p136 = por %p134, %p135
      %p138 = scmp.ne.s32.totalorder %s123, %s137
      %p139 = scmp.eq.s32.totalorder %s29, 0
      %p140 = por %p138, %p139
      %s141 = ssub.s32 %s23, %s30
      %p142 = scmp.eq.s32.totalorder %s141, 0
      %s144 = sadd.s32 %s143, 1
      %s145 = scalar_select %p142, %s143, %s144
      %p148 = pneg %p142
      %p149 = scmp.eq.s32.totalorder %s23, 1
      %p150 = por %p148, %p149
      %p151 = scmp.ne.s32.totalorder %s143, %s146
      %p152 = scmp.eq.s32.totalorder %s23, 0
      %p153 = por %p151, %p152
      %p154 = scmp.ne.s32.totalorder %s143, %s146
      %p155 = scmp.eq.s32.totalorder %s28, 1
      %p156 = por %p154, %p155
      %p157 = scmp.ne.s32.totalorder %s146, %s147
      %p158 = scmp.eq.s32.totalorder %s28, 0
      %p159 = por %p157, %p158
      %p160 = scmp.ne.s32.totalorder %s146, %s147
      %p161 = scmp.eq.s32.totalorder %s29, 1
      %p162 = por %p160, %p161
      %p164 = scmp.ne.s32.totalorder %s147, %s163
      %p165 = scmp.eq.s32.totalorder %s29, 0
      %p166 = por %p164, %p165
      %s167 = ssub.s32 %s23, %s30
      %p168 = scmp.eq.s32.totalorder %s167, 0
      %s170 = sadd.s32 %s169, 1
      %s171 = scalar_select %p168, %s169, %s170
      %p174 = pneg %p168
      %p175 = scmp.eq.s32.totalorder %s23, 1
      %p176 = por %p174, %p175
      %p177 = scmp.ne.s32.totalorder %s169, %s172
      %p178 = scmp.eq.s32.totalorder %s23, 0
      %p179 = por %p177, %p178
      %p180 = scmp.ne.s32.totalorder %s169, %s172
      %p181 = scmp.eq.s32.totalorder %s28, 1
      %p182 = por %p180, %p181
      %p183 = scmp.ne.s32.totalorder %s172, %s173
      %p184 = scmp.eq.s32.totalorder %s28, 0
      %p185 = por %p183, %p184
      %p186 = scmp.ne.s32.totalorder %s172, %s173
      %p187 = scmp.eq.s32.totalorder %s29, 1
      %p188 = por %p186, %p187
      %p190 = scmp.ne.s32.totalorder %s173, %s189
      %p191 = scmp.eq.s32.totalorder %s29, 0
      %p192 = por %p190, %p191
      %p193 = scmp.le.s32.totalorder 1, %s23
      %p194 = scmp.lt.s32.totalorder %s23, 3
      %p195 = pnand %p193, %p194
      %p196 = pneg %p195
      // Predicated region
      $region9: #{tpu_custom_call.1} parent=5 // pred_check
        _
      $region10: #{tpu_custom_call.1} parent=5 // pred_check_branch
        %198 = sbr.rel (%p195) target = $region12
      $region11: #{tpu_custom_call.1} parent=5 // pred_region
        %s199 = ssub.s32 %s23, 1
        // Predicated region
        $region13: #{tpu_custom_call.1} parent=11 // pred_check
          %p200 = pneg %p70
        $region14: #{tpu_custom_call.1} parent=11 // pred_check_branch
          %202 = sbr.rel (%p200) target = $region16
        $region15: #{tpu_custom_call.1} parent=11 // pred_region
          %204 = vsyncadd [#allocation7], 0
          %s205 = sshll.u32 %s1, 4
          %s206 = int_to_ptr.hbm [resolvable:$true] %s205
          %s207 = sshll.u32 [#allocation6], 4
          %s208 = int_to_ptr.vmem [resolvable:$true] %s207
          %213 = dma.hbm_to_vmem [thread:$0]  %s206, 1024, %s208, [#allocation7], 64, 64, 4
        $region16: #{tpu_custom_call.1} parent=11 // pred_fallthru
          _
        // Predicated region
        $region17: #{tpu_custom_call.1} parent=11 // pred_check
          %p214 = pneg %p91
        $region18: #{tpu_custom_call.1} parent=11 // pred_check_branch
          %216 = sbr.rel (%p214) target = $region20
        $region19: #{tpu_custom_call.1} parent=11 // pred_region
          _
        $region20: #{tpu_custom_call.1} parent=11 // pred_fallthru
          _
        // Predicated region
        $region21: #{tpu_custom_call.1} parent=11 // pred_check
          %p217 = pneg %p112
        $region22: #{tpu_custom_call.1} parent=11 // pred_check_branch
          %219 = sbr.rel (%p217) target = $region24
        $region23: #{tpu_custom_call.1} parent=11 // pred_region
          %221 = vsyncadd [#allocation7], 0
          %s222 = sshll.u32 %s3, 4
          %s223 = int_to_ptr.hbm [resolvable:$true] %s222
          %s224 = sshll.u32 [#allocation8], 4
          %s225 = int_to_ptr.vmem [resolvable:$true] %s224
          %230 = dma.hbm_to_vmem [thread:$0]  %s223, 9216, %s225, [#allocation7], 192, 192, 12
        $region24: #{tpu_custom_call.1} parent=11 // pred_fallthru
          _
        // Predicated region
        $region25: #{tpu_custom_call.1} parent=11 // pred_check
          %p231 = pneg %p133
        $region26: #{tpu_custom_call.1} parent=11 // pred_check_branch
          %233 = sbr.rel (%p231) target = $region28
        $region27: #{tpu_custom_call.1} parent=11 // pred_region
          _
        $region28: #{tpu_custom_call.1} parent=11 // pred_fallthru
          _
      $region12: #{tpu_custom_call.1} parent=5 // pred_fallthru
        _
      %p234 = scmp.lt.s32.totalorder %s23, 2
      // Predicated region
      $region29: #{tpu_custom_call.1} parent=5 // pred_check
        %p235 = pneg %p234
      $region30: #{tpu_custom_call.1} parent=5 // pred_check_branch
        %237 = sbr.rel (%p235) target = $region32
      $region31: #{tpu_custom_call.1} parent=5 // pred_region
        // Predicated region
        $region33: #{tpu_custom_call.1} parent=31 // pred_check
          %p238 = pneg %p43
        $region34: #{tpu_custom_call.1} parent=31 // pred_check_branch
          %240 = sbr.rel (%p238) target = $region36
        $region35: #{tpu_custom_call.1} parent=31 // pred_region
          %s241 = sand.u32 %s33, 1
          %s242 = scalar_lea.sflag [#allocation4], %s241
          %s243 = sand.u32 %s33, 1
          %s244 = smul.addr %s243, 128
          %s245 = scalar_lea.vmem [#allocation3], %s244
          %247 = vsyncadd %s242, 0
          %s248 = smul.addr %s23, 32
          %s249 = smul.addr %s248, 4
          %s250 = scalar_lea.hbm %s0, %s249
          %s251 = sshll.u32 %s250, 4
          %s252 = int_to_ptr.hbm [resolvable:$true] %s251
          %s253 = sshll.u32 %s245, 4
          %s254 = int_to_ptr.vmem [resolvable:$true] %s253
          %259 = dma.hbm_to_vmem [thread:$0]  %s252, 2048, %s254, %s242, 64, 64, 4
        $region36: #{tpu_custom_call.1} parent=31 // pred_fallthru
          _
      $region32: #{tpu_custom_call.1} parent=5 // pred_fallthru
        _
      %p260 = scmp.le.s32.totalorder 1, %s23
      %p261 = scmp.lt.s32.totalorder %s23, 3
      %p262 = pnand %p260, %p261
      %p263 = pneg %p262
      // Predicated region
      $region37: #{tpu_custom_call.1} parent=5 // pred_check
        _
      $region38: #{tpu_custom_call.1} parent=5 // pred_check_branch
        %265 = sbr.rel (%p262) target = $region40
      $region39: #{tpu_custom_call.1} parent=5 // pred_region
        %s266 = ssub.s32 %s23, 1
        %s267 = sand.u32 %s36, 1
        %s268 = scalar_lea.sflag [#allocation4], %s267
        %s269 = sand.u32 %s36, 1
        %s270 = smul.addr %s269, 128
        %s271 = scalar_lea.vmem [#allocation3], %s270
        // Predicated region
        $region41: #{tpu_custom_call.1} parent=39 // pred_check
          %p272 = pneg %p49
        $region42: #{tpu_custom_call.1} parent=39 // pred_check_branch
          %274 = sbr.rel (%p272) target = $region44
        $region43: #{tpu_custom_call.1} parent=39 // pred_region
          %276 = dma.done %s268, 2048
        $region44: #{tpu_custom_call.1} parent=39 // pred_fallthru
          _
        // Predicated region
        $region45: #{tpu_custom_call.1} parent=39 // pred_check
          %p277 = pneg %p70
        $region46: #{tpu_custom_call.1} parent=39 // pred_check_branch
          %279 = sbr.rel (%p277) target = $region48
        $region47: #{tpu_custom_call.1} parent=39 // pred_region
          %281 = dma.done [#allocation7], 1024
        $region48: #{tpu_custom_call.1} parent=39 // pred_fallthru
          _
        // Predicated region
        $region49: #{tpu_custom_call.1} parent=39 // pred_check
          %p282 = pneg %p112
        $region50: #{tpu_custom_call.1} parent=39 // pred_check_branch
          %284 = sbr.rel (%p282) target = $region52
        $region51: #{tpu_custom_call.1} parent=39 // pred_region
          %286 = dma.done [#allocation7], 9216
        $region52: #{tpu_custom_call.1} parent=39 // pred_fallthru
          _
        %s287 = sand.u32 %s36, 1
        %s288 = scalar_lea.sflag [#allocation4], %s287
        %s289 = sand.u32 %s36, 1
        %s290 = smul.addr %s289, 128
        %s291 = scalar_lea.vmem [#allocation3], %s290
        %p292 = pneg %p49
        %p293 = pneg %p46
        %p294 = pneg %p70
        %p295 = pneg %p67
        %p296 = pneg %p91
        %p297 = pneg %p88
        %p298 = pneg %p112
        %p299 = pneg %p109
        %p300 = pneg %p133
        %p301 = pneg %p130
        %p302 = pneg %p159
        %p303 = pneg %p156
        %s304 = sand.u32 %s146, 1
        %s305 = scalar_lea.sflag [#allocation5], %s304
        %s306 = sand.u32 %s146, 1
        %s307 = smul.addr %s306, 128
        %s308 = scalar_lea.vmem [#allocation9], %s307
        %p309 = pneg %p185
        %p310 = pneg %p182
        %s311 = sand.u32 %s172, 1
        %s312 = scalar_lea.sflag [#allocation11], %s311
        %s313 = sand.u32 %s172, 1
        %s314 = scalar_lea.vmem [#allocation10], %s313
        %v316 = vld [vmem:[%s271] sm:$0xf]
        %v317 = vld [vmem:[%s271 + $0x4] sm:$0xf]
        %v318 = vld [vmem:[%s271 + $0x8] sm:$0xf]
        %v319 = vld [vmem:[%s271 + $0xc] sm:$0xf]
        %v320 = vld [vmem:[%s271 + $0x10] sm:$0xf]
        %v321 = vld [vmem:[%s271 + $0x14] sm:$0xf]
        %v322 = vld [vmem:[%s271 + $0x18] sm:$0xf]
        %v323 = vld [vmem:[%s271 + $0x1c] sm:$0xf]
        %v324 = vld [vmem:[%s271 + $0x20] sm:$0xf]
        %v325 = vld [vmem:[%s271 + $0x24] sm:$0xf]
        %v326 = vld [vmem:[%s271 + $0x28] sm:$0xf]
        %v327 = vld [vmem:[%s271 + $0x2c] sm:$0xf]
        %v328 = vld [vmem:[%s271 + $0x30] sm:$0xf]
        %v329 = vld [vmem:[%s271 + $0x34] sm:$0xf]
        %v330 = vld [vmem:[%s271 + $0x38] sm:$0xf]
        %v331 = vld [vmem:[%s271 + $0x3c] sm:$0xf]
        %v332 = vld [vmem:[%s271 + $0x40] sm:$0xf]
        %v333 = vld [vmem:[%s271 + $0x44] sm:$0xf]
        %v334 = vld [vmem:[%s271 + $0x48] sm:$0xf]
        %v335 = vld [vmem:[%s271 + $0x4c] sm:$0xf]
        %v336 = vld [vmem:[%s271 + $0x50] sm:$0xf]
        %v337 = vld [vmem:[%s271 + $0x54] sm:$0xf]
        %v338 = vld [vmem:[%s271 + $0x58] sm:$0xf]
        %v339 = vld [vmem:[%s271 + $0x5c] sm:$0xf]
        %v340 = vld [vmem:[%s271 + $0x60] sm:$0xf]
        %v341 = vld [vmem:[%s271 + $0x64] sm:$0xf]
        %v342 = vld [vmem:[%s271 + $0x68] sm:$0xf]
        %v343 = vld [vmem:[%s271 + $0x6c] sm:$0xf]
        %v344 = vld [vmem:[%s271 + $0x70] sm:$0xf]
        %v345 = vld [vmem:[%s271 + $0x74] sm:$0xf]
        %v346 = vld [vmem:[%s271 + $0x78] sm:$0xf]
        %v347 = vld [vmem:[%s271 + $0x7c] sm:$0xf]
        %v348 = vld [vmem:[#allocation6] sm:$0xf]
        %v349 = vld [vmem:[#allocation6 + $0x4] sm:$0xf]
        %v350 = vld [vmem:[#allocation6 + $0x8] sm:$0xf]
        %v351 = vld [vmem:[#allocation6 + $0xc] sm:$0xf]
        %v352 = vld [vmem:[#allocation6 + $0x10] sm:$0xf]
        %v353 = vld [vmem:[#allocation6 + $0x14] sm:$0xf]
        %v354 = vld [vmem:[#allocation6 + $0x18] sm:$0xf]
        %v355 = vld [vmem:[#allocation6 + $0x1c] sm:$0xf]
        %v356 = vld [vmem:[#allocation6 + $0x20] sm:$0xf]
        %v357 = vld [vmem:[#allocation6 + $0x24] sm:$0xf]
        %v358 = vld [vmem:[#allocation6 + $0x28] sm:$0xf]
        %v359 = vld [vmem:[#allocation6 + $0x2c] sm:$0xf]
        %v360 = vld [vmem:[#allocation6 + $0x30] sm:$0xf]
        %v361 = vld [vmem:[#allocation6 + $0x34] sm:$0xf]
        %v362 = vld [vmem:[#allocation6 + $0x38] sm:$0xf]
        %v363 = vld [vmem:[#allocation6 + $0x3c] sm:$0xf]
        %v364 = vld [vmem:[%s2] sm:$0x1]
        %v366 = vperm.slane %v364, 0
        %v400 = vunpack.c.l.b16 %v316
        %v401 = vunpack.c.l.b16 %v317
        %v402 = vunpack.c.l.b16 %v318
        %v403 = vunpack.c.l.b16 %v319
        %v404 = vunpack.c.l.b16 %v320
        %v405 = vunpack.c.l.b16 %v321
        %v406 = vunpack.c.l.b16 %v322
        %v407 = vunpack.c.l.b16 %v323
        %v408 = vunpack.c.l.b16 %v324
        %v409 = vunpack.c.l.b16 %v325
        %v410 = vunpack.c.l.b16 %v326
        %v411 = vunpack.c.l.b16 %v327
        %v412 = vunpack.c.l.b16 %v328
        %v413 = vunpack.c.l.b16 %v329
        %v414 = vunpack.c.l.b16 %v330
        %v415 = vunpack.c.l.b16 %v331
        %v416 = vunpack.c.l.b16 %v332
        %v417 = vunpack.c.l.b16 %v333
        %v418 = vunpack.c.l.b16 %v334
        %v419 = vunpack.c.l.b16 %v335
        %v420 = vunpack.c.l.b16 %v336
        %v421 = vunpack.c.l.b16 %v337
        %v422 = vunpack.c.l.b16 %v338
        %v423 = vunpack.c.l.b16 %v339
        %v424 = vunpack.c.l.b16 %v340
        %v425 = vunpack.c.l.b16 %v341
        %v426 = vunpack.c.l.b16 %v342
        %v427 = vunpack.c.l.b16 %v343
        %v428 = vunpack.c.l.b16 %v344
        %v429 = vunpack.c.l.b16 %v345
        %v430 = vunpack.c.l.b16 %v346
        %v431 = vunpack.c.l.b16 %v347
        %v432 = vpack.c.b16 %v401, %v400
        %v433 = vpack.c.b16 %v403, %v402
        %v434 = vpack.c.b16 %v405, %v404
        %v435 = vpack.c.b16 %v407, %v406
        %v436 = vpack.c.b16 %v409, %v408
        %v437 = vpack.c.b16 %v411, %v410
        %v438 = vpack.c.b16 %v413, %v412
        %v439 = vpack.c.b16 %v415, %v414
        %v440 = vpack.c.b16 %v417, %v416
        %v441 = vpack.c.b16 %v419, %v418
        %v442 = vpack.c.b16 %v421, %v420
        %v443 = vpack.c.b16 %v423, %v422
        %v444 = vpack.c.b16 %v425, %v424
        %v445 = vpack.c.b16 %v427, %v426
        %v446 = vpack.c.b16 %v429, %v428
        %v447 = vpack.c.b16 %v431, %v430
        %v480 = vunpack.c.l.b16 %v348
        %v481 = vunpack.c.l.b16 %v349
        %v482 = vunpack.c.l.b16 %v350
        %v483 = vunpack.c.l.b16 %v351
        %v484 = vunpack.c.l.b16 %v352
        %v485 = vunpack.c.l.b16 %v353
        %v486 = vunpack.c.l.b16 %v354
        %v487 = vunpack.c.l.b16 %v355
        %v488 = vunpack.c.l.b16 %v356
        %v489 = vunpack.c.l.b16 %v357
        %v490 = vunpack.c.l.b16 %v358
        %v491 = vunpack.c.l.b16 %v359
        %v492 = vunpack.c.l.b16 %v360
        %v493 = vunpack.c.l.b16 %v361
        %v494 = vunpack.c.l.b16 %v362
        %v495 = vunpack.c.l.b16 %v363
        %v496 = vpack.c.b16 %v481, %v480
        %v497 = vpack.c.b16 %v483, %v482
        %v498 = vpack.c.b16 %v485, %v484
        %v499 = vpack.c.b16 %v487, %v486
        %v500 = vpack.c.b16 %v489, %v488
        %v501 = vpack.c.b16 %v491, %v490
        %v502 = vpack.c.b16 %v493, %v492
        %v503 = vpack.c.b16 %v495, %v494
        %512 = vmatpush.bf16.msra.mxu0 %v503
        %513 = vmatpush.bf16.msra.mxu0 %v502
        %514 = vmatpush.bf16.msra.mxu0 %v501
        %515 = vmatpush.bf16.msra.mxu0 %v500
        %516 = vmatpush.bf16.msra.mxu0 %v499
        %517 = vmatpush.bf16.msra.mxu0 %v498
        %518 = vmatpush.bf16.msra.mxu0 %v497
        %519 = vmatpush.bf16.msra.mxu0 %v496
        %520 = vmatmul.bf16.gmra.mxu0 %v432
        %v521 = vpop.f32.mrf.mxu0
        %v522 = vadd.f32 %v366, %v521
        %v523 = vpop.f32.mrf.mxu0
        %v524 = vadd.f32 %v366, %v523
        %525 = vmatmul.bf16.gmra.mxu0 %v433
        %v526 = vpop.f32.mrf.mxu0
        %v527 = vadd.f32 %v366, %v526
        %v528 = vpop.f32.mrf.mxu0
        %v529 = vadd.f32 %v366, %v528
        %530 = vmatmul.bf16.gmra.mxu0 %v434
        %v531 = vpop.f32.mrf.mxu0
        %v532 = vadd.f32 %v366, %v531
        %v533 = vpop.f32.mrf.mxu0
        %v534 = vadd.f32 %v366, %v533
        %535 = vmatmul.bf16.gmra.mxu0 %v435
        %v536 = vpop.f32.mrf.mxu0
        %v537 = vadd.f32 %v366, %v536
        %v538 = vpop.f32.mrf.mxu0
        %v539 = vadd.f32 %v366, %v538
        %540 = vmatmul.bf16.gmra.mxu0 %v436
        %v541 = vpop.f32.mrf.mxu0
        %v542 = vadd.f32 %v366, %v541
        %v543 = vpop.f32.mrf.mxu0
        %v544 = vadd.f32 %v366, %v543
        %545 = vmatmul.bf16.gmra.mxu0 %v437
        %v546 = vpop.f32.mrf.mxu0
        %v547 = vadd.f32 %v366, %v546
        %v548 = vpop.f32.mrf.mxu0
        %v549 = vadd.f32 %v366, %v548
        %550 = vmatmul.bf16.gmra.mxu0 %v438
        %v551 = vpop.f32.mrf.mxu0
        %v552 = vadd.f32 %v366, %v551
        %v553 = vpop.f32.mrf.mxu0
        %v554 = vadd.f32 %v366, %v553
        %555 = vmatmul.bf16.gmra.mxu0 %v439
        %v556 = vpop.f32.mrf.mxu0
        %v557 = vadd.f32 %v366, %v556
        %v558 = vpop.f32.mrf.mxu0
        %v559 = vadd.f32 %v366, %v558
        %560 = vmatmul.bf16.gmra.mxu0 %v440
        %v561 = vpop.f32.mrf.mxu0
        %v562 = vadd.f32 %v366, %v561
        %v563 = vpop.f32.mrf.mxu0
        %v564 = vadd.f32 %v366, %v563
        %565 = vmatmul.bf16.gmra.mxu0 %v441
        %v566 = vpop.f32.mrf.mxu0
        %v567 = vadd.f32 %v366, %v566
        %v568 = vpop.f32.mrf.mxu0
        %v569 = vadd.f32 %v366, %v568
        %570 = vmatmul.bf16.gmra.mxu0 %v442
        %v571 = vpop.f32.mrf.mxu0
        %v572 = vadd.f32 %v366, %v571
        %v573 = vpop.f32.mrf.mxu0
        %v574 = vadd.f32 %v366, %v573
        %575 = vmatmul.bf16.gmra.mxu0 %v443
        %v576 = vpop.f32.mrf.mxu0
        %v577 = vadd.f32 %v366, %v576
        %v578 = vpop.f32.mrf.mxu0
        %v579 = vadd.f32 %v366, %v578
        %580 = vmatmul.bf16.gmra.mxu0 %v444
        %v581 = vpop.f32.mrf.mxu0
        %v582 = vadd.f32 %v366, %v581
        %v583 = vpop.f32.mrf.mxu0
        %v584 = vadd.f32 %v366, %v583
        %585 = vmatmul.bf16.gmra.mxu0 %v445
        %v586 = vpop.f32.mrf.mxu0
        %v587 = vadd.f32 %v366, %v586
        %v588 = vpop.f32.mrf.mxu0
        %v589 = vadd.f32 %v366, %v588
        %590 = vmatmul.bf16.gmra.mxu0 %v446
        %v591 = vpop.f32.mrf.mxu0
        %v592 = vadd.f32 %v366, %v591
        %v593 = vpop.f32.mrf.mxu0
        %v594 = vadd.f32 %v366, %v593
        %595 = vmatmul.bf16.gmra.mxu0 %v447
        %v596 = vpop.f32.mrf.mxu0
        %v597 = vadd.f32 %v366, %v596
        %v598 = vpop.f32.mrf.mxu0
        %v599 = vadd.f32 %v366, %v598
        %600 = vdwg.mxu0
        %v601 = vmax.f32 %v522, 0.0
        %v602 = vmax.f32 %v524, 0.0
        %v603 = vmax.f32 %v527, 0.0
        %v604 = vmax.f32 %v529, 0.0
        %v605 = vmax.f32 %v532, 0.0
        %v606 = vmax.f32 %v534, 0.0
        %v607 = vmax.f32 %v537, 0.0
        %v608 = vmax.f32 %v539, 0.0
        %v609 = vmax.f32 %v542, 0.0
        %v610 = vmax.f32 %v544, 0.0
        %v611 = vmax.f32 %v547, 0.0
        %v612 = vmax.f32 %v549, 0.0
        %v613 = vmax.f32 %v552, 0.0
        %v614 = vmax.f32 %v554, 0.0
        %v615 = vmax.f32 %v557, 0.0
        %v616 = vmax.f32 %v559, 0.0
        %v617 = vmax.f32 %v562, 0.0
        %v618 = vmax.f32 %v564, 0.0
        %v619 = vmax.f32 %v567, 0.0
        %v620 = vmax.f32 %v569, 0.0
        %v621 = vmax.f32 %v572, 0.0
        %v622 = vmax.f32 %v574, 0.0
        %v623 = vmax.f32 %v577, 0.0
        %v624 = vmax.f32 %v579, 0.0
        %v625 = vmax.f32 %v582, 0.0
        %v626 = vmax.f32 %v584, 0.0
        %v627 = vmax.f32 %v587, 0.0
        %v628 = vmax.f32 %v589, 0.0
        %v629 = vmax.f32 %v592, 0.0
        %v630 = vmax.f32 %v594, 0.0
        %v631 = vmax.f32 %v597, 0.0
        %v632 = vmax.f32 %v599, 0.0
        %v633 = vpack.c.bf16 %v601, %v601
        %v634 = vpack.c.bf16 %v602, %v602
        %v635 = vpack.c.bf16 %v603, %v603
        %v636 = vpack.c.bf16 %v604, %v604
        %v637 = vpack.c.bf16 %v605, %v605
        %v638 = vpack.c.bf16 %v606, %v606
        %v639 = vpack.c.bf16 %v607, %v607
        %v640 = vpack.c.bf16 %v608, %v608
        %v641 = vpack.c.bf16 %v609, %v609
        %v642 = vpack.c.bf16 %v610, %v610
        %v643 = vpack.c.bf16 %v611, %v611
        %v644 = vpack.c.bf16 %v612, %v612
        %v645 = vpack.c.bf16 %v613, %v613
        %v646 = vpack.c.bf16 %v614, %v614
        %v647 = vpack.c.bf16 %v615, %v615
        %v648 = vpack.c.bf16 %v616, %v616
        %v649 = vpack.c.bf16 %v617, %v617
        %v650 = vpack.c.bf16 %v618, %v618
        %v651 = vpack.c.bf16 %v619, %v619
        %v652 = vpack.c.bf16 %v620, %v620
        %v653 = vpack.c.bf16 %v621, %v621
        %v654 = vpack.c.bf16 %v622, %v622
        %v655 = vpack.c.bf16 %v623, %v623
        %v656 = vpack.c.bf16 %v624, %v624
        %v657 = vpack.c.bf16 %v625, %v625
        %v658 = vpack.c.bf16 %v626, %v626
        %v659 = vpack.c.bf16 %v627, %v627
        %v660 = vpack.c.bf16 %v628, %v628
        %v661 = vpack.c.bf16 %v629, %v629
        %v662 = vpack.c.bf16 %v630, %v630
        %v663 = vpack.c.bf16 %v631, %v631
        %v664 = vpack.c.bf16 %v632, %v632
        %665 = vst [vmem:[#allocation2] sm:$0xf] 0
        %666 = vst [vmem:[#allocation2 + $0x4] sm:$0xf] 0
        %667 = vst [vmem:[#allocation2 + $0x8] sm:$0xf] 0
        %668 = vst [vmem:[#allocation2 + $0xc] sm:$0xf] 0
        %669 = vst [vmem:[#allocation2 + $0x10] sm:$0xf] 0
        %670 = vst [vmem:[#allocation2 + $0x14] sm:$0xf] 0
        %671 = vst [vmem:[#allocation2 + $0x18] sm:$0xf] 0
        %672 = vst [vmem:[#allocation2 + $0x1c] sm:$0xf] 0
        %673 = vst [vmem:[#allocation2 + $0x20] sm:$0xf] 0
        %674 = vst [vmem:[#allocation2 + $0x24] sm:$0xf] 0
        %675 = vst [vmem:[#allocation2 + $0x28] sm:$0xf] 0
        %676 = vst [vmem:[#allocation2 + $0x2c] sm:$0xf] 0
        %677 = vst [vmem:[#allocation2 + $0x30] sm:$0xf] 0
        %678 = vst [vmem:[#allocation2 + $0x34] sm:$0xf] 0
        %679 = vst [vmem:[#allocation2 + $0x38] sm:$0xf] 0
        %680 = vst [vmem:[#allocation2 + $0x3c] sm:$0xf] 0
        %681 = vst [vmem:[#allocation2 + $0x40] sm:$0xf] 0
        %682 = vst [vmem:[#allocation2 + $0x44] sm:$0xf] 0
        %683 = vst [vmem:[#allocation2 + $0x48] sm:$0xf] 0
        %684 = vst [vmem:[#allocation2 + $0x4c] sm:$0xf] 0
        %685 = vst [vmem:[#allocation2 + $0x50] sm:$0xf] 0
        %686 = vst [vmem:[#allocation2 + $0x54] sm:$0xf] 0
        %687 = vst [vmem:[#allocation2 + $0x58] sm:$0xf] 0
        %688 = vst [vmem:[#allocation2 + $0x5c] sm:$0xf] 0
        %689 = vst [vmem:[#allocation2 + $0x60] sm:$0xf] 0
        %690 = vst [vmem:[#allocation2 + $0x64] sm:$0xf] 0
        %691 = vst [vmem:[#allocation2 + $0x68] sm:$0xf] 0
        %692 = vst [vmem:[#allocation2 + $0x6c] sm:$0xf] 0
        %693 = vst [vmem:[#allocation2 + $0x70] sm:$0xf] 0
        %694 = vst [vmem:[#allocation2 + $0x74] sm:$0xf] 0
        %695 = vst [vmem:[#allocation2 + $0x78] sm:$0xf] 0
        %696 = vst [vmem:[#allocation2 + $0x7c] sm:$0xf] 0
        %697 = vst [vmem:[#allocation2 + $0x80] sm:$0xf] 0
        %698 = vst [vmem:[#allocation2 + $0x84] sm:$0xf] 0
        %699 = vst [vmem:[#allocation2 + $0x88] sm:$0xf] 0
        %700 = vst [vmem:[#allocation2 + $0x8c] sm:$0xf] 0
        %701 = vst [vmem:[#allocation2 + $0x90] sm:$0xf] 0
        %702 = vst [vmem:[#allocation2 + $0x94] sm:$0xf] 0
        %703 = vst [vmem:[#allocation2 + $0x98] sm:$0xf] 0
        %704 = vst [vmem:[#allocation2 + $0x9c] sm:$0xf] 0
        %705 = vst [vmem:[#allocation2 + $0xa0] sm:$0xf] 0
        %706 = vst [vmem:[#allocation2 + $0xa4] sm:$0xf] 0
        %707 = vst [vmem:[#allocation2 + $0xa8] sm:$0xf] 0
        %708 = vst [vmem:[#allocation2 + $0xac] sm:$0xf] 0
        %709 = vst [vmem:[#allocation2 + $0xb0] sm:$0xf] 0
        %710 = vst [vmem:[#allocation2 + $0xb4] sm:$0xf] 0
        %711 = vst [vmem:[#allocation2 + $0xb8] sm:$0xf] 0
        %712 = vst [vmem:[#allocation2 + $0xbc] sm:$0xf] 0
        %713 = vst [vmem:[#allocation2 + $0xc0] sm:$0xf] 0
        %714 = vst [vmem:[#allocation2 + $0xc4] sm:$0xf] 0
        %715 = vst [vmem:[#allocation2 + $0xc8] sm:$0xf] 0
        %716 = vst [vmem:[#allocation2 + $0xcc] sm:$0xf] 0
        %717 = vst [vmem:[#allocation2 + $0xd0] sm:$0xf] 0
        %718 = vst [vmem:[#allocation2 + $0xd4] sm:$0xf] 0
        %v751 = vunpack.c.l.b16 %v633
        %v752 = vunpack.c.l.b16 %v634
        %v753 = vunpack.c.l.b16 %v635
        %v754 = vunpack.c.l.b16 %v636
        %v755 = vunpack.c.l.b16 %v637
        %v756 = vunpack.c.l.b16 %v638
        %v757 = vunpack.c.l.b16 %v639
        %v758 = vunpack.c.l.b16 %v640
        %v759 = vunpack.c.l.b16 %v641
        %v760 = vunpack.c.l.b16 %v642
        %v761 = vunpack.c.l.b16 %v643
        %v762 = vunpack.c.l.b16 %v644
        %v763 = vunpack.c.l.b16 %v645
        %v764 = vunpack.c.l.b16 %v646
        %v765 = vunpack.c.l.b16 %v647
        %v766 = vunpack.c.l.b16 %v648
        %v767 = vunpack.c.l.b16 %v649
        %v768 = vunpack.c.l.b16 %v650
        %v769 = vunpack.c.l.b16 %v651
        %v770 = vunpack.c.l.b16 %v652
        %v771 = vunpack.c.l.b16 %v653
        %v772 = vunpack.c.l.b16 %v654
        %v773 = vunpack.c.l.b16 %v655
        %v774 = vunpack.c.l.b16 %v656
        %v775 = vunpack.c.l.b16 %v657
        %v776 = vunpack.c.l.b16 %v658
        %v777 = vunpack.c.l.b16 %v659
        %v778 = vunpack.c.l.b16 %v660
        %v779 = vunpack.c.l.b16 %v661
        %v780 = vunpack.c.l.b16 %v662
        %v781 = vunpack.c.l.b16 %v663
        %v782 = vunpack.c.l.b16 %v664
        %v783 = vpack.c.b16 %v752, %v751
        %v784 = vpack.c.b16 %v754, %v753
        %v785 = vpack.c.b16 %v756, %v755
        %v786 = vpack.c.b16 %v758, %v757
        %v787 = vpack.c.b16 %v760, %v759
        %v788 = vpack.c.b16 %v762, %v761
        %v789 = vpack.c.b16 %v764, %v763
        %v790 = vpack.c.b16 %v766, %v765
        %v791 = vpack.c.b16 %v768, %v767
        %v792 = vpack.c.b16 %v770, %v769
        %v793 = vpack.c.b16 %v772, %v771
        %v794 = vpack.c.b16 %v774, %v773
        %v795 = vpack.c.b16 %v776, %v775
        %v796 = vpack.c.b16 %v778, %v777
        %v797 = vpack.c.b16 %v780, %v779
        %v798 = vpack.c.b16 %v782, %v781
        %v800 = vshrl.u32 %v783, 16
        %v802 = vrot.slane %v800, 7
        %v803 = vshll.u32 %v783, 16
        %v805 = vor.u32 %v802, %v803
        %v807 = vshrl.u32 %v784, 16
        %v809 = vrot.slane %v807, 7
        %v810 = vshll.u32 %v784, 16
        %v812 = vor.u32 %v809, %v810
        %v814 = vshrl.u32 %v785, 16
        %v816 = vrot.slane %v814, 7
        %v817 = vshll.u32 %v785, 16
        %v819 = vor.u32 %v816, %v817
        %v821 = vshrl.u32 %v786, 16
        %v823 = vrot.slane %v821, 7
        %v824 = vshll.u32 %v786, 16
        %v826 = vor.u32 %v823, %v824
        %v828 = vshrl.u32 %v787, 16
        %v830 = vrot.slane %v828, 7
        %v831 = vshll.u32 %v787, 16
        %v833 = vor.u32 %v830, %v831
        %v835 = vshrl.u32 %v788, 16
        %v837 = vrot.slane %v835, 7
        %v838 = vshll.u32 %v788, 16
        %v840 = vor.u32 %v837, %v838
        %v842 = vshrl.u32 %v789, 16
        %v844 = vrot.slane %v842, 7
        %v845 = vshll.u32 %v789, 16
        %v847 = vor.u32 %v844, %v845
        %v849 = vshrl.u32 %v790, 16
        %v851 = vrot.slane %v849, 7
        %v852 = vshll.u32 %v790, 16
        %v854 = vor.u32 %v851, %v852
        %v856 = vshrl.u32 %v791, 16
        %v858 = vrot.slane %v856, 7
        %v859 = vshll.u32 %v791, 16
        %v861 = vor.u32 %v858, %v859
        %v863 = vshrl.u32 %v792, 16
        %v865 = vrot.slane %v863, 7
        %v866 = vshll.u32 %v792, 16
        %v868 = vor.u32 %v865, %v866
        %v870 = vshrl.u32 %v793, 16
        %v872 = vrot.slane %v870, 7
        %v873 = vshll.u32 %v793, 16
        %v875 = vor.u32 %v872, %v873
        %v877 = vshrl.u32 %v794, 16
        %v879 = vrot.slane %v877, 7
        %v880 = vshll.u32 %v794, 16
        %v882 = vor.u32 %v879, %v880
        %v884 = vshrl.u32 %v795, 16
        %v886 = vrot.slane %v884, 7
        %v887 = vshll.u32 %v795, 16
        %v889 = vor.u32 %v886, %v887
        %v891 = vshrl.u32 %v796, 16
        %v893 = vrot.slane %v891, 7
        %v894 = vshll.u32 %v796, 16
        %v896 = vor.u32 %v893, %v894
        %v898 = vshrl.u32 %v797, 16
        %v900 = vrot.slane %v898, 7
        %v901 = vshll.u32 %v797, 16
        %v903 = vor.u32 %v900, %v901
        %v905 = vshrl.u32 %v798, 16
        %v907 = vrot.slane %v905, 7
        %v908 = vshll.u32 %v798, 16
        %v910 = vor.u32 %v907, %v908
        %vm943 = vcmask 1040384
        %vm944 = vsmask.f32 256
        %vm945 = vmand %vm943, %vm944
        %v946 = vsel %vm945, 0, %v805
        %v947 = vsel %vm945, 0, %v812
        %v948 = vsel %vm945, 0, %v819
        %v949 = vsel %vm945, 0, %v826
        %v950 = vsel %vm945, 0, %v833
        %v951 = vsel %vm945, 0, %v840
        %v952 = vsel %vm945, 0, %v847
        %v953 = vsel %vm945, 0, %v854
        %v954 = vsel %vm945, 0, %v861
        %v955 = vsel %vm945, 0, %v868
        %v956 = vsel %vm945, 0, %v875
        %v957 = vsel %vm945, 0, %v882
        %v958 = vsel %vm945, 0, %v889
        %v959 = vsel %vm945, 0, %v896
        %v960 = vsel %vm945, 0, %v903
        %v961 = vsel %vm945, 0, %v910
        %v962 = vsel %vm945, %v802, 0
        %v963 = vsel %vm945, %v809, 0
        %v964 = vsel %vm945, %v816, 0
        %v965 = vsel %vm945, %v823, 0
        %v966 = vsel %vm945, %v830, 0
        %v967 = vsel %vm945, %v837, 0
        %v968 = vsel %vm945, %v844, 0
        %v969 = vsel %vm945, %v851, 0
        %v970 = vsel %vm945, %v858, 0
        %v971 = vsel %vm945, %v865, 0
        %v972 = vsel %vm945, %v872, 0
        %v973 = vsel %vm945, %v879, 0
        %v974 = vsel %vm945, %v886, 0
        %v975 = vsel %vm945, %v893, 0
        %v976 = vsel %vm945, %v900, 0
        %v977 = vsel %vm945, %v907, 0
        %v1010 = vunpack.c.l.b16 %v946
        %v1011 = vunpack.c.h.b16 %v946
        %v1012 = vunpack.c.l.b16 %v962
        %v1013 = vunpack.c.l.b16 %v947
        %v1014 = vunpack.c.h.b16 %v947
        %v1015 = vunpack.c.l.b16 %v963
        %v1016 = vunpack.c.l.b16 %v948
        %v1017 = vunpack.c.h.b16 %v948
        %v1018 = vunpack.c.l.b16 %v964
        %v1019 = vunpack.c.l.b16 %v949
        %v1020 = vunpack.c.h.b16 %v949
        %v1021 = vunpack.c.l.b16 %v965
        %v1022 = vunpack.c.l.b16 %v950
        %v1023 = vunpack.c.h.b16 %v950
        %v1024 = vunpack.c.l.b16 %v966
        %v1025 = vunpack.c.l.b16 %v951
        %v1026 = vunpack.c.h.b16 %v951
        %v1027 = vunpack.c.l.b16 %v967
        %v1028 = vunpack.c.l.b16 %v952
        %v1029 = vunpack.c.h.b16 %v952
        %v1030 = vunpack.c.l.b16 %v968
        %v1031 = vunpack.c.l.b16 %v953
        %v1032 = vunpack.c.h.b16 %v953
        %v1033 = vunpack.c.l.b16 %v969
        %v1034 = vunpack.c.l.b16 %v954
        %v1035 = vunpack.c.h.b16 %v954
        %v1036 = vunpack.c.l.b16 %v970
        %v1037 = vunpack.c.l.b16 %v955
        %v1038 = vunpack.c.h.b16 %v955
        %v1039 = vunpack.c.l.b16 %v971
        %v1040 = vunpack.c.l.b16 %v956
        %v1041 = vunpack.c.h.b16 %v956
        %v1042 = vunpack.c.l.b16 %v972
        %v1043 = vunpack.c.l.b16 %v957
        %v1044 = vunpack.c.h.b16 %v957
        %v1045 = vunpack.c.l.b16 %v973
        %v1046 = vunpack.c.l.b16 %v958
        %v1047 = vunpack.c.h.b16 %v958
        %v1048 = vunpack.c.l.b16 %v974
        %v1049 = vunpack.c.l.b16 %v959
        %v1050 = vunpack.c.h.b16 %v959
        %v1051 = vunpack.c.l.b16 %v975
        %v1052 = vunpack.c.l.b16 %v960
        %v1053 = vunpack.c.h.b16 %v960
        %v1054 = vunpack.c.l.b16 %v976
        %v1055 = vunpack.c.l.b16 %v961
        %v1056 = vunpack.c.h.b16 %v961
        %v1057 = vunpack.c.l.b16 %v977
        %v1058 = vpack.c.b16 %v1010, %v1010
        %v1059 = vpack.c.b16 %v1011, %v1011
        %v1060 = vpack.c.b16 %v1012, %v1012
        %v1061 = vpack.c.b16 %v1013, %v1013
        %v1062 = vpack.c.b16 %v1014, %v1014
        %v1063 = vpack.c.b16 %v1015, %v1015
        %v1064 = vpack.c.b16 %v1016, %v1016
        %v1065 = vpack.c.b16 %v1017, %v1017
        %v1066 = vpack.c.b16 %v1018, %v1018
        %v1067 = vpack.c.b16 %v1019, %v1019
        %v1068 = vpack.c.b16 %v1020, %v1020
        %v1069 = vpack.c.b16 %v1021, %v1021
        %v1070 = vpack.c.b16 %v1022, %v1022
        %v1071 = vpack.c.b16 %v1023, %v1023
        %v1072 = vpack.c.b16 %v1024, %v1024
        %v1073 = vpack.c.b16 %v1025, %v1025
        %v1074 = vpack.c.b16 %v1026, %v1026
        %v1075 = vpack.c.b16 %v1027, %v1027
        %v1076 = vpack.c.b16 %v1028, %v1028
        %v1077 = vpack.c.b16 %v1029, %v1029
        %v1078 = vpack.c.b16 %v1030, %v1030
        %v1079 = vpack.c.b16 %v1031, %v1031
        %v1080 = vpack.c.b16 %v1032, %v1032
        %v1081 = vpack.c.b16 %v1033, %v1033
        %v1082 = vpack.c.b16 %v1034, %v1034
        %v1083 = vpack.c.b16 %v1035, %v1035
        %v1084 = vpack.c.b16 %v1036, %v1036
        %v1085 = vpack.c.b16 %v1037, %v1037
        %v1086 = vpack.c.b16 %v1038, %v1038
        %v1087 = vpack.c.b16 %v1039, %v1039
        %v1088 = vpack.c.b16 %v1040, %v1040
        %v1089 = vpack.c.b16 %v1041, %v1041
        %v1090 = vpack.c.b16 %v1042, %v1042
        %v1091 = vpack.c.b16 %v1043, %v1043
        %v1092 = vpack.c.b16 %v1044, %v1044
        %v1093 = vpack.c.b16 %v1045, %v1045
        %v1094 = vpack.c.b16 %v1046, %v1046
        %v1095 = vpack.c.b16 %v1047, %v1047
        %v1096 = vpack.c.b16 %v1048, %v1048
        %v1097 = vpack.c.b16 %v1049, %v1049
        %v1098 = vpack.c.b16 %v1050, %v1050
        %v1099 = vpack.c.b16 %v1051, %v1051
        %v1100 = vpack.c.b16 %v1052, %v1052
        %v1101 = vpack.c.b16 %v1053, %v1053
        %v1102 = vpack.c.b16 %v1054, %v1054
        %v1103 = vpack.c.b16 %v1055, %v1055
        %v1104 = vpack.c.b16 %v1056, %v1056
        %v1105 = vpack.c.b16 %v1057, %v1057
        %s1154 = scalar_lea.vmem [#allocation2], 12
        %1155 = vst [vmem:[%s1154] sm:$0xf] %v1058
        %1156 = vst [vmem:[%s1154 + $0x4] sm:$0xf] %v1059
        %1157 = vst [vmem:[%s1154 + $0x8] sm:$0xf] %v1060
        %1158 = vst [vmem:[%s1154 + $0xc] sm:$0xf] %v1061
        %1159 = vst [vmem:[%s1154 + $0x10] sm:$0xf] %v1062
        %1160 = vst [vmem:[%s1154 + $0x14] sm:$0xf] %v1063
        %1161 = vst [vmem:[%s1154 + $0x18] sm:$0xf] %v1064
        %1162 = vst [vmem:[%s1154 + $0x1c] sm:$0xf] %v1065
        %1163 = vst [vmem:[%s1154 + $0x20] sm:$0xf] %v1066
        %1164 = vst [vmem:[%s1154 + $0x24] sm:$0xf] %v1067
        %1165 = vst [vmem:[%s1154 + $0x28] sm:$0xf] %v1068
        %1166 = vst [vmem:[%s1154 + $0x2c] sm:$0xf] %v1069
        %1167 = vst [vmem:[%s1154 + $0x30] sm:$0xf] %v1070
        %1168 = vst [vmem:[%s1154 + $0x34] sm:$0xf] %v1071
        %1169 = vst [vmem:[%s1154 + $0x38] sm:$0xf] %v1072
        %1170 = vst [vmem:[%s1154 + $0x3c] sm:$0xf] %v1073
        %1171 = vst [vmem:[%s1154 + $0x40] sm:$0xf] %v1074
        %1172 = vst [vmem:[%s1154 + $0x44] sm:$0xf] %v1075
        %1173 = vst [vmem:[%s1154 + $0x48] sm:$0xf] %v1076
        %1174 = vst [vmem:[%s1154 + $0x4c] sm:$0xf] %v1077
        %1175 = vst [vmem:[%s1154 + $0x50] sm:$0xf] %v1078
        %1176 = vst [vmem:[%s1154 + $0x54] sm:$0xf] %v1079
        %1177 = vst [vmem:[%s1154 + $0x58] sm:$0xf] %v1080
        %1178 = vst [vmem:[%s1154 + $0x5c] sm:$0xf] %v1081
        %1179 = vst [vmem:[%s1154 + $0x60] sm:$0xf] %v1082
        %1180 = vst [vmem:[%s1154 + $0x64] sm:$0xf] %v1083
        %1181 = vst [vmem:[%s1154 + $0x68] sm:$0xf] %v1084
        %1182 = vst [vmem:[%s1154 + $0x6c] sm:$0xf] %v1085
        %1183 = vst [vmem:[%s1154 + $0x70] sm:$0xf] %v1086
        %1184 = vst [vmem:[%s1154 + $0x74] sm:$0xf] %v1087
        %1185 = vst [vmem:[%s1154 + $0x78] sm:$0xf] %v1088
        %1186 = vst [vmem:[%s1154 + $0x7c] sm:$0xf] %v1089
        %1187 = vst [vmem:[%s1154 + $0x80] sm:$0xf] %v1090
        %1188 = vst [vmem:[%s1154 + $0x84] sm:$0xf] %v1091
        %1189 = vst [vmem:[%s1154 + $0x88] sm:$0xf] %v1092
        %1190 = vst [vmem:[%s1154 + $0x8c] sm:$0xf] %v1093
        %1191 = vst [vmem:[%s1154 + $0x90] sm:$0xf] %v1094
        %1192 = vst [vmem:[%s1154 + $0x94] sm:$0xf] %v1095
        %1193 = vst [vmem:[%s1154 + $0x98] sm:$0xf] %v1096
        %1194 = vst [vmem:[%s1154 + $0x9c] sm:$0xf] %v1097
        %1195 = vst [vmem:[%s1154 + $0xa0] sm:$0xf] %v1098
        %1196 = vst [vmem:[%s1154 + $0xa4] sm:$0xf] %v1099
        %1197 = vst [vmem:[%s1154 + $0xa8] sm:$0xf] %v1100
        %1198 = vst [vmem:[%s1154 + $0xac] sm:$0xf] %v1101
        %1199 = vst [vmem:[%s1154 + $0xb0] sm:$0xf] %v1102
        %1200 = vst [vmem:[%s1154 + $0xb4] sm:$0xf] %v1103
        %1201 = vst [vmem:[%s1154 + $0xb8] sm:$0xf] %v1104
        %1202 = vst [vmem:[%s1154 + $0xbc] sm:$0xf] %v1105
        %v1203 = vld [vmem:[#allocation2] sm:$0xf]
        %v1204 = vld [vmem:[#allocation2 + $0x4] sm:$0xf]
        %v1205 = vld [vmem:[#allocation2 + $0x8] sm:$0xf]
        %v1206 = vld [vmem:[#allocation2 + $0xc] sm:$0xf]
        %v1207 = vld [vmem:[#allocation2 + $0x10] sm:$0xf]
        %v1208 = vld [vmem:[#allocation2 + $0x14] sm:$0xf]
        %v1209 = vld [vmem:[#allocation2 + $0x18] sm:$0xf]
        %v1210 = vld [vmem:[#allocation2 + $0x1c] sm:$0xf]
        %v1211 = vld [vmem:[#allocation2 + $0x20] sm:$0xf]
        %v1212 = vld [vmem:[#allocation2 + $0x24] sm:$0xf]
        %v1213 = vld [vmem:[#allocation2 + $0x28] sm:$0xf]
        %v1214 = vld [vmem:[#allocation2 + $0x2c] sm:$0xf]
        %v1215 = vld [vmem:[#allocation2 + $0x30] sm:$0xf]
        %v1216 = vld [vmem:[#allocation2 + $0x34] sm:$0xf]
        %v1217 = vld [vmem:[#allocation2 + $0x38] sm:$0xf]
        %v1218 = vld [vmem:[#allocation2 + $0x3c] sm:$0xf]
        %v1219 = vld [vmem:[#allocation2 + $0x40] sm:$0xf]
        %v1220 = vld [vmem:[#allocation2 + $0x44] sm:$0xf]
        %v1221 = vld [vmem:[#allocation2 + $0x48] sm:$0xf]
        %v1222 = vld [vmem:[#allocation2 + $0x4c] sm:$0xf]
        %v1223 = vld [vmem:[#allocation2 + $0x50] sm:$0xf]
        %v1224 = vld [vmem:[#allocation2 + $0x54] sm:$0xf]
        %v1225 = vld [vmem:[#allocation2 + $0x58] sm:$0xf]
        %v1226 = vld [vmem:[#allocation2 + $0x5c] sm:$0xf]
        %v1227 = vld [vmem:[#allocation2 + $0x60] sm:$0xf]
        %v1228 = vld [vmem:[#allocation2 + $0x64] sm:$0xf]
        %v1229 = vld [vmem:[#allocation2 + $0x68] sm:$0xf]
        %v1230 = vld [vmem:[#allocation2 + $0x6c] sm:$0xf]
        %v1231 = vld [vmem:[#allocation2 + $0x70] sm:$0xf]
        %v1232 = vld [vmem:[#allocation2 + $0x74] sm:$0xf]
        %v1233 = vld [vmem:[#allocation2 + $0x78] sm:$0xf]
        %v1234 = vld [vmem:[#allocation2 + $0x7c] sm:$0xf]
        %v1235 = vld [vmem:[#allocation2 + $0x80] sm:$0xf]
        %v1236 = vld [vmem:[#allocation2 + $0x84] sm:$0xf]
        %v1237 = vld [vmem:[#allocation2 + $0x88] sm:$0xf]
        %v1238 = vld [vmem:[#allocation2 + $0x8c] sm:$0xf]
        %v1239 = vld [vmem:[#allocation2 + $0x90] sm:$0xf]
        %v1240 = vld [vmem:[#allocation2 + $0x94] sm:$0xf]
        %v1241 = vld [vmem:[#allocation2 + $0x98] sm:$0xf]
        %v1242 = vld [vmem:[#allocation2 + $0x9c] sm:$0xf]
        %v1243 = vld [vmem:[#allocation2 + $0xa0] sm:$0xf]
        %v1244 = vld [vmem:[#allocation2 + $0xa4] sm:$0xf]
        %v1245 = vld [vmem:[#allocation2 + $0xa8] sm:$0xf]
        %v1246 = vld [vmem:[#allocation2 + $0xac] sm:$0xf]
        %v1247 = vld [vmem:[#allocation2 + $0xb0] sm:$0xf]
        %v1248 = vld [vmem:[#allocation2 + $0xb4] sm:$0xf]
        %v1249 = vld [vmem:[#allocation2 + $0xb8] sm:$0xf]
        %v1250 = vld [vmem:[#allocation2 + $0xbc] sm:$0xf]
        %v1251 = vld [vmem:[%s1154] sm:$0xf]
        %v1252 = vld [vmem:[%s1154 + $0x4] sm:$0xf]
        %v1253 = vld [vmem:[%s1154 + $0x8] sm:$0xf]
        %v1254 = vld [vmem:[%s1154 + $0xc] sm:$0xf]
        %v1255 = vld [vmem:[%s1154 + $0x10] sm:$0xf]
        %v1256 = vld [vmem:[%s1154 + $0x14] sm:$0xf]
        %v1257 = vld [vmem:[%s1154 + $0x18] sm:$0xf]
        %v1258 = vld [vmem:[%s1154 + $0x1c] sm:$0xf]
        %v1259 = vld [vmem:[%s1154 + $0x20] sm:$0xf]
        %v1260 = vld [vmem:[%s1154 + $0x24] sm:$0xf]
        %v1261 = vld [vmem:[%s1154 + $0x28] sm:$0xf]
        %v1262 = vld [vmem:[%s1154 + $0x2c] sm:$0xf]
        %v1263 = vld [vmem:[%s1154 + $0x30] sm:$0xf]
        %v1264 = vld [vmem:[%s1154 + $0x34] sm:$0xf]
        %v1265 = vld [vmem:[%s1154 + $0x38] sm:$0xf]
        %v1266 = vld [vmem:[%s1154 + $0x3c] sm:$0xf]
        %v1267 = vld [vmem:[%s1154 + $0x40] sm:$0xf]
        %v1268 = vld [vmem:[%s1154 + $0x44] sm:$0xf]
        %v1269 = vld [vmem:[%s1154 + $0x48] sm:$0xf]
        %v1270 = vld [vmem:[%s1154 + $0x4c] sm:$0xf]
        %v1271 = vld [vmem:[%s1154 + $0x50] sm:$0xf]
        %v1272 = vld [vmem:[%s1154 + $0x54] sm:$0xf]
        %v1273 = vld [vmem:[%s1154 + $0x58] sm:$0xf]
        %v1274 = vld [vmem:[%s1154 + $0x5c] sm:$0xf]
        %v1275 = vld [vmem:[%s1154 + $0x60] sm:$0xf]
        %v1276 = vld [vmem:[%s1154 + $0x64] sm:$0xf]
        %v1277 = vld [vmem:[%s1154 + $0x68] sm:$0xf]
        %v1278 = vld [vmem:[%s1154 + $0x6c] sm:$0xf]
        %v1279 = vld [vmem:[%s1154 + $0x70] sm:$0xf]
        %v1280 = vld [vmem:[%s1154 + $0x74] sm:$0xf]
        %v1281 = vld [vmem:[%s1154 + $0x78] sm:$0xf]
        %v1282 = vld [vmem:[%s1154 + $0x7c] sm:$0xf]
        %v1283 = vld [vmem:[%s1154 + $0x80] sm:$0xf]
        %v1284 = vld [vmem:[%s1154 + $0x84] sm:$0xf]
        %v1285 = vld [vmem:[%s1154 + $0x88] sm:$0xf]
        %v1286 = vld [vmem:[%s1154 + $0x8c] sm:$0xf]
        %v1287 = vld [vmem:[%s1154 + $0x90] sm:$0xf]
        %v1288 = vld [vmem:[%s1154 + $0x94] sm:$0xf]
        %v1289 = vld [vmem:[%s1154 + $0x98] sm:$0xf]
        %v1290 = vld [vmem:[%s1154 + $0x9c] sm:$0xf]
        %v1291 = vld [vmem:[%s1154 + $0xa0] sm:$0xf]
        %v1292 = vld [vmem:[%s1154 + $0xa4] sm:$0xf]
        %v1293 = vld [vmem:[%s1154 + $0xa8] sm:$0xf]
        %v1294 = vld [vmem:[%s1154 + $0xac] sm:$0xf]
        %v1295 = vld [vmem:[%s1154 + $0xb0] sm:$0xf]
        %v1296 = vld [vmem:[%s1154 + $0xb4] sm:$0xf]
        %v1297 = vld [vmem:[%s1154 + $0xb8] sm:$0xf]
        %v1298 = vld [vmem:[%s1154 + $0xbc] sm:$0xf]
        %s1299 = scalar_lea.vmem [#allocation2], 24
        %v1300 = vld [vmem:[%s1299] sm:$0xf]
        %v1301 = vld [vmem:[%s1299 + $0x4] sm:$0xf]
        %v1302 = vld [vmem:[%s1299 + $0x8] sm:$0xf]
        %v1303 = vld [vmem:[%s1299 + $0xc] sm:$0xf]
        %v1304 = vld [vmem:[%s1299 + $0x10] sm:$0xf]
        %v1305 = vld [vmem:[%s1299 + $0x14] sm:$0xf]
        %v1306 = vld [vmem:[%s1299 + $0x18] sm:$0xf]
        %v1307 = vld [vmem:[%s1299 + $0x1c] sm:$0xf]
        %v1308 = vld [vmem:[%s1299 + $0x20] sm:$0xf]
        %v1309 = vld [vmem:[%s1299 + $0x24] sm:$0xf]
        %v1310 = vld [vmem:[%s1299 + $0x28] sm:$0xf]
        %v1311 = vld [vmem:[%s1299 + $0x2c] sm:$0xf]
        %v1312 = vld [vmem:[%s1299 + $0x30] sm:$0xf]
        %v1313 = vld [vmem:[%s1299 + $0x34] sm:$0xf]
        %v1314 = vld [vmem:[%s1299 + $0x38] sm:$0xf]
        %v1315 = vld [vmem:[%s1299 + $0x3c] sm:$0xf]
        %v1316 = vld [vmem:[%s1299 + $0x40] sm:$0xf]
        %v1317 = vld [vmem:[%s1299 + $0x44] sm:$0xf]
        %v1318 = vld [vmem:[%s1299 + $0x48] sm:$0xf]
        %v1319 = vld [vmem:[%s1299 + $0x4c] sm:$0xf]
        %v1320 = vld [vmem:[%s1299 + $0x50] sm:$0xf]
        %v1321 = vld [vmem:[%s1299 + $0x54] sm:$0xf]
        %v1322 = vld [vmem:[%s1299 + $0x58] sm:$0xf]
        %v1323 = vld [vmem:[%s1299 + $0x5c] sm:$0xf]
        %v1324 = vld [vmem:[%s1299 + $0x60] sm:$0xf]
        %v1325 = vld [vmem:[%s1299 + $0x64] sm:$0xf]
        %v1326 = vld [vmem:[%s1299 + $0x68] sm:$0xf]
        %v1327 = vld [vmem:[%s1299 + $0x6c] sm:$0xf]
        %v1328 = vld [vmem:[%s1299 + $0x70] sm:$0xf]
        %v1329 = vld [vmem:[%s1299 + $0x74] sm:$0xf]
        %v1330 = vld [vmem:[%s1299 + $0x78] sm:$0xf]
        %v1331 = vld [vmem:[%s1299 + $0x7c] sm:$0xf]
        %v1332 = vld [vmem:[%s1299 + $0x80] sm:$0xf]
        %v1333 = vld [vmem:[%s1299 + $0x84] sm:$0xf]
        %v1334 = vld [vmem:[%s1299 + $0x88] sm:$0xf]
        %v1335 = vld [vmem:[%s1299 + $0x8c] sm:$0xf]
        %v1336 = vld [vmem:[%s1299 + $0x90] sm:$0xf]
        %v1337 = vld [vmem:[%s1299 + $0x94] sm:$0xf]
        %v1338 = vld [vmem:[%s1299 + $0x98] sm:$0xf]
        %v1339 = vld [vmem:[%s1299 + $0x9c] sm:$0xf]
        %v1340 = vld [vmem:[%s1299 + $0xa0] sm:$0xf]
        %v1341 = vld [vmem:[%s1299 + $0xa4] sm:$0xf]
        %v1342 = vld [vmem:[%s1299 + $0xa8] sm:$0xf]
        %v1343 = vld [vmem:[%s1299 + $0xac] sm:$0xf]
        %v1344 = vld [vmem:[%s1299 + $0xb0] sm:$0xf]
        %v1345 = vld [vmem:[%s1299 + $0xb4] sm:$0xf]
        %v1346 = vld [vmem:[%s1299 + $0xb8] sm:$0xf]
        %v1347 = vld [vmem:[%s1299 + $0xbc] sm:$0xf]
        %v1396 = vunpack.c.l.b16 %v1203
        %v1397 = vunpack.c.l.b16 %v1204
        %v1398 = vunpack.c.l.b16 %v1205
        %v1399 = vunpack.c.l.b16 %v1206
        %v1400 = vunpack.c.l.b16 %v1207
        %v1401 = vunpack.c.l.b16 %v1208
        %v1402 = vunpack.c.l.b16 %v1209
        %v1403 = vunpack.c.l.b16 %v1210
        %v1404 = vunpack.c.l.b16 %v1211
        %v1405 = vunpack.c.l.b16 %v1212
        %v1406 = vunpack.c.l.b16 %v1213
        %v1407 = vunpack.c.l.b16 %v1214
        %v1408 = vunpack.c.l.b16 %v1215
        %v1409 = vunpack.c.l.b16 %v1216
        %v1410 = vunpack.c.l.b16 %v1217
        %v1411 = vunpack.c.l.b16 %v1218
        %v1412 = vunpack.c.l.b16 %v1219
        %v1413 = vunpack.c.l.b16 %v1220
        %v1414 = vunpack.c.l.b16 %v1221
        %v1415 = vunpack.c.l.b16 %v1222
        %v1416 = vunpack.c.l.b16 %v1223
        %v1417 = vunpack.c.l.b16 %v1224
        %v1418 = vunpack.c.l.b16 %v1225
        %v1419 = vunpack.c.l.b16 %v1226
        %v1420 = vunpack.c.l.b16 %v1227
        %v1421 = vunpack.c.l.b16 %v1228
        %v1422 = vunpack.c.l.b16 %v1229
        %v1423 = vunpack.c.l.b16 %v1230
        %v1424 = vunpack.c.l.b16 %v1231
        %v1425 = vunpack.c.l.b16 %v1232
        %v1426 = vunpack.c.l.b16 %v1233
        %v1427 = vunpack.c.l.b16 %v1234
        %v1428 = vunpack.c.l.b16 %v1235
        %v1429 = vunpack.c.l.b16 %v1236
        %v1430 = vunpack.c.l.b16 %v1237
        %v1431 = vunpack.c.l.b16 %v1238
        %v1432 = vunpack.c.l.b16 %v1239
        %v1433 = vunpack.c.l.b16 %v1240
        %v1434 = vunpack.c.l.b16 %v1241
        %v1435 = vunpack.c.l.b16 %v1242
        %v1436 = vunpack.c.l.b16 %v1243
        %v1437 = vunpack.c.l.b16 %v1244
        %v1438 = vunpack.c.l.b16 %v1245
        %v1439 = vunpack.c.l.b16 %v1246
        %v1440 = vunpack.c.l.b16 %v1247
        %v1441 = vunpack.c.l.b16 %v1248
        %v1442 = vunpack.c.l.b16 %v1249
        %v1443 = vunpack.c.l.b16 %v1250
        %v1444 = vpack.c.b16 %v1397, %v1396
        %v1445 = vpack.c.b16 %v1399, %v1398
        %v1446 = vpack.c.b16 %v1401, %v1400
        %v1447 = vpack.c.b16 %v1403, %v1402
        %v1448 = vpack.c.b16 %v1405, %v1404
        %v1449 = vpack.c.b16 %v1407, %v1406
        %v1450 = vpack.c.b16 %v1409, %v1408
        %v1451 = vpack.c.b16 %v1411, %v1410
        %v1452 = vpack.c.b16 %v1413, %v1412
        %v1453 = vpack.c.b16 %v1415, %v1414
        %v1454 = vpack.c.b16 %v1417, %v1416
        %v1455 = vpack.c.b16 %v1419, %v1418
        %v1456 = vpack.c.b16 %v1421, %v1420
        %v1457 = vpack.c.b16 %v1423, %v1422
        %v1458 = vpack.c.b16 %v1425, %v1424
        %v1459 = vpack.c.b16 %v1427, %v1426
        %v1460 = vpack.c.b16 %v1429, %v1428
        %v1461 = vpack.c.b16 %v1431, %v1430
        %v1462 = vpack.c.b16 %v1433, %v1432
        %v1463 = vpack.c.b16 %v1435, %v1434
        %v1464 = vpack.c.b16 %v1437, %v1436
        %v1465 = vpack.c.b16 %v1439, %v1438
        %v1466 = vpack.c.b16 %v1441, %v1440
        %v1467 = vpack.c.b16 %v1443, %v1442
        %v1540 = vunpack.c.l.b16 %v1251
        %v1541 = vunpack.c.l.b16 %v1252
        %v1542 = vunpack.c.l.b16 %v1253
        %v1543 = vunpack.c.l.b16 %v1254
        %v1544 = vunpack.c.l.b16 %v1255
        %v1545 = vunpack.c.l.b16 %v1256
        %v1546 = vunpack.c.l.b16 %v1257
        %v1547 = vunpack.c.l.b16 %v1258
        %v1548 = vunpack.c.l.b16 %v1259
        %v1549 = vunpack.c.l.b16 %v1260
        %v1550 = vunpack.c.l.b16 %v1261
        %v1551 = vunpack.c.l.b16 %v1262
        %v1552 = vunpack.c.l.b16 %v1263
        %v1553 = vunpack.c.l.b16 %v1264
        %v1554 = vunpack.c.l.b16 %v1265
        %v1555 = vunpack.c.l.b16 %v1266
        %v1556 = vunpack.c.l.b16 %v1267
        %v1557 = vunpack.c.l.b16 %v1268
        %v1558 = vunpack.c.l.b16 %v1269
        %v1559 = vunpack.c.l.b16 %v1270
        %v1560 = vunpack.c.l.b16 %v1271
        %v1561 = vunpack.c.l.b16 %v1272
        %v1562 = vunpack.c.l.b16 %v1273
        %v1563 = vunpack.c.l.b16 %v1274
        %v1564 = vunpack.c.l.b16 %v1275
        %v1565 = vunpack.c.l.b16 %v1276
        %v1566 = vunpack.c.l.b16 %v1277
        %v1567 = vunpack.c.l.b16 %v1278
        %v1568 = vunpack.c.l.b16 %v1279
        %v1569 = vunpack.c.l.b16 %v1280
        %v1570 = vunpack.c.l.b16 %v1281
        %v1571 = vunpack.c.l.b16 %v1282
        %v1572 = vunpack.c.l.b16 %v1283
        %v1573 = vunpack.c.l.b16 %v1284
        %v1574 = vunpack.c.l.b16 %v1285
        %v1575 = vunpack.c.l.b16 %v1286
        %v1576 = vunpack.c.l.b16 %v1287
        %v1577 = vunpack.c.l.b16 %v1288
        %v1578 = vunpack.c.l.b16 %v1289
        %v1579 = vunpack.c.l.b16 %v1290
        %v1580 = vunpack.c.l.b16 %v1291
        %v1581 = vunpack.c.l.b16 %v1292
        %v1582 = vunpack.c.l.b16 %v1293
        %v1583 = vunpack.c.l.b16 %v1294
        %v1584 = vunpack.c.l.b16 %v1295
        %v1585 = vunpack.c.l.b16 %v1296
        %v1586 = vunpack.c.l.b16 %v1297
        %v1587 = vunpack.c.l.b16 %v1298
        %v1588 = vpack.c.b16 %v1541, %v1540
        %v1589 = vpack.c.b16 %v1543, %v1542
        %v1590 = vpack.c.b16 %v1545, %v1544
        %v1591 = vpack.c.b16 %v1547, %v1546
        %v1592 = vpack.c.b16 %v1549, %v1548
        %v1593 = vpack.c.b16 %v1551, %v1550
        %v1594 = vpack.c.b16 %v1553, %v1552
        %v1595 = vpack.c.b16 %v1555, %v1554
        %v1596 = vpack.c.b16 %v1557, %v1556
        %v1597 = vpack.c.b16 %v1559, %v1558
        %v1598 = vpack.c.b16 %v1561, %v1560
        %v1599 = vpack.c.b16 %v1563, %v1562
        %v1600 = vpack.c.b16 %v1565, %v1564
        %v1601 = vpack.c.b16 %v1567, %v1566
        %v1602 = vpack.c.b16 %v1569, %v1568
        %v1603 = vpack.c.b16 %v1571, %v1570
        %v1604 = vpack.c.b16 %v1573, %v1572
        %v1605 = vpack.c.b16 %v1575, %v1574
        %v1606 = vpack.c.b16 %v1577, %v1576
        %v1607 = vpack.c.b16 %v1579, %v1578
        %v1608 = vpack.c.b16 %v1581, %v1580
        %v1609 = vpack.c.b16 %v1583, %v1582
        %v1610 = vpack.c.b16 %v1585, %v1584
        %v1611 = vpack.c.b16 %v1587, %v1586
        %v1684 = vunpack.c.l.b16 %v1300
        %v1685 = vunpack.c.l.b16 %v1301
        %v1686 = vunpack.c.l.b16 %v1302
        %v1687 = vunpack.c.l.b16 %v1303
        %v1688 = vunpack.c.l.b16 %v1304
        %v1689 = vunpack.c.l.b16 %v1305
        %v1690 = vunpack.c.l.b16 %v1306
        %v1691 = vunpack.c.l.b16 %v1307
        %v1692 = vunpack.c.l.b16 %v1308
        %v1693 = vunpack.c.l.b16 %v1309
        %v1694 = vunpack.c.l.b16 %v1310
        %v1695 = vunpack.c.l.b16 %v1311
        %v1696 = vunpack.c.l.b16 %v1312
        %v1697 = vunpack.c.l.b16 %v1313
        %v1698 = vunpack.c.l.b16 %v1314
        %v1699 = vunpack.c.l.b16 %v1315
        %v1700 = vunpack.c.l.b16 %v1316
        %v1701 = vunpack.c.l.b16 %v1317
        %v1702 = vunpack.c.l.b16 %v1318
        %v1703 = vunpack.c.l.b16 %v1319
        %v1704 = vunpack.c.l.b16 %v1320
        %v1705 = vunpack.c.l.b16 %v1321
        %v1706 = vunpack.c.l.b16 %v1322
        %v1707 = vunpack.c.l.b16 %v1323
        %v1708 = vunpack.c.l.b16 %v1324
        %v1709 = vunpack.c.l.b16 %v1325
        %v1710 = vunpack.c.l.b16 %v1326
        %v1711 = vunpack.c.l.b16 %v1327
        %v1712 = vunpack.c.l.b16 %v1328
        %v1713 = vunpack.c.l.b16 %v1329
        %v1714 = vunpack.c.l.b16 %v1330
        %v1715 = vunpack.c.l.b16 %v1331
        %v1716 = vunpack.c.l.b16 %v1332
        %v1717 = vunpack.c.l.b16 %v1333
        %v1718 = vunpack.c.l.b16 %v1334
        %v1719 = vunpack.c.l.b16 %v1335
        %v1720 = vunpack.c.l.b16 %v1336
        %v1721 = vunpack.c.l.b16 %v1337
        %v1722 = vunpack.c.l.b16 %v1338
        %v1723 = vunpack.c.l.b16 %v1339
        %v1724 = vunpack.c.l.b16 %v1340
        %v1725 = vunpack.c.l.b16 %v1341
        %v1726 = vunpack.c.l.b16 %v1342
        %v1727 = vunpack.c.l.b16 %v1343
        %v1728 = vunpack.c.l.b16 %v1344
        %v1729 = vunpack.c.l.b16 %v1345
        %v1730 = vunpack.c.l.b16 %v1346
        %v1731 = vunpack.c.l.b16 %v1347
        %v1732 = vpack.c.b16 %v1685, %v1684
        %v1733 = vpack.c.b16 %v1687, %v1686
        %v1734 = vpack.c.b16 %v1689, %v1688
        %v1735 = vpack.c.b16 %v1691, %v1690
        %v1736 = vpack.c.b16 %v1693, %v1692
        %v1737 = vpack.c.b16 %v1695, %v1694
        %v1738 = vpack.c.b16 %v1697, %v1696
        %v1739 = vpack.c.b16 %v1699, %v1698
        %v1740 = vpack.c.b16 %v1701, %v1700
        %v1741 = vpack.c.b16 %v1703, %v1702
        %v1742 = vpack.c.b16 %v1705, %v1704
        %v1743 = vpack.c.b16 %v1707, %v1706
        %v1744 = vpack.c.b16 %v1709, %v1708
        %v1745 = vpack.c.b16 %v1711, %v1710
        %v1746 = vpack.c.b16 %v1713, %v1712
        %v1747 = vpack.c.b16 %v1715, %v1714
        %v1748 = vpack.c.b16 %v1717, %v1716
        %v1749 = vpack.c.b16 %v1719, %v1718
        %v1750 = vpack.c.b16 %v1721, %v1720
        %v1751 = vpack.c.b16 %v1723, %v1722
        %v1752 = vpack.c.b16 %v1725, %v1724
        %v1753 = vpack.c.b16 %v1727, %v1726
        %v1754 = vpack.c.b16 %v1729, %v1728
        %v1755 = vpack.c.b16 %v1731, %v1730
        %v1780 = vld [vmem:[#allocation8] sm:$0xff]
        %v1781 = vld [vmem:[#allocation8 + $0x8] sm:$0xf]
        %v1782 = vld [vmem:[#allocation8 + $0xc] sm:$0xff]
        %v1783 = vld [vmem:[#allocation8 + $0x14] sm:$0xf]
        %v1784 = vld [vmem:[#allocation8 + $0x18] sm:$0xff]
        %v1785 = vld [vmem:[#allocation8 + $0x20] sm:$0xf]
        %v1786 = vld [vmem:[#allocation8 + $0x24] sm:$0xff]
        %v1787 = vld [vmem:[#allocation8 + $0x2c] sm:$0xf]
        %v1788 = vld [vmem:[#allocation8 + $0x30] sm:$0xff]
        %v1789 = vld [vmem:[#allocation8 + $0x38] sm:$0xf]
        %v1790 = vld [vmem:[#allocation8 + $0x3c] sm:$0xff]
        %v1791 = vld [vmem:[#allocation8 + $0x44] sm:$0xf]
        %v1792 = vld [vmem:[#allocation8 + $0x48] sm:$0xff]
        %v1793 = vld [vmem:[#allocation8 + $0x50] sm:$0xf]
        %v1794 = vld [vmem:[#allocation8 + $0x54] sm:$0xff]
        %v1795 = vld [vmem:[#allocation8 + $0x5c] sm:$0xf]
        %v1796 = vld [vmem:[#allocation8 + $0x60] sm:$0xff]
        %v1797 = vld [vmem:[#allocation8 + $0x68] sm:$0xf]
        %v1798 = vld [vmem:[#allocation8 + $0x6c] sm:$0xff]
        %v1799 = vld [vmem:[#allocation8 + $0x74] sm:$0xf]
        %v1800 = vld [vmem:[#allocation8 + $0x78] sm:$0xff]
        %v1801 = vld [vmem:[#allocation8 + $0x80] sm:$0xf]
        %v1802 = vld [vmem:[#allocation8 + $0x84] sm:$0xff]
        %v1803 = vld [vmem:[#allocation8 + $0x8c] sm:$0xf]
        %v1804 = vld [vmem:[#allocation8 + $0x90] sm:$0xff]
        %v1805 = vld [vmem:[#allocation8 + $0x98] sm:$0xf]
        %v1806 = vld [vmem:[#allocation8 + $0x9c] sm:$0xff]
        %v1807 = vld [vmem:[#allocation8 + $0xa4] sm:$0xf]
        %v1808 = vld [vmem:[#allocation8 + $0xa8] sm:$0xff]
        %v1809 = vld [vmem:[#allocation8 + $0xb0] sm:$0xf]
        %v1810 = vld [vmem:[#allocation8 + $0xb4] sm:$0xff]
        %v1811 = vld [vmem:[#allocation8 + $0xbc] sm:$0xf]
        %v1812 = vld [vmem:[#allocation8 + $0xc0] sm:$0xff]
        %v1813 = vld [vmem:[#allocation8 + $0xc8] sm:$0xf]
        %v1814 = vld [vmem:[#allocation8 + $0xcc] sm:$0xff]
        %v1815 = vld [vmem:[#allocation8 + $0xd4] sm:$0xf]
        %v1816 = vld [vmem:[#allocation8 + $0xd8] sm:$0xff]
        %v1817 = vld [vmem:[#allocation8 + $0xe0] sm:$0xf]
        %v1818 = vld [vmem:[#allocation8 + $0xe4] sm:$0xff]
        %v1819 = vld [vmem:[#allocation8 + $0xec] sm:$0xf]
        %v1820 = vld [vmem:[#allocation8 + $0xf0] sm:$0xff]
        %v1821 = vld [vmem:[#allocation8 + $0xf8] sm:$0xf]
        %v1822 = vld [vmem:[#allocation8 + $0xfc] sm:$0xff]
        %v1823 = vld [vmem:[#allocation8 + $0x104] sm:$0xf]
        %v1824 = vld [vmem:[#allocation8 + $0x108] sm:$0xff]
        %v1825 = vld [vmem:[#allocation8 + $0x110] sm:$0xf]
        %v1826 = vld [vmem:[#allocation8 + $0x114] sm:$0xff]
        %v1827 = vld [vmem:[#allocation8 + $0x11c] sm:$0xf]
        %v1828 = vld [vmem:[#allocation8 + $0x120] sm:$0xff]
        %v1829 = vld [vmem:[#allocation8 + $0x128] sm:$0xf]
        %v1830 = vld [vmem:[#allocation8 + $0x12c] sm:$0xff]
        %v1831 = vld [vmem:[#allocation8 + $0x134] sm:$0xf]
        %v1832 = vld [vmem:[#allocation8 + $0x138] sm:$0xff]
        %v1833 = vld [vmem:[#allocation8 + $0x140] sm:$0xf]
        %v1834 = vld [vmem:[#allocation8 + $0x144] sm:$0xff]
        %v1835 = vld [vmem:[#allocation8 + $0x14c] sm:$0xf]
        %v1836 = vld [vmem:[#allocation8 + $0x150] sm:$0xff]
        %v1837 = vld [vmem:[#allocation8 + $0x158] sm:$0xf]
        %v1838 = vld [vmem:[#allocation8 + $0x15c] sm:$0xff]
        %v1839 = vld [vmem:[#allocation8 + $0x164] sm:$0xf]
        %v1840 = vld [vmem:[#allocation8 + $0x168] sm:$0xff]
        %v1841 = vld [vmem:[#allocation8 + $0x170] sm:$0xf]
        %v1842 = vld [vmem:[#allocation8 + $0x174] sm:$0xff]
        %v1843 = vld [vmem:[#allocation8 + $0x17c] sm:$0xf]
        %v1844 = vld [vmem:[#allocation8 + $0x180] sm:$0xff]
        %v1845 = vld [vmem:[#allocation8 + $0x188] sm:$0xf]
        %v1846 = vld [vmem:[#allocation8 + $0x18c] sm:$0xff]
        %v1847 = vld [vmem:[#allocation8 + $0x194] sm:$0xf]
        %v1848 = vld [vmem:[#allocation8 + $0x198] sm:$0xff]
        %v1849 = vld [vmem:[#allocation8 + $0x1a0] sm:$0xf]
        %v1850 = vld [vmem:[#allocation8 + $0x1a4] sm:$0xff]
        %v1851 = vld [vmem:[#allocation8 + $0x1ac] sm:$0xf]
        %v1852 = vld [vmem:[#allocation8 + $0x1b0] sm:$0xff]
        %v1853 = vld [vmem:[#allocation8 + $0x1b8] sm:$0xf]
        %v1854 = vld [vmem:[#allocation8 + $0x1bc] sm:$0xff]
        %v1855 = vld [vmem:[#allocation8 + $0x1c4] sm:$0xf]
        %v1856 = vld [vmem:[#allocation8 + $0x1c8] sm:$0xff]
        %v1857 = vld [vmem:[#allocation8 + $0x1d0] sm:$0xf]
        %v1858 = vld [vmem:[#allocation8 + $0x1d4] sm:$0xff]
        %v1859 = vld [vmem:[#allocation8 + $0x1dc] sm:$0xf]
        %v1860 = vld [vmem:[#allocation8 + $0x1e0] sm:$0xff]
        %v1861 = vld [vmem:[#allocation8 + $0x1e8] sm:$0xf]
        %v1862 = vld [vmem:[#allocation8 + $0x1ec] sm:$0xff]
        %v1863 = vld [vmem:[#allocation8 + $0x1f4] sm:$0xf]
        %v1864 = vld [vmem:[#allocation8 + $0x1f8] sm:$0xff]
        %v1865 = vld [vmem:[#allocation8 + $0x200] sm:$0xf]
        %v1866 = vld [vmem:[#allocation8 + $0x204] sm:$0xff]
        %v1867 = vld [vmem:[#allocation8 + $0x20c] sm:$0xf]
        %v1868 = vld [vmem:[#allocation8 + $0x210] sm:$0xff]
        %v1869 = vld [vmem:[#allocation8 + $0x218] sm:$0xf]
        %v1870 = vld [vmem:[#allocation8 + $0x21c] sm:$0xff]
        %v1871 = vld [vmem:[#allocation8 + $0x224] sm:$0xf]
        %v1872 = vld [vmem:[#allocation8 + $0x228] sm:$0xff]
        %v1873 = vld [vmem:[#allocation8 + $0x230] sm:$0xf]
        %v1874 = vld [vmem:[#allocation8 + $0x234] sm:$0xff]
        %v1875 = vld [vmem:[#allocation8 + $0x23c] sm:$0xf]
        %v1972 = vunpack.c.l.b16 %v1780
        %v1973 = vunpack.c.h.b16 %v1780
        %v1974 = vunpack.c.l.b16 %v1781
        %v1975 = vunpack.c.l.b16 %v1782
        %v1976 = vunpack.c.h.b16 %v1782
        %v1977 = vunpack.c.l.b16 %v1783
        %v1978 = vunpack.c.l.b16 %v1784
        %v1979 = vunpack.c.h.b16 %v1784
        %v1980 = vunpack.c.l.b16 %v1785
        %v1981 = vunpack.c.l.b16 %v1786
        %v1982 = vunpack.c.h.b16 %v1786
        %v1983 = vunpack.c.l.b16 %v1787
        %v1984 = vunpack.c.l.b16 %v1788
        %v1985 = vunpack.c.h.b16 %v1788
        %v1986 = vunpack.c.l.b16 %v1789
        %v1987 = vunpack.c.l.b16 %v1790
        %v1988 = vunpack.c.h.b16 %v1790
        %v1989 = vunpack.c.l.b16 %v1791
        %v1990 = vunpack.c.l.b16 %v1792
        %v1991 = vunpack.c.h.b16 %v1792
        %v1992 = vunpack.c.l.b16 %v1793
        %v1993 = vunpack.c.l.b16 %v1794
        %v1994 = vunpack.c.h.b16 %v1794
        %v1995 = vunpack.c.l.b16 %v1795
        %v1996 = vunpack.c.l.b16 %v1796
        %v1997 = vunpack.c.h.b16 %v1796
        %v1998 = vunpack.c.l.b16 %v1797
        %v1999 = vunpack.c.l.b16 %v1798
        %v2000 = vunpack.c.h.b16 %v1798
        %v2001 = vunpack.c.l.b16 %v1799
        %v2002 = vunpack.c.l.b16 %v1800
        %v2003 = vunpack.c.h.b16 %v1800
        %v2004 = vunpack.c.l.b16 %v1801
        %v2005 = vunpack.c.l.b16 %v1802
        %v2006 = vunpack.c.h.b16 %v1802
        %v2007 = vunpack.c.l.b16 %v1803
        %v2008 = vunpack.c.l.b16 %v1804
        %v2009 = vunpack.c.h.b16 %v1804
        %v2010 = vunpack.c.l.b16 %v1805
        %v2011 = vunpack.c.l.b16 %v1806
        %v2012 = vunpack.c.h.b16 %v1806
        %v2013 = vunpack.c.l.b16 %v1807
        %v2014 = vunpack.c.l.b16 %v1808
        %v2015 = vunpack.c.h.b16 %v1808
        %v2016 = vunpack.c.l.b16 %v1809
        %v2017 = vunpack.c.l.b16 %v1810
        %v2018 = vunpack.c.h.b16 %v1810
        %v2019 = vunpack.c.l.b16 %v1811
        %v2020 = vunpack.c.l.b16 %v1812
        %v2021 = vunpack.c.h.b16 %v1812
        %v2022 = vunpack.c.l.b16 %v1813
        %v2023 = vunpack.c.l.b16 %v1814
        %v2024 = vunpack.c.h.b16 %v1814
        %v2025 = vunpack.c.l.b16 %v1815
        %v2026 = vunpack.c.l.b16 %v1816
        %v2027 = vunpack.c.h.b16 %v1816
        %v2028 = vunpack.c.l.b16 %v1817
        %v2029 = vunpack.c.l.b16 %v1818
        %v2030 = vunpack.c.h.b16 %v1818
        %v2031 = vunpack.c.l.b16 %v1819
        %v2032 = vunpack.c.l.b16 %v1820
        %v2033 = vunpack.c.h.b16 %v1820
        %v2034 = vunpack.c.l.b16 %v1821
        %v2035 = vunpack.c.l.b16 %v1822
        %v2036 = vunpack.c.h.b16 %v1822
        %v2037 = vunpack.c.l.b16 %v1823
        %v2038 = vunpack.c.l.b16 %v1824
        %v2039 = vunpack.c.h.b16 %v1824
        %v2040 = vunpack.c.l.b16 %v1825
        %v2041 = vunpack.c.l.b16 %v1826
        %v2042 = vunpack.c.h.b16 %v1826
        %v2043 = vunpack.c.l.b16 %v1827
        %v2044 = vunpack.c.l.b16 %v1828
        %v2045 = vunpack.c.h.b16 %v1828
        %v2046 = vunpack.c.l.b16 %v1829
        %v2047 = vunpack.c.l.b16 %v1830
        %v2048 = vunpack.c.h.b16 %v1830
        %v2049 = vunpack.c.l.b16 %v1831
        %v2050 = vunpack.c.l.b16 %v1832
        %v2051 = vunpack.c.h.b16 %v1832
        %v2052 = vunpack.c.l.b16 %v1833
        %v2053 = vunpack.c.l.b16 %v1834
        %v2054 = vunpack.c.h.b16 %v1834
        %v2055 = vunpack.c.l.b16 %v1835
        %v2056 = vunpack.c.l.b16 %v1836
        %v2057 = vunpack.c.h.b16 %v1836
        %v2058 = vunpack.c.l.b16 %v1837
        %v2059 = vunpack.c.l.b16 %v1838
        %v2060 = vunpack.c.h.b16 %v1838
        %v2061 = vunpack.c.l.b16 %v1839
        %v2062 = vunpack.c.l.b16 %v1840
        %v2063 = vunpack.c.h.b16 %v1840
        %v2064 = vunpack.c.l.b16 %v1841
        %v2065 = vunpack.c.l.b16 %v1842
        %v2066 = vunpack.c.h.b16 %v1842
        %v2067 = vunpack.c.l.b16 %v1843
        %v2068 = vunpack.c.l.b16 %v1844
        %v2069 = vunpack.c.h.b16 %v1844
        %v2070 = vunpack.c.l.b16 %v1845
        %v2071 = vunpack.c.l.b16 %v1846
        %v2072 = vunpack.c.h.b16 %v1846
        %v2073 = vunpack.c.l.b16 %v1847
        %v2074 = vunpack.c.l.b16 %v1848
        %v2075 = vunpack.c.h.b16 %v1848
        %v2076 = vunpack.c.l.b16 %v1849
        %v2077 = vunpack.c.l.b16 %v1850
        %v2078 = vunpack.c.h.b16 %v1850
        %v2079 = vunpack.c.l.b16 %v1851
        %v2080 = vunpack.c.l.b16 %v1852
        %v2081 = vunpack.c.h.b16 %v1852
        %v2082 = vunpack.c.l.b16 %v1853
        %v2083 = vunpack.c.l.b16 %v1854
        %v2084 = vunpack.c.h.b16 %v1854
        %v2085 = vunpack.c.l.b16 %v1855
        %v2086 = vunpack.c.l.b16 %v1856
        %v2087 = vunpack.c.h.b16 %v1856
        %v2088 = vunpack.c.l.b16 %v1857
        %v2089 = vunpack.c.l.b16 %v1858
        %v2090 = vunpack.c.h.b16 %v1858
        %v2091 = vunpack.c.l.b16 %v1859
        %v2092 = vunpack.c.l.b16 %v1860
        %v2093 = vunpack.c.h.b16 %v1860
        %v2094 = vunpack.c.l.b16 %v1861
        %v2095 = vunpack.c.l.b16 %v1862
        %v2096 = vunpack.c.h.b16 %v1862
        %v2097 = vunpack.c.l.b16 %v1863
        %v2098 = vunpack.c.l.b16 %v1864
        %v2099 = vunpack.c.h.b16 %v1864
        %v2100 = vunpack.c.l.b16 %v1865
        %v2101 = vunpack.c.l.b16 %v1866
        %v2102 = vunpack.c.h.b16 %v1866
        %v2103 = vunpack.c.l.b16 %v1867
        %v2104 = vunpack.c.l.b16 %v1868
        %v2105 = vunpack.c.h.b16 %v1868
        %v2106 = vunpack.c.l.b16 %v1869
        %v2107 = vunpack.c.l.b16 %v1870
        %v2108 = vunpack.c.h.b16 %v1870
        %v2109 = vunpack.c.l.b16 %v1871
        %v2110 = vunpack.c.l.b16 %v1872
        %v2111 = vunpack.c.h.b16 %v1872
        %v2112 = vunpack.c.l.b16 %v1873
        %v2113 = vunpack.c.l.b16 %v1874
        %v2114 = vunpack.c.h.b16 %v1874
        %v2115 = vunpack.c.l.b16 %v1875
        %v2116 = vpack.c.b16 %v1975, %v1972
        %v2117 = vpack.c.b16 %v1976, %v1973
        %v2118 = vpack.c.b16 %v1977, %v1974
        %v2119 = vpack.c.b16 %v1981, %v1978
        %v2120 = vpack.c.b16 %v1982, %v1979
        %v2121 = vpack.c.b16 %v1983, %v1980
        %v2122 = vpack.c.b16 %v1987, %v1984
        %v2123 = vpack.c.b16 %v1988, %v1985
        %v2124 = vpack.c.b16 %v1989, %v1986
        %v2125 = vpack.c.b16 %v1993, %v1990
        %v2126 = vpack.c.b16 %v1994, %v1991
        %v2127 = vpack.c.b16 %v1995, %v1992
        %v2128 = vpack.c.b16 %v1999, %v1996
        %v2129 = vpack.c.b16 %v2000, %v1997
        %v2130 = vpack.c.b16 %v2001, %v1998
        %v2131 = vpack.c.b16 %v2005, %v2002
        %v2132 = vpack.c.b16 %v2006, %v2003
        %v2133 = vpack.c.b16 %v2007, %v2004
        %v2134 = vpack.c.b16 %v2011, %v2008
        %v2135 = vpack.c.b16 %v2012, %v2009
        %v2136 = vpack.c.b16 %v2013, %v2010
        %v2137 = vpack.c.b16 %v2017, %v2014
        %v2138 = vpack.c.b16 %v2018, %v2015
        %v2139 = vpack.c.b16 %v2019, %v2016
        %v2140 = vpack.c.b16 %v2023, %v2020
        %v2141 = vpack.c.b16 %v2024, %v2021
        %v2142 = vpack.c.b16 %v2025, %v2022
        %v2143 = vpack.c.b16 %v2029, %v2026
        %v2144 = vpack.c.b16 %v2030, %v2027
        %v2145 = vpack.c.b16 %v2031, %v2028
        %v2146 = vpack.c.b16 %v2035, %v2032
        %v2147 = vpack.c.b16 %v2036, %v2033
        %v2148 = vpack.c.b16 %v2037, %v2034
        %v2149 = vpack.c.b16 %v2041, %v2038
        %v2150 = vpack.c.b16 %v2042, %v2039
        %v2151 = vpack.c.b16 %v2043, %v2040
        %v2152 = vpack.c.b16 %v2047, %v2044
        %v2153 = vpack.c.b16 %v2048, %v2045
        %v2154 = vpack.c.b16 %v2049, %v2046
        %v2155 = vpack.c.b16 %v2053, %v2050
        %v2156 = vpack.c.b16 %v2054, %v2051
        %v2157 = vpack.c.b16 %v2055, %v2052
        %v2158 = vpack.c.b16 %v2059, %v2056
        %v2159 = vpack.c.b16 %v2060, %v2057
        %v2160 = vpack.c.b16 %v2061, %v2058
        %v2161 = vpack.c.b16 %v2065, %v2062
        %v2162 = vpack.c.b16 %v2066, %v2063
        %v2163 = vpack.c.b16 %v2067, %v2064
        %v2164 = vpack.c.b16 %v2071, %v2068
        %v2165 = vpack.c.b16 %v2072, %v2069
        %v2166 = vpack.c.b16 %v2073, %v2070
        %v2167 = vpack.c.b16 %v2077, %v2074
        %v2168 = vpack.c.b16 %v2078, %v2075
        %v2169 = vpack.c.b16 %v2079, %v2076
        %v2170 = vpack.c.b16 %v2083, %v2080
        %v2171 = vpack.c.b16 %v2084, %v2081
        %v2172 = vpack.c.b16 %v2085, %v2082
        %v2173 = vpack.c.b16 %v2089, %v2086
        %v2174 = vpack.c.b16 %v2090, %v2087
        %v2175 = vpack.c.b16 %v2091, %v2088
        %v2176 = vpack.c.b16 %v2095, %v2092
        %v2177 = vpack.c.b16 %v2096, %v2093
        %v2178 = vpack.c.b16 %v2097, %v2094
        %v2179 = vpack.c.b16 %v2101, %v2098
        %v2180 = vpack.c.b16 %v2102, %v2099
        %v2181 = vpack.c.b16 %v2103, %v2100
        %v2182 = vpack.c.b16 %v2107, %v2104
        %v2183 = vpack.c.b16 %v2108, %v2105
        %v2184 = vpack.c.b16 %v2109, %v2106
        %v2185 = vpack.c.b16 %v2113, %v2110
        %v2186 = vpack.c.b16 %v2114, %v2111
        %v2187 = vpack.c.b16 %v2115, %v2112
        %2260 = vmatpush.bf16.msra.mxu0 %v2137
        %2261 = vmatpush.bf16.msra.mxu0 %v2134
        %2262 = vmatpush.bf16.msra.mxu0 %v2131
        %2263 = vmatpush.bf16.msra.mxu0 %v2128
        %2264 = vmatpush.bf16.msra.mxu0 %v2125
        %2265 = vmatpush.bf16.msra.mxu0 %v2122
        %2266 = vmatpush.bf16.msra.mxu0 %v2119
        %2267 = vmatpush.bf16.msra.mxu0 %v2116
        %2268 = vmatmul.bf16.gmra.mxu0 %v1444
        %v2269 = vpop.f32.mrf.mxu0
        %v2270 = vadd.f32 0.0, %v2269
        %v2271 = vpop.f32.mrf.mxu0
        %v2272 = vadd.f32 0.0, %v2271
        %2273 = vmatmul.bf16.gmra.mxu0 %v1445
        %v2274 = vpop.f32.mrf.mxu0
        %v2275 = vpop.f32.mrf.mxu0
        %v2276 = vadd.f32 0.0, %v2275
        %2277 = vmatmul.bf16.gmra.mxu0 %v1446
        %v2278 = vpop.f32.mrf.mxu0
        %v2279 = vadd.f32 0.0, %v2278
        %v2280 = vpop.f32.mrf.mxu0
        %2281 = vmatmul.bf16.gmra.mxu0 %v1447
        %v2282 = vpop.f32.mrf.mxu0
        %v2283 = vadd.f32 0.0, %v2282
        %v2284 = vpop.f32.mrf.mxu0
        %v2285 = vadd.f32 0.0, %v2284
        %2286 = vmatmul.bf16.gmra.mxu0 %v1448
        %v2287 = vpop.f32.mrf.mxu0
        %v2288 = vpop.f32.mrf.mxu0
        %v2289 = vadd.f32 0.0, %v2288
        %2290 = vmatmul.bf16.gmra.mxu0 %v1449
        %v2291 = vpop.f32.mrf.mxu0
        %v2292 = vadd.f32 0.0, %v2291
        %v2293 = vpop.f32.mrf.mxu0
        %2294 = vmatmul.bf16.gmra.mxu0 %v1450
        %v2295 = vpop.f32.mrf.mxu0
        %v2296 = vadd.f32 0.0, %v2295
        %v2297 = vpop.f32.mrf.mxu0
        %v2298 = vadd.f32 0.0, %v2297
        %2299 = vmatmul.bf16.gmra.mxu0 %v1451
        %v2300 = vpop.f32.mrf.mxu0
        %v2301 = vpop.f32.mrf.mxu0
        %v2302 = vadd.f32 0.0, %v2301
        %2303 = vmatmul.bf16.gmra.mxu0 %v1452
        %v2304 = vpop.f32.mrf.mxu0
        %v2305 = vadd.f32 0.0, %v2304
        %v2306 = vpop.f32.mrf.mxu0
        %2307 = vmatmul.bf16.gmra.mxu0 %v1453
        %v2308 = vpop.f32.mrf.mxu0
        %v2309 = vadd.f32 0.0, %v2308
        %v2310 = vpop.f32.mrf.mxu0
        %v2311 = vadd.f32 0.0, %v2310
        %2312 = vmatmul.bf16.gmra.mxu0 %v1454
        %v2313 = vpop.f32.mrf.mxu0
        %v2314 = vpop.f32.mrf.mxu0
        %v2315 = vadd.f32 0.0, %v2314
        %2316 = vmatmul.bf16.gmra.mxu0 %v1455
        %v2317 = vpop.f32.mrf.mxu0
        %v2318 = vadd.f32 0.0, %v2317
        %v2319 = vpop.f32.mrf.mxu0
        %2320 = vmatmul.bf16.gmra.mxu0 %v1456
        %v2321 = vpop.f32.mrf.mxu0
        %v2322 = vadd.f32 0.0, %v2321
        %v2323 = vpop.f32.mrf.mxu0
        %v2324 = vadd.f32 0.0, %v2323
        %2325 = vmatmul.bf16.gmra.mxu0 %v1457
        %v2326 = vpop.f32.mrf.mxu0
        %v2327 = vpop.f32.mrf.mxu0
        %v2328 = vadd.f32 0.0, %v2327
        %2329 = vmatmul.bf16.gmra.mxu0 %v1458
        %v2330 = vpop.f32.mrf.mxu0
        %v2331 = vadd.f32 0.0, %v2330
        %v2332 = vpop.f32.mrf.mxu0
        %2333 = vmatmul.bf16.gmra.mxu0 %v1459
        %v2334 = vpop.f32.mrf.mxu0
        %v2335 = vadd.f32 0.0, %v2334
        %v2336 = vpop.f32.mrf.mxu0
        %v2337 = vadd.f32 0.0, %v2336
        %2338 = vmatmul.bf16.gmra.mxu0 %v1460
        %v2339 = vpop.f32.mrf.mxu0
        %v2340 = vpop.f32.mrf.mxu0
        %v2341 = vadd.f32 0.0, %v2340
        %2342 = vmatmul.bf16.gmra.mxu0 %v1461
        %v2343 = vpop.f32.mrf.mxu0
        %v2344 = vadd.f32 0.0, %v2343
        %v2345 = vpop.f32.mrf.mxu0
        %2346 = vmatmul.bf16.gmra.mxu0 %v1462
        %v2347 = vpop.f32.mrf.mxu0
        %v2348 = vadd.f32 0.0, %v2347
        %v2349 = vpop.f32.mrf.mxu0
        %v2350 = vadd.f32 0.0, %v2349
        %2351 = vmatmul.bf16.gmra.mxu0 %v1463
        %v2352 = vpop.f32.mrf.mxu0
        %v2353 = vpop.f32.mrf.mxu0
        %v2354 = vadd.f32 0.0, %v2353
        %2355 = vmatmul.bf16.gmra.mxu0 %v1464
        %v2356 = vpop.f32.mrf.mxu0
        %v2357 = vadd.f32 0.0, %v2356
        %v2358 = vpop.f32.mrf.mxu0
        %2359 = vmatmul.bf16.gmra.mxu0 %v1465
        %v2360 = vpop.f32.mrf.mxu0
        %v2361 = vadd.f32 0.0, %v2360
        %v2362 = vpop.f32.mrf.mxu0
        %v2363 = vadd.f32 0.0, %v2362
        %2364 = vmatmul.bf16.gmra.mxu0 %v1466
        %v2365 = vpop.f32.mrf.mxu0
        %v2366 = vpop.f32.mrf.mxu0
        %v2367 = vadd.f32 0.0, %v2366
        %2368 = vmatmul.bf16.gmra.mxu0 %v1467
        %v2369 = vpop.f32.mrf.mxu0
        %v2370 = vadd.f32 0.0, %v2369
        %v2371 = vpop.f32.mrf.mxu0
        %2372 = vdwg.mxu0
        %2373 = vmatpush.bf16.msra.mxu0 %v2161
        %2374 = vmatpush.bf16.msra.mxu0 %v2158
        %2375 = vmatpush.bf16.msra.mxu0 %v2155
        %2376 = vmatpush.bf16.msra.mxu0 %v2152
        %2377 = vmatpush.bf16.msra.mxu0 %v2149
        %2378 = vmatpush.bf16.msra.mxu0 %v2146
        %2379 = vmatpush.bf16.msra.mxu0 %v2143
        %2380 = vmatpush.bf16.msra.mxu0 %v2140
        %2381 = vmatmul.bf16.gmra.mxu0 %v1588
        %v2382 = vpop.f32.mrf.mxu0
        %v2383 = vadd.f32 %v2270, %v2382
        %v2384 = vpop.f32.mrf.mxu0
        %v2385 = vadd.f32 %v2272, %v2384
        %2386 = vmatmul.bf16.gmra.mxu0 %v1589
        %v2387 = vpop.f32.mrf.mxu0
        %v2388 = vpop.f32.mrf.mxu0
        %v2389 = vadd.f32 %v2276, %v2388
        %2390 = vmatmul.bf16.gmra.mxu0 %v1590
        %v2391 = vpop.f32.mrf.mxu0
        %v2392 = vadd.f32 %v2279, %v2391
        %v2393 = vpop.f32.mrf.mxu0
        %2394 = vmatmul.bf16.gmra.mxu0 %v1591
        %v2395 = vpop.f32.mrf.mxu0
        %v2396 = vadd.f32 %v2283, %v2395
        %v2397 = vpop.f32.mrf.mxu0
        %v2398 = vadd.f32 %v2285, %v2397
        %2399 = vmatmul.bf16.gmra.mxu0 %v1592
        %v2400 = vpop.f32.mrf.mxu0
        %v2401 = vpop.f32.mrf.mxu0
        %v2402 = vadd.f32 %v2289, %v2401
        %2403 = vmatmul.bf16.gmra.mxu0 %v1593
        %v2404 = vpop.f32.mrf.mxu0
        %v2405 = vadd.f32 %v2292, %v2404
        %v2406 = vpop.f32.mrf.mxu0
        %2407 = vmatmul.bf16.gmra.mxu0 %v1594
        %v2408 = vpop.f32.mrf.mxu0
        %v2409 = vadd.f32 %v2296, %v2408
        %v2410 = vpop.f32.mrf.mxu0
        %v2411 = vadd.f32 %v2298, %v2410
        %2412 = vmatmul.bf16.gmra.mxu0 %v1595
        %v2413 = vpop.f32.mrf.mxu0
        %v2414 = vpop.f32.mrf.mxu0
        %v2415 = vadd.f32 %v2302, %v2414
        %2416 = vmatmul.bf16.gmra.mxu0 %v1596
        %v2417 = vpop.f32.mrf.mxu0
        %v2418 = vadd.f32 %v2305, %v2417
        %v2419 = vpop.f32.mrf.mxu0
        %2420 = vmatmul.bf16.gmra.mxu0 %v1597
        %v2421 = vpop.f32.mrf.mxu0
        %v2422 = vadd.f32 %v2309, %v2421
        %v2423 = vpop.f32.mrf.mxu0
        %v2424 = vadd.f32 %v2311, %v2423
        %2425 = vmatmul.bf16.gmra.mxu0 %v1598
        %v2426 = vpop.f32.mrf.mxu0
        %v2427 = vpop.f32.mrf.mxu0
        %v2428 = vadd.f32 %v2315, %v2427
        %2429 = vmatmul.bf16.gmra.mxu0 %v1599
        %v2430 = vpop.f32.mrf.mxu0
        %v2431 = vadd.f32 %v2318, %v2430
        %v2432 = vpop.f32.mrf.mxu0
        %2433 = vmatmul.bf16.gmra.mxu0 %v1600
        %v2434 = vpop.f32.mrf.mxu0
        %v2435 = vadd.f32 %v2322, %v2434
        %v2436 = vpop.f32.mrf.mxu0
        %v2437 = vadd.f32 %v2324, %v2436
        %2438 = vmatmul.bf16.gmra.mxu0 %v1601
        %v2439 = vpop.f32.mrf.mxu0
        %v2440 = vpop.f32.mrf.mxu0
        %v2441 = vadd.f32 %v2328, %v2440
        %2442 = vmatmul.bf16.gmra.mxu0 %v1602
        %v2443 = vpop.f32.mrf.mxu0
        %v2444 = vadd.f32 %v2331, %v2443
        %v2445 = vpop.f32.mrf.mxu0
        %2446 = vmatmul.bf16.gmra.mxu0 %v1603
        %v2447 = vpop.f32.mrf.mxu0
        %v2448 = vadd.f32 %v2335, %v2447
        %v2449 = vpop.f32.mrf.mxu0
        %v2450 = vadd.f32 %v2337, %v2449
        %2451 = vmatmul.bf16.gmra.mxu0 %v1604
        %v2452 = vpop.f32.mrf.mxu0
        %v2453 = vpop.f32.mrf.mxu0
        %v2454 = vadd.f32 %v2341, %v2453
        %2455 = vmatmul.bf16.gmra.mxu0 %v1605
        %v2456 = vpop.f32.mrf.mxu0
        %v2457 = vadd.f32 %v2344, %v2456
        %v2458 = vpop.f32.mrf.mxu0
        %2459 = vmatmul.bf16.gmra.mxu0 %v1606
        %v2460 = vpop.f32.mrf.mxu0
        %v2461 = vadd.f32 %v2348, %v2460
        %v2462 = vpop.f32.mrf.mxu0
        %v2463 = vadd.f32 %v2350, %v2462
        %2464 = vmatmul.bf16.gmra.mxu0 %v1607
        %v2465 = vpop.f32.mrf.mxu0
        %v2466 = vpop.f32.mrf.mxu0
        %v2467 = vadd.f32 %v2354, %v2466
        %2468 = vmatmul.bf16.gmra.mxu0 %v1608
        %v2469 = vpop.f32.mrf.mxu0
        %v2470 = vadd.f32 %v2357, %v2469
        %v2471 = vpop.f32.mrf.mxu0
        %2472 = vmatmul.bf16.gmra.mxu0 %v1609
        %v2473 = vpop.f32.mrf.mxu0
        %v2474 = vadd.f32 %v2361, %v2473
        %v2475 = vpop.f32.mrf.mxu0
        %v2476 = vadd.f32 %v2363, %v2475
        %2477 = vmatmul.bf16.gmra.mxu0 %v1610
        %v2478 = vpop.f32.mrf.mxu0
        %v2479 = vpop.f32.mrf.mxu0
        %v2480 = vadd.f32 %v2367, %v2479
        %2481 = vmatmul.bf16.gmra.mxu0 %v1611
        %v2482 = vpop.f32.mrf.mxu0
        %v2483 = vadd.f32 %v2370, %v2482
        %v2484 = vpop.f32.mrf.mxu0
        %2485 = vdwg.mxu0
        %2486 = vmatpush.bf16.msra.mxu0 %v2185
        %2487 = vmatpush.bf16.msra.mxu0 %v2182
        %2488 = vmatpush.bf16.msra.mxu0 %v2179
        %2489 = vmatpush.bf16.msra.mxu0 %v2176
        %2490 = vmatpush.bf16.msra.mxu0 %v2173
        %2491 = vmatpush.bf16.msra.mxu0 %v2170
        %2492 = vmatpush.bf16.msra.mxu0 %v2167
        %2493 = vmatpush.bf16.msra.mxu0 %v2164
        %2494 = vmatmul.bf16.gmra.mxu0 %v1732
        %v2495 = vpop.f32.mrf.mxu0
        %v2496 = vadd.f32 %v2383, %v2495
        %v2497 = vpop.f32.mrf.mxu0
        %v2498 = vadd.f32 %v2385, %v2497
        %2499 = vmatmul.bf16.gmra.mxu0 %v1733
        %v2500 = vpop.f32.mrf.mxu0
        %v2501 = vpop.f32.mrf.mxu0
        %v2502 = vadd.f32 %v2389, %v2501
        %2503 = vmatmul.bf16.gmra.mxu0 %v1734
        %v2504 = vpop.f32.mrf.mxu0
        %v2505 = vadd.f32 %v2392, %v2504
        %v2506 = vpop.f32.mrf.mxu0
        %2507 = vmatmul.bf16.gmra.mxu0 %v1735
        %v2508 = vpop.f32.mrf.mxu0
        %v2509 = vadd.f32 %v2396, %v2508
        %v2510 = vpop.f32.mrf.mxu0
        %v2511 = vadd.f32 %v2398, %v2510
        %2512 = vmatmul.bf16.gmra.mxu0 %v1736
        %v2513 = vpop.f32.mrf.mxu0
        %v2514 = vpop.f32.mrf.mxu0
        %v2515 = vadd.f32 %v2402, %v2514
        %2516 = vmatmul.bf16.gmra.mxu0 %v1737
        %v2517 = vpop.f32.mrf.mxu0
        %v2518 = vadd.f32 %v2405, %v2517
        %v2519 = vpop.f32.mrf.mxu0
        %2520 = vmatmul.bf16.gmra.mxu0 %v1738
        %v2521 = vpop.f32.mrf.mxu0
        %v2522 = vadd.f32 %v2409, %v2521
        %v2523 = vpop.f32.mrf.mxu0
        %v2524 = vadd.f32 %v2411, %v2523
        %2525 = vmatmul.bf16.gmra.mxu0 %v1739
        %v2526 = vpop.f32.mrf.mxu0
        %v2527 = vpop.f32.mrf.mxu0
        %v2528 = vadd.f32 %v2415, %v2527
        %2529 = vmatmul.bf16.gmra.mxu0 %v1740
        %v2530 = vpop.f32.mrf.mxu0
        %v2531 = vadd.f32 %v2418, %v2530
        %v2532 = vpop.f32.mrf.mxu0
        %2533 = vmatmul.bf16.gmra.mxu0 %v1741
        %v2534 = vpop.f32.mrf.mxu0
        %v2535 = vadd.f32 %v2422, %v2534
        %v2536 = vpop.f32.mrf.mxu0
        %v2537 = vadd.f32 %v2424, %v2536
        %2538 = vmatmul.bf16.gmra.mxu0 %v1742
        %v2539 = vpop.f32.mrf.mxu0
        %v2540 = vpop.f32.mrf.mxu0
        %v2541 = vadd.f32 %v2428, %v2540
        %2542 = vmatmul.bf16.gmra.mxu0 %v1743
        %v2543 = vpop.f32.mrf.mxu0
        %v2544 = vadd.f32 %v2431, %v2543
        %v2545 = vpop.f32.mrf.mxu0
        %2546 = vmatmul.bf16.gmra.mxu0 %v1744
        %v2547 = vpop.f32.mrf.mxu0
        %v2548 = vadd.f32 %v2435, %v2547
        %v2549 = vpop.f32.mrf.mxu0
        %v2550 = vadd.f32 %v2437, %v2549
        %2551 = vmatmul.bf16.gmra.mxu0 %v1745
        %v2552 = vpop.f32.mrf.mxu0
        %v2553 = vpop.f32.mrf.mxu0
        %v2554 = vadd.f32 %v2441, %v2553
        %2555 = vmatmul.bf16.gmra.mxu0 %v1746
        %v2556 = vpop.f32.mrf.mxu0
        %v2557 = vadd.f32 %v2444, %v2556
        %v2558 = vpop.f32.mrf.mxu0
        %2559 = vmatmul.bf16.gmra.mxu0 %v1747
        %v2560 = vpop.f32.mrf.mxu0
        %v2561 = vadd.f32 %v2448, %v2560
        %v2562 = vpop.f32.mrf.mxu0
        %v2563 = vadd.f32 %v2450, %v2562
        %2564 = vmatmul.bf16.gmra.mxu0 %v1748
        %v2565 = vpop.f32.mrf.mxu0
        %v2566 = vpop.f32.mrf.mxu0
        %v2567 = vadd.f32 %v2454, %v2566
        %2568 = vmatmul.bf16.gmra.mxu0 %v1749
        %v2569 = vpop.f32.mrf.mxu0
        %v2570 = vadd.f32 %v2457, %v2569
        %v2571 = vpop.f32.mrf.mxu0
        %2572 = vmatmul.bf16.gmra.mxu0 %v1750
        %v2573 = vpop.f32.mrf.mxu0
        %v2574 = vadd.f32 %v2461, %v2573
        %v2575 = vpop.f32.mrf.mxu0
        %v2576 = vadd.f32 %v2463, %v2575
        %2577 = vmatmul.bf16.gmra.mxu0 %v1751
        %v2578 = vpop.f32.mrf.mxu0
        %v2579 = vpop.f32.mrf.mxu0
        %v2580 = vadd.f32 %v2467, %v2579
        %2581 = vmatmul.bf16.gmra.mxu0 %v1752
        %v2582 = vpop.f32.mrf.mxu0
        %v2583 = vadd.f32 %v2470, %v2582
        %v2584 = vpop.f32.mrf.mxu0
        %2585 = vmatmul.bf16.gmra.mxu0 %v1753
        %v2586 = vpop.f32.mrf.mxu0
        %v2587 = vadd.f32 %v2474, %v2586
        %v2588 = vpop.f32.mrf.mxu0
        %v2589 = vadd.f32 %v2476, %v2588
        %2590 = vmatmul.bf16.gmra.mxu0 %v1754
        %v2591 = vpop.f32.mrf.mxu0
        %v2592 = vpop.f32.mrf.mxu0
        %v2593 = vadd.f32 %v2480, %v2592
        %2594 = vmatmul.bf16.gmra.mxu0 %v1755
        %v2595 = vpop.f32.mrf.mxu0
        %v2596 = vadd.f32 %v2483, %v2595
        %v2597 = vpop.f32.mrf.mxu0
        %2598 = vdwg.mxu0
        %2599 = vmatpush.bf16.msra.mxu0 %v2138
        %2600 = vmatpush.bf16.msra.mxu0 %v2135
        %2601 = vmatpush.bf16.msra.mxu0 %v2132
        %2602 = vmatpush.bf16.msra.mxu0 %v2129
        %2603 = vmatpush.bf16.msra.mxu0 %v2126
        %2604 = vmatpush.bf16.msra.mxu0 %v2123
        %2605 = vmatpush.bf16.msra.mxu0 %v2120
        %2606 = vmatpush.bf16.msra.mxu0 %v2117
        %2607 = vmatmul.bf16.gmra.mxu0 %v1444
        %v2608 = vpop.f32.mrf.mxu0
        %v2609 = vadd.f32 0.0, %v2608
        %v2610 = vpop.f32.mrf.mxu0
        %v2611 = vadd.f32 0.0, %v2610
        %2612 = vmatmul.bf16.gmra.mxu0 %v1445
        %v2613 = vpop.f32.mrf.mxu0
        %v2614 = vadd.f32 0.0, %v2613
        %v2615 = vpop.f32.mrf.mxu0
        %v2616 = vadd.f32 0.0, %v2615
        %2617 = vmatmul.bf16.gmra.mxu0 %v1446
        %v2618 = vpop.f32.mrf.mxu0
        %v2619 = vadd.f32 0.0, %v2618
        %v2620 = vpop.f32.mrf.mxu0
        %v2621 = vadd.f32 0.0, %v2620
        %2622 = vmatmul.bf16.gmra.mxu0 %v1447
        %v2623 = vpop.f32.mrf.mxu0
        %v2624 = vadd.f32 0.0, %v2623
        %v2625 = vpop.f32.mrf.mxu0
        %v2626 = vadd.f32 0.0, %v2625
        %2627 = vmatmul.bf16.gmra.mxu0 %v1448
        %v2628 = vpop.f32.mrf.mxu0
        %v2629 = vadd.f32 0.0, %v2628
        %v2630 = vpop.f32.mrf.mxu0
        %v2631 = vadd.f32 0.0, %v2630
        %2632 = vmatmul.bf16.gmra.mxu0 %v1449
        %v2633 = vpop.f32.mrf.mxu0
        %v2634 = vadd.f32 0.0, %v2633
        %v2635 = vpop.f32.mrf.mxu0
        %v2636 = vadd.f32 0.0, %v2635
        %2637 = vmatmul.bf16.gmra.mxu0 %v1450
        %v2638 = vpop.f32.mrf.mxu0
        %v2639 = vadd.f32 0.0, %v2638
        %v2640 = vpop.f32.mrf.mxu0
        %v2641 = vadd.f32 0.0, %v2640
        %2642 = vmatmul.bf16.gmra.mxu0 %v1451
        %v2643 = vpop.f32.mrf.mxu0
        %v2644 = vadd.f32 0.0, %v2643
        %v2645 = vpop.f32.mrf.mxu0
        %v2646 = vadd.f32 0.0, %v2645
        %2647 = vmatmul.bf16.gmra.mxu0 %v1452
        %v2648 = vpop.f32.mrf.mxu0
        %v2649 = vadd.f32 0.0, %v2648
        %v2650 = vpop.f32.mrf.mxu0
        %v2651 = vadd.f32 0.0, %v2650
        %2652 = vmatmul.bf16.gmra.mxu0 %v1453
        %v2653 = vpop.f32.mrf.mxu0
        %v2654 = vadd.f32 0.0, %v2653
        %v2655 = vpop.f32.mrf.mxu0
        %v2656 = vadd.f32 0.0, %v2655
        %2657 = vmatmul.bf16.gmra.mxu0 %v1454
        %v2658 = vpop.f32.mrf.mxu0
        %v2659 = vadd.f32 0.0, %v2658
        %v2660 = vpop.f32.mrf.mxu0
        %v2661 = vadd.f32 0.0, %v2660
        %2662 = vmatmul.bf16.gmra.mxu0 %v1455
        %v2663 = vpop.f32.mrf.mxu0
        %v2664 = vadd.f32 0.0, %v2663
        %v2665 = vpop.f32.mrf.mxu0
        %v2666 = vadd.f32 0.0, %v2665
        %2667 = vmatmul.bf16.gmra.mxu0 %v1456
        %v2668 = vpop.f32.mrf.mxu0
        %v2669 = vadd.f32 0.0, %v2668
        %v2670 = vpop.f32.mrf.mxu0
        %v2671 = vadd.f32 0.0, %v2670
        %2672 = vmatmul.bf16.gmra.mxu0 %v1457
        %v2673 = vpop.f32.mrf.mxu0
        %v2674 = vadd.f32 0.0, %v2673
        %v2675 = vpop.f32.mrf.mxu0
        %v2676 = vadd.f32 0.0, %v2675
        %2677 = vmatmul.bf16.gmra.mxu0 %v1458
        %v2678 = vpop.f32.mrf.mxu0
        %v2679 = vadd.f32 0.0, %v2678
        %v2680 = vpop.f32.mrf.mxu0
        %v2681 = vadd.f32 0.0, %v2680
        %2682 = vmatmul.bf16.gmra.mxu0 %v1459
        %v2683 = vpop.f32.mrf.mxu0
        %v2684 = vadd.f32 0.0, %v2683
        %v2685 = vpop.f32.mrf.mxu0
        %v2686 = vadd.f32 0.0, %v2685
        %2687 = vmatmul.bf16.gmra.mxu0 %v1460
        %v2688 = vpop.f32.mrf.mxu0
        %v2689 = vadd.f32 0.0, %v2688
        %v2690 = vpop.f32.mrf.mxu0
        %v2691 = vadd.f32 0.0, %v2690
        %2692 = vmatmul.bf16.gmra.mxu0 %v1461
        %v2693 = vpop.f32.mrf.mxu0
        %v2694 = vadd.f32 0.0, %v2693
        %v2695 = vpop.f32.mrf.mxu0
        %v2696 = vadd.f32 0.0, %v2695
        %2697 = vmatmul.bf16.gmra.mxu0 %v1462
        %v2698 = vpop.f32.mrf.mxu0
        %v2699 = vadd.f32 0.0, %v2698
        %v2700 = vpop.f32.mrf.mxu0
        %v2701 = vadd.f32 0.0, %v2700
        %2702 = vmatmul.bf16.gmra.mxu0 %v1463
        %v2703 = vpop.f32.mrf.mxu0
        %v2704 = vadd.f32 0.0, %v2703
        %v2705 = vpop.f32.mrf.mxu0
        %v2706 = vadd.f32 0.0, %v2705
        %2707 = vmatmul.bf16.gmra.mxu0 %v1464
        %v2708 = vpop.f32.mrf.mxu0
        %v2709 = vadd.f32 0.0, %v2708
        %v2710 = vpop.f32.mrf.mxu0
        %v2711 = vadd.f32 0.0, %v2710
        %2712 = vmatmul.bf16.gmra.mxu0 %v1465
        %v2713 = vpop.f32.mrf.mxu0
        %v2714 = vadd.f32 0.0, %v2713
        %v2715 = vpop.f32.mrf.mxu0
        %v2716 = vadd.f32 0.0, %v2715
        %2717 = vmatmul.bf16.gmra.mxu0 %v1466
        %v2718 = vpop.f32.mrf.mxu0
        %v2719 = vadd.f32 0.0, %v2718
        %v2720 = vpop.f32.mrf.mxu0
        %v2721 = vadd.f32 0.0, %v2720
        %2722 = vmatmul.bf16.gmra.mxu0 %v1467
        %v2723 = vpop.f32.mrf.mxu0
        %v2724 = vadd.f32 0.0, %v2723
        %v2725 = vpop.f32.mrf.mxu0
        %v2726 = vadd.f32 0.0, %v2725
        %2727 = vdwg.mxu0
        %2728 = vmatpush.bf16.msra.mxu0 %v2162
        %2729 = vmatpush.bf16.msra.mxu0 %v2159
        %2730 = vmatpush.bf16.msra.mxu0 %v2156
        %2731 = vmatpush.bf16.msra.mxu0 %v2153
        %2732 = vmatpush.bf16.msra.mxu0 %v2150
        %2733 = vmatpush.bf16.msra.mxu0 %v2147
        %2734 = vmatpush.bf16.msra.mxu0 %v2144
        %2735 = vmatpush.bf16.msra.mxu0 %v2141
        %2736 = vmatmul.bf16.gmra.mxu0 %v1588
        %v2737 = vpop.f32.mrf.mxu0
        %v2738 = vadd.f32 %v2609, %v2737
        %v2739 = vpop.f32.mrf.mxu0
        %v2740 = vadd.f32 %v2611, %v2739
        %2741 = vmatmul.bf16.gmra.mxu0 %v1589
        %v2742 = vpop.f32.mrf.mxu0
        %v2743 = vadd.f32 %v2614, %v2742
        %v2744 = vpop.f32.mrf.mxu0
        %v2745 = vadd.f32 %v2616, %v2744
        %2746 = vmatmul.bf16.gmra.mxu0 %v1590
        %v2747 = vpop.f32.mrf.mxu0
        %v2748 = vadd.f32 %v2619, %v2747
        %v2749 = vpop.f32.mrf.mxu0
        %v2750 = vadd.f32 %v2621, %v2749
        %2751 = vmatmul.bf16.gmra.mxu0 %v1591
        %v2752 = vpop.f32.mrf.mxu0
        %v2753 = vadd.f32 %v2624, %v2752
        %v2754 = vpop.f32.mrf.mxu0
        %v2755 = vadd.f32 %v2626, %v2754
        %2756 = vmatmul.bf16.gmra.mxu0 %v1592
        %v2757 = vpop.f32.mrf.mxu0
        %v2758 = vadd.f32 %v2629, %v2757
        %v2759 = vpop.f32.mrf.mxu0
        %v2760 = vadd.f32 %v2631, %v2759
        %2761 = vmatmul.bf16.gmra.mxu0 %v1593
        %v2762 = vpop.f32.mrf.mxu0
        %v2763 = vadd.f32 %v2634, %v2762
        %v2764 = vpop.f32.mrf.mxu0
        %v2765 = vadd.f32 %v2636, %v2764
        %2766 = vmatmul.bf16.gmra.mxu0 %v1594
        %v2767 = vpop.f32.mrf.mxu0
        %v2768 = vadd.f32 %v2639, %v2767
        %v2769 = vpop.f32.mrf.mxu0
        %v2770 = vadd.f32 %v2641, %v2769
        %2771 = vmatmul.bf16.gmra.mxu0 %v1595
        %v2772 = vpop.f32.mrf.mxu0
        %v2773 = vadd.f32 %v2644, %v2772
        %v2774 = vpop.f32.mrf.mxu0
        %v2775 = vadd.f32 %v2646, %v2774
        %2776 = vmatmul.bf16.gmra.mxu0 %v1596
        %v2777 = vpop.f32.mrf.mxu0
        %v2778 = vadd.f32 %v2649, %v2777
        %v2779 = vpop.f32.mrf.mxu0
        %v2780 = vadd.f32 %v2651, %v2779
        %2781 = vmatmul.bf16.gmra.mxu0 %v1597
        %v2782 = vpop.f32.mrf.mxu0
        %v2783 = vadd.f32 %v2654, %v2782
        %v2784 = vpop.f32.mrf.mxu0
        %v2785 = vadd.f32 %v2656, %v2784
        %2786 = vmatmul.bf16.gmra.mxu0 %v1598
        %v2787 = vpop.f32.mrf.mxu0
        %v2788 = vadd.f32 %v2659, %v2787
        %v2789 = vpop.f32.mrf.mxu0
        %v2790 = vadd.f32 %v2661, %v2789
        %2791 = vmatmul.bf16.gmra.mxu0 %v1599
        %v2792 = vpop.f32.mrf.mxu0
        %v2793 = vadd.f32 %v2664, %v2792
        %v2794 = vpop.f32.mrf.mxu0
        %v2795 = vadd.f32 %v2666, %v2794
        %2796 = vmatmul.bf16.gmra.mxu0 %v1600
        %v2797 = vpop.f32.mrf.mxu0
        %v2798 = vadd.f32 %v2669, %v2797
        %v2799 = vpop.f32.mrf.mxu0
        %v2800 = vadd.f32 %v2671, %v2799
        %2801 = vmatmul.bf16.gmra.mxu0 %v1601
        %v2802 = vpop.f32.mrf.mxu0
        %v2803 = vadd.f32 %v2674, %v2802
        %v2804 = vpop.f32.mrf.mxu0
        %v2805 = vadd.f32 %v2676, %v2804
        %2806 = vmatmul.bf16.gmra.mxu0 %v1602
        %v2807 = vpop.f32.mrf.mxu0
        %v2808 = vadd.f32 %v2679, %v2807
        %v2809 = vpop.f32.mrf.mxu0
        %v2810 = vadd.f32 %v2681, %v2809
        %2811 = vmatmul.bf16.gmra.mxu0 %v1603
        %v2812 = vpop.f32.mrf.mxu0
        %v2813 = vadd.f32 %v2684, %v2812
        %v2814 = vpop.f32.mrf.mxu0
        %v2815 = vadd.f32 %v2686, %v2814
        %2816 = vmatmul.bf16.gmra.mxu0 %v1604
        %v2817 = vpop.f32.mrf.mxu0
        %v2818 = vadd.f32 %v2689, %v2817
        %v2819 = vpop.f32.mrf.mxu0
        %v2820 = vadd.f32 %v2691, %v2819
        %2821 = vmatmul.bf16.gmra.mxu0 %v1605
        %v2822 = vpop.f32.mrf.mxu0
        %v2823 = vadd.f32 %v2694, %v2822
        %v2824 = vpop.f32.mrf.mxu0
        %v2825 = vadd.f32 %v2696, %v2824
        %2826 = vmatmul.bf16.gmra.mxu0 %v1606
        %v2827 = vpop.f32.mrf.mxu0
        %v2828 = vadd.f32 %v2699, %v2827
        %v2829 = vpop.f32.mrf.mxu0
        %v2830 = vadd.f32 %v2701, %v2829
        %2831 = vmatmul.bf16.gmra.mxu0 %v1607
        %v2832 = vpop.f32.mrf.mxu0
        %v2833 = vadd.f32 %v2704, %v2832
        %v2834 = vpop.f32.mrf.mxu0
        %v2835 = vadd.f32 %v2706, %v2834
        %2836 = vmatmul.bf16.gmra.mxu0 %v1608
        %v2837 = vpop.f32.mrf.mxu0
        %v2838 = vadd.f32 %v2709, %v2837
        %v2839 = vpop.f32.mrf.mxu0
        %v2840 = vadd.f32 %v2711, %v2839
        %2841 = vmatmul.bf16.gmra.mxu0 %v1609
        %v2842 = vpop.f32.mrf.mxu0
        %v2843 = vadd.f32 %v2714, %v2842
        %v2844 = vpop.f32.mrf.mxu0
        %v2845 = vadd.f32 %v2716, %v2844
        %2846 = vmatmul.bf16.gmra.mxu0 %v1610
        %v2847 = vpop.f32.mrf.mxu0
        %v2848 = vadd.f32 %v2719, %v2847
        %v2849 = vpop.f32.mrf.mxu0
        %v2850 = vadd.f32 %v2721, %v2849
        %2851 = vmatmul.bf16.gmra.mxu0 %v1611
        %v2852 = vpop.f32.mrf.mxu0
        %v2853 = vadd.f32 %v2724, %v2852
        %v2854 = vpop.f32.mrf.mxu0
        %v2855 = vadd.f32 %v2726, %v2854
        %2856 = vdwg.mxu0
        %2857 = vmatpush.bf16.msra.mxu0 %v2186
        %2858 = vmatpush.bf16.msra.mxu0 %v2183
        %2859 = vmatpush.bf16.msra.mxu0 %v2180
        %2860 = vmatpush.bf16.msra.mxu0 %v2177
        %2861 = vmatpush.bf16.msra.mxu0 %v2174
        %2862 = vmatpush.bf16.msra.mxu0 %v2171
        %2863 = vmatpush.bf16.msra.mxu0 %v2168
        %2864 = vmatpush.bf16.msra.mxu0 %v2165
        %2865 = vmatmul.bf16.gmra.mxu0 %v1732
        %v2866 = vpop.f32.mrf.mxu0
        %v2867 = vadd.f32 %v2738, %v2866
        %v2868 = vpop.f32.mrf.mxu0
        %v2869 = vadd.f32 %v2740, %v2868
        %2870 = vmatmul.bf16.gmra.mxu0 %v1733
        %v2871 = vpop.f32.mrf.mxu0
        %v2872 = vadd.f32 %v2743, %v2871
        %v2873 = vpop.f32.mrf.mxu0
        %v2874 = vadd.f32 %v2745, %v2873
        %2875 = vmatmul.bf16.gmra.mxu0 %v1734
        %v2876 = vpop.f32.mrf.mxu0
        %v2877 = vadd.f32 %v2748, %v2876
        %v2878 = vpop.f32.mrf.mxu0
        %v2879 = vadd.f32 %v2750, %v2878
        %2880 = vmatmul.bf16.gmra.mxu0 %v1735
        %v2881 = vpop.f32.mrf.mxu0
        %v2882 = vadd.f32 %v2753, %v2881
        %v2883 = vpop.f32.mrf.mxu0
        %v2884 = vadd.f32 %v2755, %v2883
        %2885 = vmatmul.bf16.gmra.mxu0 %v1736
        %v2886 = vpop.f32.mrf.mxu0
        %v2887 = vadd.f32 %v2758, %v2886
        %v2888 = vpop.f32.mrf.mxu0
        %v2889 = vadd.f32 %v2760, %v2888
        %2890 = vmatmul.bf16.gmra.mxu0 %v1737
        %v2891 = vpop.f32.mrf.mxu0
        %v2892 = vadd.f32 %v2763, %v2891
        %v2893 = vpop.f32.mrf.mxu0
        %v2894 = vadd.f32 %v2765, %v2893
        %2895 = vmatmul.bf16.gmra.mxu0 %v1738
        %v2896 = vpop.f32.mrf.mxu0
        %v2897 = vadd.f32 %v2768, %v2896
        %v2898 = vpop.f32.mrf.mxu0
        %v2899 = vadd.f32 %v2770, %v2898
        %2900 = vmatmul.bf16.gmra.mxu0 %v1739
        %v2901 = vpop.f32.mrf.mxu0
        %v2902 = vadd.f32 %v2773, %v2901
        %v2903 = vpop.f32.mrf.mxu0
        %v2904 = vadd.f32 %v2775, %v2903
        %2905 = vmatmul.bf16.gmra.mxu0 %v1740
        %v2906 = vpop.f32.mrf.mxu0
        %v2907 = vadd.f32 %v2778, %v2906
        %v2908 = vpop.f32.mrf.mxu0
        %v2909 = vadd.f32 %v2780, %v2908
        %2910 = vmatmul.bf16.gmra.mxu0 %v1741
        %v2911 = vpop.f32.mrf.mxu0
        %v2912 = vadd.f32 %v2783, %v2911
        %v2913 = vpop.f32.mrf.mxu0
        %v2914 = vadd.f32 %v2785, %v2913
        %2915 = vmatmul.bf16.gmra.mxu0 %v1742
        %v2916 = vpop.f32.mrf.mxu0
        %v2917 = vadd.f32 %v2788, %v2916
        %v2918 = vpop.f32.mrf.mxu0
        %v2919 = vadd.f32 %v2790, %v2918
        %2920 = vmatmul.bf16.gmra.mxu0 %v1743
        %v2921 = vpop.f32.mrf.mxu0
        %v2922 = vadd.f32 %v2793, %v2921
        %v2923 = vpop.f32.mrf.mxu0
        %v2924 = vadd.f32 %v2795, %v2923
        %2925 = vmatmul.bf16.gmra.mxu0 %v1744
        %v2926 = vpop.f32.mrf.mxu0
        %v2927 = vadd.f32 %v2798, %v2926
        %v2928 = vpop.f32.mrf.mxu0
        %v2929 = vadd.f32 %v2800, %v2928
        %2930 = vmatmul.bf16.gmra.mxu0 %v1745
        %v2931 = vpop.f32.mrf.mxu0
        %v2932 = vadd.f32 %v2803, %v2931
        %v2933 = vpop.f32.mrf.mxu0
        %v2934 = vadd.f32 %v2805, %v2933
        %2935 = vmatmul.bf16.gmra.mxu0 %v1746
        %v2936 = vpop.f32.mrf.mxu0
        %v2937 = vadd.f32 %v2808, %v2936
        %v2938 = vpop.f32.mrf.mxu0
        %v2939 = vadd.f32 %v2810, %v2938
        %2940 = vmatmul.bf16.gmra.mxu0 %v1747
        %v2941 = vpop.f32.mrf.mxu0
        %v2942 = vadd.f32 %v2813, %v2941
        %v2943 = vpop.f32.mrf.mxu0
        %v2944 = vadd.f32 %v2815, %v2943
        %2945 = vmatmul.bf16.gmra.mxu0 %v1748
        %v2946 = vpop.f32.mrf.mxu0
        %v2947 = vadd.f32 %v2818, %v2946
        %v2948 = vpop.f32.mrf.mxu0
        %v2949 = vadd.f32 %v2820, %v2948
        %2950 = vmatmul.bf16.gmra.mxu0 %v1749
        %v2951 = vpop.f32.mrf.mxu0
        %v2952 = vadd.f32 %v2823, %v2951
        %v2953 = vpop.f32.mrf.mxu0
        %v2954 = vadd.f32 %v2825, %v2953
        %2955 = vmatmul.bf16.gmra.mxu0 %v1750
        %v2956 = vpop.f32.mrf.mxu0
        %v2957 = vadd.f32 %v2828, %v2956
        %v2958 = vpop.f32.mrf.mxu0
        %v2959 = vadd.f32 %v2830, %v2958
        %2960 = vmatmul.bf16.gmra.mxu0 %v1751
        %v2961 = vpop.f32.mrf.mxu0
        %v2962 = vadd.f32 %v2833, %v2961
        %v2963 = vpop.f32.mrf.mxu0
        %v2964 = vadd.f32 %v2835, %v2963
        %2965 = vmatmul.bf16.gmra.mxu0 %v1752
        %v2966 = vpop.f32.mrf.mxu0
        %v2967 = vadd.f32 %v2838, %v2966
        %v2968 = vpop.f32.mrf.mxu0
        %v2969 = vadd.f32 %v2840, %v2968
        %2970 = vmatmul.bf16.gmra.mxu0 %v1753
        %v2971 = vpop.f32.mrf.mxu0
        %v2972 = vadd.f32 %v2843, %v2971
        %v2973 = vpop.f32.mrf.mxu0
        %v2974 = vadd.f32 %v2845, %v2973
        %2975 = vmatmul.bf16.gmra.mxu0 %v1754
        %v2976 = vpop.f32.mrf.mxu0
        %v2977 = vadd.f32 %v2848, %v2976
        %v2978 = vpop.f32.mrf.mxu0
        %v2979 = vadd.f32 %v2850, %v2978
        %2980 = vmatmul.bf16.gmra.mxu0 %v1755
        %v2981 = vpop.f32.mrf.mxu0
        %v2982 = vadd.f32 %v2853, %v2981
        %v2983 = vpop.f32.mrf.mxu0
        %v2984 = vadd.f32 %v2855, %v2983
        %2985 = vdwg.mxu0
        %2986 = vmatpush.bf16.msra.mxu0 %v2139
        %2987 = vmatpush.bf16.msra.mxu0 %v2136
        %2988 = vmatpush.bf16.msra.mxu0 %v2133
        %2989 = vmatpush.bf16.msra.mxu0 %v2130
        %2990 = vmatpush.bf16.msra.mxu0 %v2127
        %2991 = vmatpush.bf16.msra.mxu0 %v2124
        %2992 = vmatpush.bf16.msra.mxu0 %v2121
        %2993 = vmatpush.bf16.msra.mxu0 %v2118
        %2994 = vmatmul.bf16.gmra.mxu0 %v1444
        %v2995 = vpop.f32.mrf.mxu0
        %v2996 = vadd.f32 0.0, %v2995
        %v2997 = vpop.f32.mrf.mxu0
        %v2998 = vadd.f32 0.0, %v2997
        %2999 = vmatmul.bf16.gmra.mxu0 %v1445
        %v3000 = vpop.f32.mrf.mxu0
        %v3001 = vadd.f32 0.0, %v3000
        %v3002 = vpop.f32.mrf.mxu0
        %v3003 = vadd.f32 0.0, %v3002
        %3004 = vmatmul.bf16.gmra.mxu0 %v1446
        %v3005 = vpop.f32.mrf.mxu0
        %v3006 = vadd.f32 0.0, %v3005
        %v3007 = vpop.f32.mrf.mxu0
        %v3008 = vadd.f32 0.0, %v3007
        %3009 = vmatmul.bf16.gmra.mxu0 %v1447
        %v3010 = vpop.f32.mrf.mxu0
        %v3011 = vadd.f32 0.0, %v3010
        %v3012 = vpop.f32.mrf.mxu0
        %v3013 = vadd.f32 0.0, %v3012
        %3014 = vmatmul.bf16.gmra.mxu0 %v1448
        %v3015 = vpop.f32.mrf.mxu0
        %v3016 = vadd.f32 0.0, %v3015
        %v3017 = vpop.f32.mrf.mxu0
        %v3018 = vadd.f32 0.0, %v3017
        %3019 = vmatmul.bf16.gmra.mxu0 %v1449
        %v3020 = vpop.f32.mrf.mxu0
        %v3021 = vadd.f32 0.0, %v3020
        %v3022 = vpop.f32.mrf.mxu0
        %v3023 = vadd.f32 0.0, %v3022
        %3024 = vmatmul.bf16.gmra.mxu0 %v1450
        %v3025 = vpop.f32.mrf.mxu0
        %v3026 = vadd.f32 0.0, %v3025
        %v3027 = vpop.f32.mrf.mxu0
        %v3028 = vadd.f32 0.0, %v3027
        %3029 = vmatmul.bf16.gmra.mxu0 %v1451
        %v3030 = vpop.f32.mrf.mxu0
        %v3031 = vadd.f32 0.0, %v3030
        %v3032 = vpop.f32.mrf.mxu0
        %v3033 = vadd.f32 0.0, %v3032
        %3034 = vmatmul.bf16.gmra.mxu0 %v1452
        %v3035 = vpop.f32.mrf.mxu0
        %v3036 = vadd.f32 0.0, %v3035
        %v3037 = vpop.f32.mrf.mxu0
        %v3038 = vadd.f32 0.0, %v3037
        %3039 = vmatmul.bf16.gmra.mxu0 %v1453
        %v3040 = vpop.f32.mrf.mxu0
        %v3041 = vadd.f32 0.0, %v3040
        %v3042 = vpop.f32.mrf.mxu0
        %v3043 = vadd.f32 0.0, %v3042
        %3044 = vmatmul.bf16.gmra.mxu0 %v1454
        %v3045 = vpop.f32.mrf.mxu0
        %v3046 = vadd.f32 0.0, %v3045
        %v3047 = vpop.f32.mrf.mxu0
        %v3048 = vadd.f32 0.0, %v3047
        %3049 = vmatmul.bf16.gmra.mxu0 %v1455
        %v3050 = vpop.f32.mrf.mxu0
        %v3051 = vadd.f32 0.0, %v3050
        %v3052 = vpop.f32.mrf.mxu0
        %v3053 = vadd.f32 0.0, %v3052
        %3054 = vmatmul.bf16.gmra.mxu0 %v1456
        %v3055 = vpop.f32.mrf.mxu0
        %v3056 = vadd.f32 0.0, %v3055
        %v3057 = vpop.f32.mrf.mxu0
        %v3058 = vadd.f32 0.0, %v3057
        %3059 = vmatmul.bf16.gmra.mxu0 %v1457
        %v3060 = vpop.f32.mrf.mxu0
        %v3061 = vadd.f32 0.0, %v3060
        %v3062 = vpop.f32.mrf.mxu0
        %v3063 = vadd.f32 0.0, %v3062
        %3064 = vmatmul.bf16.gmra.mxu0 %v1458
        %v3065 = vpop.f32.mrf.mxu0
        %v3066 = vadd.f32 0.0, %v3065
        %v3067 = vpop.f32.mrf.mxu0
        %v3068 = vadd.f32 0.0, %v3067
        %3069 = vmatmul.bf16.gmra.mxu0 %v1459
        %v3070 = vpop.f32.mrf.mxu0
        %v3071 = vadd.f32 0.0, %v3070
        %v3072 = vpop.f32.mrf.mxu0
        %v3073 = vadd.f32 0.0, %v3072
        %3074 = vmatmul.bf16.gmra.mxu0 %v1460
        %v3075 = vpop.f32.mrf.mxu0
        %v3076 = vadd.f32 0.0, %v3075
        %v3077 = vpop.f32.mrf.mxu0
        %v3078 = vadd.f32 0.0, %v3077
        %3079 = vmatmul.bf16.gmra.mxu0 %v1461
        %v3080 = vpop.f32.mrf.mxu0
        %v3081 = vadd.f32 0.0, %v3080
        %v3082 = vpop.f32.mrf.mxu0
        %v3083 = vadd.f32 0.0, %v3082
        %3084 = vmatmul.bf16.gmra.mxu0 %v1462
        %v3085 = vpop.f32.mrf.mxu0
        %v3086 = vadd.f32 0.0, %v3085
        %v3087 = vpop.f32.mrf.mxu0
        %v3088 = vadd.f32 0.0, %v3087
        %3089 = vmatmul.bf16.gmra.mxu0 %v1463
        %v3090 = vpop.f32.mrf.mxu0
        %v3091 = vadd.f32 0.0, %v3090
        %v3092 = vpop.f32.mrf.mxu0
        %v3093 = vadd.f32 0.0, %v3092
        %3094 = vmatmul.bf16.gmra.mxu0 %v1464
        %v3095 = vpop.f32.mrf.mxu0
        %v3096 = vadd.f32 0.0, %v3095
        %v3097 = vpop.f32.mrf.mxu0
        %v3098 = vadd.f32 0.0, %v3097
        %3099 = vmatmul.bf16.gmra.mxu0 %v1465
        %v3100 = vpop.f32.mrf.mxu0
        %v3101 = vadd.f32 0.0, %v3100
        %v3102 = vpop.f32.mrf.mxu0
        %v3103 = vadd.f32 0.0, %v3102
        %3104 = vmatmul.bf16.gmra.mxu0 %v1466
        %v3105 = vpop.f32.mrf.mxu0
        %v3106 = vadd.f32 0.0, %v3105
        %v3107 = vpop.f32.mrf.mxu0
        %v3108 = vadd.f32 0.0, %v3107
        %3109 = vmatmul.bf16.gmra.mxu0 %v1467
        %v3110 = vpop.f32.mrf.mxu0
        %v3111 = vadd.f32 0.0, %v3110
        %v3112 = vpop.f32.mrf.mxu0
        %v3113 = vadd.f32 0.0, %v3112
        %3114 = vdwg.mxu0
        %3115 = vmatpush.bf16.msra.mxu0 %v2163
        %3116 = vmatpush.bf16.msra.mxu0 %v2160
        %3117 = vmatpush.bf16.msra.mxu0 %v2157
        %3118 = vmatpush.bf16.msra.mxu0 %v2154
        %3119 = vmatpush.bf16.msra.mxu0 %v2151
        %3120 = vmatpush.bf16.msra.mxu0 %v2148
        %3121 = vmatpush.bf16.msra.mxu0 %v2145
        %3122 = vmatpush.bf16.msra.mxu0 %v2142
        %3123 = vmatmul.bf16.gmra.mxu0 %v1588
        %v3124 = vpop.f32.mrf.mxu0
        %v3125 = vadd.f32 %v2996, %v3124
        %v3126 = vpop.f32.mrf.mxu0
        %v3127 = vadd.f32 %v2998, %v3126
        %3128 = vmatmul.bf16.gmra.mxu0 %v1589
        %v3129 = vpop.f32.mrf.mxu0
        %v3130 = vadd.f32 %v3001, %v3129
        %v3131 = vpop.f32.mrf.mxu0
        %v3132 = vadd.f32 %v3003, %v3131
        %3133 = vmatmul.bf16.gmra.mxu0 %v1590
        %v3134 = vpop.f32.mrf.mxu0
        %v3135 = vadd.f32 %v3006, %v3134
        %v3136 = vpop.f32.mrf.mxu0
        %v3137 = vadd.f32 %v3008, %v3136
        %3138 = vmatmul.bf16.gmra.mxu0 %v1591
        %v3139 = vpop.f32.mrf.mxu0
        %v3140 = vadd.f32 %v3011, %v3139
        %v3141 = vpop.f32.mrf.mxu0
        %v3142 = vadd.f32 %v3013, %v3141
        %3143 = vmatmul.bf16.gmra.mxu0 %v1592
        %v3144 = vpop.f32.mrf.mxu0
        %v3145 = vadd.f32 %v3016, %v3144
        %v3146 = vpop.f32.mrf.mxu0
        %v3147 = vadd.f32 %v3018, %v3146
        %3148 = vmatmul.bf16.gmra.mxu0 %v1593
        %v3149 = vpop.f32.mrf.mxu0
        %v3150 = vadd.f32 %v3021, %v3149
        %v3151 = vpop.f32.mrf.mxu0
        %v3152 = vadd.f32 %v3023, %v3151
        %3153 = vmatmul.bf16.gmra.mxu0 %v1594
        %v3154 = vpop.f32.mrf.mxu0
        %v3155 = vadd.f32 %v3026, %v3154
        %v3156 = vpop.f32.mrf.mxu0
        %v3157 = vadd.f32 %v3028, %v3156
        %3158 = vmatmul.bf16.gmra.mxu0 %v1595
        %v3159 = vpop.f32.mrf.mxu0
        %v3160 = vadd.f32 %v3031, %v3159
        %v3161 = vpop.f32.mrf.mxu0
        %v3162 = vadd.f32 %v3033, %v3161
        %3163 = vmatmul.bf16.gmra.mxu0 %v1596
        %v3164 = vpop.f32.mrf.mxu0
        %v3165 = vadd.f32 %v3036, %v3164
        %v3166 = vpop.f32.mrf.mxu0
        %v3167 = vadd.f32 %v3038, %v3166
        %3168 = vmatmul.bf16.gmra.mxu0 %v1597
        %v3169 = vpop.f32.mrf.mxu0
        %v3170 = vadd.f32 %v3041, %v3169
        %v3171 = vpop.f32.mrf.mxu0
        %v3172 = vadd.f32 %v3043, %v3171
        %3173 = vmatmul.bf16.gmra.mxu0 %v1598
        %v3174 = vpop.f32.mrf.mxu0
        %v3175 = vadd.f32 %v3046, %v3174
        %v3176 = vpop.f32.mrf.mxu0
        %v3177 = vadd.f32 %v3048, %v3176
        %3178 = vmatmul.bf16.gmra.mxu0 %v1599
        %v3179 = vpop.f32.mrf.mxu0
        %v3180 = vadd.f32 %v3051, %v3179
        %v3181 = vpop.f32.mrf.mxu0
        %v3182 = vadd.f32 %v3053, %v3181
        %3183 = vmatmul.bf16.gmra.mxu0 %v1600
        %v3184 = vpop.f32.mrf.mxu0
        %v3185 = vadd.f32 %v3056, %v3184
        %v3186 = vpop.f32.mrf.mxu0
        %v3187 = vadd.f32 %v3058, %v3186
        %3188 = vmatmul.bf16.gmra.mxu0 %v1601
        %v3189 = vpop.f32.mrf.mxu0
        %v3190 = vadd.f32 %v3061, %v3189
        %v3191 = vpop.f32.mrf.mxu0
        %v3192 = vadd.f32 %v3063, %v3191
        %3193 = vmatmul.bf16.gmra.mxu0 %v1602
        %v3194 = vpop.f32.mrf.mxu0
        %v3195 = vadd.f32 %v3066, %v3194
        %v3196 = vpop.f32.mrf.mxu0
        %v3197 = vadd.f32 %v3068, %v3196
        %3198 = vmatmul.bf16.gmra.mxu0 %v1603
        %v3199 = vpop.f32.mrf.mxu0
        %v3200 = vadd.f32 %v3071, %v3199
        %v3201 = vpop.f32.mrf.mxu0
        %v3202 = vadd.f32 %v3073, %v3201
        %3203 = vmatmul.bf16.gmra.mxu0 %v1604
        %v3204 = vpop.f32.mrf.mxu0
        %v3205 = vadd.f32 %v3076, %v3204
        %v3206 = vpop.f32.mrf.mxu0
        %v3207 = vadd.f32 %v3078, %v3206
        %3208 = vmatmul.bf16.gmra.mxu0 %v1605
        %v3209 = vpop.f32.mrf.mxu0
        %v3210 = vadd.f32 %v3081, %v3209
        %v3211 = vpop.f32.mrf.mxu0
        %v3212 = vadd.f32 %v3083, %v3211
        %3213 = vmatmul.bf16.gmra.mxu0 %v1606
        %v3214 = vpop.f32.mrf.mxu0
        %v3215 = vadd.f32 %v3086, %v3214
        %v3216 = vpop.f32.mrf.mxu0
        %v3217 = vadd.f32 %v3088, %v3216
        %3218 = vmatmul.bf16.gmra.mxu0 %v1607
        %v3219 = vpop.f32.mrf.mxu0
        %v3220 = vadd.f32 %v3091, %v3219
        %v3221 = vpop.f32.mrf.mxu0
        %v3222 = vadd.f32 %v3093, %v3221
        %3223 = vmatmul.bf16.gmra.mxu0 %v1608
        %v3224 = vpop.f32.mrf.mxu0
        %v3225 = vadd.f32 %v3096, %v3224
        %v3226 = vpop.f32.mrf.mxu0
        %v3227 = vadd.f32 %v3098, %v3226
        %3228 = vmatmul.bf16.gmra.mxu0 %v1609
        %v3229 = vpop.f32.mrf.mxu0
        %v3230 = vadd.f32 %v3101, %v3229
        %v3231 = vpop.f32.mrf.mxu0
        %v3232 = vadd.f32 %v3103, %v3231
        %3233 = vmatmul.bf16.gmra.mxu0 %v1610
        %v3234 = vpop.f32.mrf.mxu0
        %v3235 = vadd.f32 %v3106, %v3234
        %v3236 = vpop.f32.mrf.mxu0
        %v3237 = vadd.f32 %v3108, %v3236
        %3238 = vmatmul.bf16.gmra.mxu0 %v1611
        %v3239 = vpop.f32.mrf.mxu0
        %v3240 = vadd.f32 %v3111, %v3239
        %v3241 = vpop.f32.mrf.mxu0
        %v3242 = vadd.f32 %v3113, %v3241
        %3243 = vdwg.mxu0
        %3244 = vmatpush.bf16.msra.mxu0 %v2187
        %3245 = vmatpush.bf16.msra.mxu0 %v2184
        %3246 = vmatpush.bf16.msra.mxu0 %v2181
        %3247 = vmatpush.bf16.msra.mxu0 %v2178
        %3248 = vmatpush.bf16.msra.mxu0 %v2175
        %3249 = vmatpush.bf16.msra.mxu0 %v2172
        %3250 = vmatpush.bf16.msra.mxu0 %v2169
        %3251 = vmatpush.bf16.msra.mxu0 %v2166
        %3252 = vmatmul.bf16.gmra.mxu0 %v1732
        %v3253 = vpop.f32.mrf.mxu0
        %v3254 = vadd.f32 %v3125, %v3253
        %v3255 = vpop.f32.mrf.mxu0
        %v3256 = vadd.f32 %v3127, %v3255
        %3257 = vmatmul.bf16.gmra.mxu0 %v1733
        %v3258 = vpop.f32.mrf.mxu0
        %v3259 = vadd.f32 %v3130, %v3258
        %v3260 = vpop.f32.mrf.mxu0
        %v3261 = vadd.f32 %v3132, %v3260
        %3262 = vmatmul.bf16.gmra.mxu0 %v1734
        %v3263 = vpop.f32.mrf.mxu0
        %v3264 = vadd.f32 %v3135, %v3263
        %v3265 = vpop.f32.mrf.mxu0
        %v3266 = vadd.f32 %v3137, %v3265
        %3267 = vmatmul.bf16.gmra.mxu0 %v1735
        %v3268 = vpop.f32.mrf.mxu0
        %v3269 = vadd.f32 %v3140, %v3268
        %v3270 = vpop.f32.mrf.mxu0
        %v3271 = vadd.f32 %v3142, %v3270
        %3272 = vmatmul.bf16.gmra.mxu0 %v1736
        %v3273 = vpop.f32.mrf.mxu0
        %v3274 = vadd.f32 %v3145, %v3273
        %v3275 = vpop.f32.mrf.mxu0
        %v3276 = vadd.f32 %v3147, %v3275
        %3277 = vmatmul.bf16.gmra.mxu0 %v1737
        %v3278 = vpop.f32.mrf.mxu0
        %v3279 = vadd.f32 %v3150, %v3278
        %v3280 = vpop.f32.mrf.mxu0
        %v3281 = vadd.f32 %v3152, %v3280
        %3282 = vmatmul.bf16.gmra.mxu0 %v1738
        %v3283 = vpop.f32.mrf.mxu0
        %v3284 = vadd.f32 %v3155, %v3283
        %v3285 = vpop.f32.mrf.mxu0
        %v3286 = vadd.f32 %v3157, %v3285
        %3287 = vmatmul.bf16.gmra.mxu0 %v1739
        %v3288 = vpop.f32.mrf.mxu0
        %v3289 = vadd.f32 %v3160, %v3288
        %v3290 = vpop.f32.mrf.mxu0
        %v3291 = vadd.f32 %v3162, %v3290
        %3292 = vmatmul.bf16.gmra.mxu0 %v1740
        %v3293 = vpop.f32.mrf.mxu0
        %v3294 = vadd.f32 %v3165, %v3293
        %v3295 = vpop.f32.mrf.mxu0
        %v3296 = vadd.f32 %v3167, %v3295
        %3297 = vmatmul.bf16.gmra.mxu0 %v1741
        %v3298 = vpop.f32.mrf.mxu0
        %v3299 = vadd.f32 %v3170, %v3298
        %v3300 = vpop.f32.mrf.mxu0
        %v3301 = vadd.f32 %v3172, %v3300
        %3302 = vmatmul.bf16.gmra.mxu0 %v1742
        %v3303 = vpop.f32.mrf.mxu0
        %v3304 = vadd.f32 %v3175, %v3303
        %v3305 = vpop.f32.mrf.mxu0
        %v3306 = vadd.f32 %v3177, %v3305
        %3307 = vmatmul.bf16.gmra.mxu0 %v1743
        %v3308 = vpop.f32.mrf.mxu0
        %v3309 = vadd.f32 %v3180, %v3308
        %v3310 = vpop.f32.mrf.mxu0
        %v3311 = vadd.f32 %v3182, %v3310
        %3312 = vmatmul.bf16.gmra.mxu0 %v1744
        %v3313 = vpop.f32.mrf.mxu0
        %v3314 = vadd.f32 %v3185, %v3313
        %v3315 = vpop.f32.mrf.mxu0
        %v3316 = vadd.f32 %v3187, %v3315
        %3317 = vmatmul.bf16.gmra.mxu0 %v1745
        %v3318 = vpop.f32.mrf.mxu0
        %v3319 = vadd.f32 %v3190, %v3318
        %v3320 = vpop.f32.mrf.mxu0
        %v3321 = vadd.f32 %v3192, %v3320
        %3322 = vmatmul.bf16.gmra.mxu0 %v1746
        %v3323 = vpop.f32.mrf.mxu0
        %v3324 = vadd.f32 %v3195, %v3323
        %v3325 = vpop.f32.mrf.mxu0
        %v3326 = vadd.f32 %v3197, %v3325
        %3327 = vmatmul.bf16.gmra.mxu0 %v1747
        %v3328 = vpop.f32.mrf.mxu0
        %v3329 = vadd.f32 %v3200, %v3328
        %v3330 = vpop.f32.mrf.mxu0
        %v3331 = vadd.f32 %v3202, %v3330
        %3332 = vmatmul.bf16.gmra.mxu0 %v1748
        %v3333 = vpop.f32.mrf.mxu0
        %v3334 = vadd.f32 %v3205, %v3333
        %v3335 = vpop.f32.mrf.mxu0
        %v3336 = vadd.f32 %v3207, %v3335
        %3337 = vmatmul.bf16.gmra.mxu0 %v1749
        %v3338 = vpop.f32.mrf.mxu0
        %v3339 = vadd.f32 %v3210, %v3338
        %v3340 = vpop.f32.mrf.mxu0
        %v3341 = vadd.f32 %v3212, %v3340
        %3342 = vmatmul.bf16.gmra.mxu0 %v1750
        %v3343 = vpop.f32.mrf.mxu0
        %v3344 = vadd.f32 %v3215, %v3343
        %v3345 = vpop.f32.mrf.mxu0
        %v3346 = vadd.f32 %v3217, %v3345
        %3347 = vmatmul.bf16.gmra.mxu0 %v1751
        %v3348 = vpop.f32.mrf.mxu0
        %v3349 = vadd.f32 %v3220, %v3348
        %v3350 = vpop.f32.mrf.mxu0
        %v3351 = vadd.f32 %v3222, %v3350
        %3352 = vmatmul.bf16.gmra.mxu0 %v1752
        %v3353 = vpop.f32.mrf.mxu0
        %v3354 = vadd.f32 %v3225, %v3353
        %v3355 = vpop.f32.mrf.mxu0
        %v3356 = vadd.f32 %v3227, %v3355
        %3357 = vmatmul.bf16.gmra.mxu0 %v1753
        %v3358 = vpop.f32.mrf.mxu0
        %v3359 = vadd.f32 %v3230, %v3358
        %v3360 = vpop.f32.mrf.mxu0
        %v3361 = vadd.f32 %v3232, %v3360
        %3362 = vmatmul.bf16.gmra.mxu0 %v1754
        %v3363 = vpop.f32.mrf.mxu0
        %v3364 = vadd.f32 %v3235, %v3363
        %v3365 = vpop.f32.mrf.mxu0
        %v3366 = vadd.f32 %v3237, %v3365
        %3367 = vmatmul.bf16.gmra.mxu0 %v1755
        %v3368 = vpop.f32.mrf.mxu0
        %v3369 = vadd.f32 %v3240, %v3368
        %v3370 = vpop.f32.mrf.mxu0
        %v3371 = vadd.f32 %v3242, %v3370
        %3372 = vdwg.mxu0
        %vm3421 = vcmask 1046528
        %v3422 = vrot.slane %v2867, 1
        %v3423 = vrot.slane %v2869, 1
        %v3424 = vsel %vm3421, %v3422, %v3423
        %v3425 = vrot.slane %v2872, 1
        %v3426 = vsel %vm3421, %v3423, %v3425
        %v3427 = vrot.slane %v2874, 1
        %v3428 = vrot.slane %v2877, 1
        %v3429 = vsel %vm3421, %v3427, %v3428
        %v3430 = vrot.slane %v2879, 1
        %v3431 = vsel %vm3421, %v3428, %v3430
        %v3432 = vrot.slane %v2882, 1
        %v3433 = vrot.slane %v2884, 1
        %v3434 = vsel %vm3421, %v3432, %v3433
        %v3435 = vrot.slane %v2887, 1
        %v3436 = vsel %vm3421, %v3433, %v3435
        %v3437 = vrot.slane %v2889, 1
        %v3438 = vrot.slane %v2892, 1
        %v3439 = vsel %vm3421, %v3437, %v3438
        %v3440 = vrot.slane %v2894, 1
        %v3441 = vsel %vm3421, %v3438, %v3440
        %v3442 = vrot.slane %v2897, 1
        %v3443 = vrot.slane %v2899, 1
        %v3444 = vsel %vm3421, %v3442, %v3443
        %v3445 = vrot.slane %v2902, 1
        %v3446 = vsel %vm3421, %v3443, %v3445
        %v3447 = vrot.slane %v2904, 1
        %v3448 = vrot.slane %v2907, 1
        %v3449 = vsel %vm3421, %v3447, %v3448
        %v3450 = vrot.slane %v2909, 1
        %v3451 = vsel %vm3421, %v3448, %v3450
        %v3452 = vrot.slane %v2912, 1
        %v3453 = vrot.slane %v2914, 1
        %v3454 = vsel %vm3421, %v3452, %v3453
        %v3455 = vrot.slane %v2917, 1
        %v3456 = vsel %vm3421, %v3453, %v3455
        %v3457 = vrot.slane %v2919, 1
        %v3458 = vrot.slane %v2922, 1
        %v3459 = vsel %vm3421, %v3457, %v3458
        %v3460 = vrot.slane %v2924, 1
        %v3461 = vsel %vm3421, %v3458, %v3460
        %v3462 = vrot.slane %v2927, 1
        %v3463 = vrot.slane %v2929, 1
        %v3464 = vsel %vm3421, %v3462, %v3463
        %v3465 = vrot.slane %v2932, 1
        %v3466 = vsel %vm3421, %v3463, %v3465
        %v3467 = vrot.slane %v2934, 1
        %v3468 = vrot.slane %v2937, 1
        %v3469 = vsel %vm3421, %v3467, %v3468
        %v3470 = vrot.slane %v2939, 1
        %v3471 = vsel %vm3421, %v3468, %v3470
        %v3472 = vrot.slane %v2942, 1
        %v3473 = vrot.slane %v2944, 1
        %v3474 = vsel %vm3421, %v3472, %v3473
        %v3475 = vrot.slane %v2947, 1
        %v3476 = vsel %vm3421, %v3473, %v3475
        %v3477 = vrot.slane %v2949, 1
        %v3478 = vrot.slane %v2952, 1
        %v3479 = vsel %vm3421, %v3477, %v3478
        %v3480 = vrot.slane %v2954, 1
        %v3481 = vsel %vm3421, %v3478, %v3480
        %v3482 = vrot.slane %v2957, 1
        %v3483 = vrot.slane %v2959, 1
        %v3484 = vsel %vm3421, %v3482, %v3483
        %v3485 = vrot.slane %v2962, 1
        %v3486 = vsel %vm3421, %v3483, %v3485
        %v3487 = vrot.slane %v2964, 1
        %v3488 = vrot.slane %v2967, 1
        %v3489 = vsel %vm3421, %v3487, %v3488
        %v3490 = vrot.slane %v2969, 1
        %v3491 = vsel %vm3421, %v3488, %v3490
        %v3492 = vrot.slane %v2972, 1
        %v3493 = vrot.slane %v2974, 1
        %v3494 = vsel %vm3421, %v3492, %v3493
        %v3495 = vrot.slane %v2977, 1
        %v3496 = vsel %vm3421, %v3493, %v3495
        %v3497 = vrot.slane %v2979, 1
        %v3498 = vrot.slane %v2982, 1
        %v3499 = vsel %vm3421, %v3497, %v3498
        %v3500 = vrot.slane %v2984, 1
        %v3501 = vsel %vm3421, %v3498, %v3500
        %v3534 = vadd.f32 %v2496, %v3424
        %v3535 = vadd.f32 %v2498, %v3426
        %v3536 = vadd.f32 %v2502, %v3429
        %v3537 = vadd.f32 %v2505, %v3431
        %v3538 = vadd.f32 %v2509, %v3434
        %v3539 = vadd.f32 %v2511, %v3436
        %v3540 = vadd.f32 %v2515, %v3439
        %v3541 = vadd.f32 %v2518, %v3441
        %v3542 = vadd.f32 %v2522, %v3444
        %v3543 = vadd.f32 %v2524, %v3446
        %v3544 = vadd.f32 %v2528, %v3449
        %v3545 = vadd.f32 %v2531, %v3451
        %v3546 = vadd.f32 %v2535, %v3454
        %v3547 = vadd.f32 %v2537, %v3456
        %v3548 = vadd.f32 %v2541, %v3459
        %v3549 = vadd.f32 %v2544, %v3461
        %v3550 = vadd.f32 %v2548, %v3464
        %v3551 = vadd.f32 %v2550, %v3466
        %v3552 = vadd.f32 %v2554, %v3469
        %v3553 = vadd.f32 %v2557, %v3471
        %v3554 = vadd.f32 %v2561, %v3474
        %v3555 = vadd.f32 %v2563, %v3476
        %v3556 = vadd.f32 %v2567, %v3479
        %v3557 = vadd.f32 %v2570, %v3481
        %v3558 = vadd.f32 %v2574, %v3484
        %v3559 = vadd.f32 %v2576, %v3486
        %v3560 = vadd.f32 %v2580, %v3489
        %v3561 = vadd.f32 %v2583, %v3491
        %v3562 = vadd.f32 %v2587, %v3494
        %v3563 = vadd.f32 %v2589, %v3496
        %v3564 = vadd.f32 %v2593, %v3499
        %v3565 = vadd.f32 %v2596, %v3501
        %vm3614 = vcmask 1045504
        %v3615 = vrot.slane %v3254, 2
        %v3616 = vrot.slane %v3256, 2
        %v3617 = vsel %vm3614, %v3615, %v3616
        %v3618 = vrot.slane %v3259, 2
        %v3619 = vsel %vm3614, %v3616, %v3618
        %v3620 = vrot.slane %v3261, 2
        %v3621 = vrot.slane %v3264, 2
        %v3622 = vsel %vm3614, %v3620, %v3621
        %v3623 = vrot.slane %v3266, 2
        %v3624 = vsel %vm3614, %v3621, %v3623
        %v3625 = vrot.slane %v3269, 2
        %v3626 = vrot.slane %v3271, 2
        %v3627 = vsel %vm3614, %v3625, %v3626
        %v3628 = vrot.slane %v3274, 2
        %v3629 = vsel %vm3614, %v3626, %v3628
        %v3630 = vrot.slane %v3276, 2
        %v3631 = vrot.slane %v3279, 2
        %v3632 = vsel %vm3614, %v3630, %v3631
        %v3633 = vrot.slane %v3281, 2
        %v3634 = vsel %vm3614, %v3631, %v3633
        %v3635 = vrot.slane %v3284, 2
        %v3636 = vrot.slane %v3286, 2
        %v3637 = vsel %vm3614, %v3635, %v3636
        %v3638 = vrot.slane %v3289, 2
        %v3639 = vsel %vm3614, %v3636, %v3638
        %v3640 = vrot.slane %v3291, 2
        %v3641 = vrot.slane %v3294, 2
        %v3642 = vsel %vm3614, %v3640, %v3641
        %v3643 = vrot.slane %v3296, 2
        %v3644 = vsel %vm3614, %v3641, %v3643
        %v3645 = vrot.slane %v3299, 2
        %v3646 = vrot.slane %v3301, 2
        %v3647 = vsel %vm3614, %v3645, %v3646
        %v3648 = vrot.slane %v3304, 2
        %v3649 = vsel %vm3614, %v3646, %v3648
        %v3650 = vrot.slane %v3306, 2
        %v3651 = vrot.slane %v3309, 2
        %v3652 = vsel %vm3614, %v3650, %v3651
        %v3653 = vrot.slane %v3311, 2
        %v3654 = vsel %vm3614, %v3651, %v3653
        %v3655 = vrot.slane %v3314, 2
        %v3656 = vrot.slane %v3316, 2
        %v3657 = vsel %vm3614, %v3655, %v3656
        %v3658 = vrot.slane %v3319, 2
        %v3659 = vsel %vm3614, %v3656, %v3658
        %v3660 = vrot.slane %v3321, 2
        %v3661 = vrot.slane %v3324, 2
        %v3662 = vsel %vm3614, %v3660, %v3661
        %v3663 = vrot.slane %v3326, 2
        %v3664 = vsel %vm3614, %v3661, %v3663
        %v3665 = vrot.slane %v3329, 2
        %v3666 = vrot.slane %v3331, 2
        %v3667 = vsel %vm3614, %v3665, %v3666
        %v3668 = vrot.slane %v3334, 2
        %v3669 = vsel %vm3614, %v3666, %v3668
        %v3670 = vrot.slane %v3336, 2
        %v3671 = vrot.slane %v3339, 2
        %v3672 = vsel %vm3614, %v3670, %v3671
        %v3673 = vrot.slane %v3341, 2
        %v3674 = vsel %vm3614, %v3671, %v3673
        %v3675 = vrot.slane %v3344, 2
        %v3676 = vrot.slane %v3346, 2
        %v3677 = vsel %vm3614, %v3675, %v3676
        %v3678 = vrot.slane %v3349, 2
        %v3679 = vsel %vm3614, %v3676, %v3678
        %v3680 = vrot.slane %v3351, 2
        %v3681 = vrot.slane %v3354, 2
        %v3682 = vsel %vm3614, %v3680, %v3681
        %v3683 = vrot.slane %v3356, 2
        %v3684 = vsel %vm3614, %v3681, %v3683
        %v3685 = vrot.slane %v3359, 2
        %v3686 = vrot.slane %v3361, 2
        %v3687 = vsel %vm3614, %v3685, %v3686
        %v3688 = vrot.slane %v3364, 2
        %v3689 = vsel %vm3614, %v3686, %v3688
        %v3690 = vrot.slane %v3366, 2
        %v3691 = vrot.slane %v3369, 2
        %v3692 = vsel %vm3614, %v3690, %v3691
        %v3693 = vrot.slane %v3371, 2
        %v3694 = vsel %vm3614, %v3691, %v3693
        %v3727 = vadd.f32 %v3534, %v3617
        %v3728 = vadd.f32 %v3535, %v3619
        %v3729 = vadd.f32 %v3536, %v3622
        %v3730 = vadd.f32 %v3537, %v3624
        %v3731 = vadd.f32 %v3538, %v3627
        %v3732 = vadd.f32 %v3539, %v3629
        %v3733 = vadd.f32 %v3540, %v3632
        %v3734 = vadd.f32 %v3541, %v3634
        %v3735 = vadd.f32 %v3542, %v3637
        %v3736 = vadd.f32 %v3543, %v3639
        %v3737 = vadd.f32 %v3544, %v3642
        %v3738 = vadd.f32 %v3545, %v3644
        %v3739 = vadd.f32 %v3546, %v3647
        %v3740 = vadd.f32 %v3547, %v3649
        %v3741 = vadd.f32 %v3548, %v3652
        %v3742 = vadd.f32 %v3549, %v3654
        %v3743 = vadd.f32 %v3550, %v3657
        %v3744 = vadd.f32 %v3551, %v3659
        %v3745 = vadd.f32 %v3552, %v3662
        %v3746 = vadd.f32 %v3553, %v3664
        %v3747 = vadd.f32 %v3554, %v3667
        %v3748 = vadd.f32 %v3555, %v3669
        %v3749 = vadd.f32 %v3556, %v3672
        %v3750 = vadd.f32 %v3557, %v3674
        %v3751 = vadd.f32 %v3558, %v3677
        %v3752 = vadd.f32 %v3559, %v3679
        %v3753 = vadd.f32 %v3560, %v3682
        %v3754 = vadd.f32 %v3561, %v3684
        %v3755 = vadd.f32 %v3562, %v3687
        %v3756 = vadd.f32 %v3563, %v3689
        %v3757 = vadd.f32 %v3564, %v3692
        %v3758 = vadd.f32 %v3565, %v3694
        %v3759 = vld [vmem:[%s4] sm:$0x1]
        %v3761 = vperm.slane %v3759, 0
        %v3763 = vadd.f32 %v3727, %v3761
        %v3764 = vadd.f32 %v3728, %v3761
        %v3765 = vadd.f32 %v3729, %v3761
        %v3766 = vadd.f32 %v3730, %v3761
        %v3767 = vadd.f32 %v3731, %v3761
        %v3768 = vadd.f32 %v3732, %v3761
        %v3769 = vadd.f32 %v3733, %v3761
        %v3770 = vadd.f32 %v3734, %v3761
        %v3771 = vadd.f32 %v3735, %v3761
        %v3772 = vadd.f32 %v3736, %v3761
        %v3773 = vadd.f32 %v3737, %v3761
        %v3774 = vadd.f32 %v3738, %v3761
        %v3775 = vadd.f32 %v3739, %v3761
        %v3776 = vadd.f32 %v3740, %v3761
        %v3777 = vadd.f32 %v3741, %v3761
        %v3778 = vadd.f32 %v3742, %v3761
        %v3779 = vadd.f32 %v3743, %v3761
        %v3780 = vadd.f32 %v3744, %v3761
        %v3781 = vadd.f32 %v3745, %v3761
        %v3782 = vadd.f32 %v3746, %v3761
        %v3783 = vadd.f32 %v3747, %v3761
        %v3784 = vadd.f32 %v3748, %v3761
        %v3785 = vadd.f32 %v3749, %v3761
        %v3786 = vadd.f32 %v3750, %v3761
        %v3787 = vadd.f32 %v3751, %v3761
        %v3788 = vadd.f32 %v3752, %v3761
        %v3789 = vadd.f32 %v3753, %v3761
        %v3790 = vadd.f32 %v3754, %v3761
        %v3791 = vadd.f32 %v3755, %v3761
        %v3792 = vadd.f32 %v3756, %v3761
        %v3793 = vadd.f32 %v3757, %v3761
        %v3794 = vadd.f32 %v3758, %v3761
        %v3795 = vmax.f32 %v3763, 0.0
        %v3796 = vmax.f32 %v3764, 0.0
        %v3797 = vmax.f32 %v3765, 0.0
        %v3798 = vmax.f32 %v3766, 0.0
        %v3799 = vmax.f32 %v3767, 0.0
        %v3800 = vmax.f32 %v3768, 0.0
        %v3801 = vmax.f32 %v3769, 0.0
        %v3802 = vmax.f32 %v3770, 0.0
        %v3803 = vmax.f32 %v3771, 0.0
        %v3804 = vmax.f32 %v3772, 0.0
        %v3805 = vmax.f32 %v3773, 0.0
        %v3806 = vmax.f32 %v3774, 0.0
        %v3807 = vmax.f32 %v3775, 0.0
        %v3808 = vmax.f32 %v3776, 0.0
        %v3809 = vmax.f32 %v3777, 0.0
        %v3810 = vmax.f32 %v3778, 0.0
        %v3811 = vmax.f32 %v3779, 0.0
        %v3812 = vmax.f32 %v3780, 0.0
        %v3813 = vmax.f32 %v3781, 0.0
        %v3814 = vmax.f32 %v3782, 0.0
        %v3815 = vmax.f32 %v3783, 0.0
        %v3816 = vmax.f32 %v3784, 0.0
        %v3817 = vmax.f32 %v3785, 0.0
        %v3818 = vmax.f32 %v3786, 0.0
        %v3819 = vmax.f32 %v3787, 0.0
        %v3820 = vmax.f32 %v3788, 0.0
        %v3821 = vmax.f32 %v3789, 0.0
        %v3822 = vmax.f32 %v3790, 0.0
        %v3823 = vmax.f32 %v3791, 0.0
        %v3824 = vmax.f32 %v3792, 0.0
        %v3825 = vmax.f32 %v3793, 0.0
        %v3826 = vmax.f32 %v3794, 0.0
        %v3827 = vpack.c.bf16 %v3795, %v3795
        %v3828 = vpack.c.bf16 %v3796, %v3796
        %v3829 = vpack.c.bf16 %v3797, %v3797
        %v3830 = vpack.c.bf16 %v3798, %v3798
        %v3831 = vpack.c.bf16 %v3799, %v3799
        %v3832 = vpack.c.bf16 %v3800, %v3800
        %v3833 = vpack.c.bf16 %v3801, %v3801
        %v3834 = vpack.c.bf16 %v3802, %v3802
        %v3835 = vpack.c.bf16 %v3803, %v3803
        %v3836 = vpack.c.bf16 %v3804, %v3804
        %v3837 = vpack.c.bf16 %v3805, %v3805
        %v3838 = vpack.c.bf16 %v3806, %v3806
        %v3839 = vpack.c.bf16 %v3807, %v3807
        %v3840 = vpack.c.bf16 %v3808, %v3808
        %v3841 = vpack.c.bf16 %v3809, %v3809
        %v3842 = vpack.c.bf16 %v3810, %v3810
        %v3843 = vpack.c.bf16 %v3811, %v3811
        %v3844 = vpack.c.bf16 %v3812, %v3812
        %v3845 = vpack.c.bf16 %v3813, %v3813
        %v3846 = vpack.c.bf16 %v3814, %v3814
        %v3847 = vpack.c.bf16 %v3815, %v3815
        %v3848 = vpack.c.bf16 %v3816, %v3816
        %v3849 = vpack.c.bf16 %v3817, %v3817
        %v3850 = vpack.c.bf16 %v3818, %v3818
        %v3851 = vpack.c.bf16 %v3819, %v3819
        %v3852 = vpack.c.bf16 %v3820, %v3820
        %v3853 = vpack.c.bf16 %v3821, %v3821
        %v3854 = vpack.c.bf16 %v3822, %v3822
        %v3855 = vpack.c.bf16 %v3823, %v3823
        %v3856 = vpack.c.bf16 %v3824, %v3824
        %v3857 = vpack.c.bf16 %v3825, %v3825
        %v3858 = vpack.c.bf16 %v3826, %v3826
        %3859 = vst [vmem:[%s308] sm:$0xf] %v3827
        %3860 = vst [vmem:[%s308 + $0x4] sm:$0xf] %v3828
        %3861 = vst [vmem:[%s308 + $0x8] sm:$0xf] %v3829
        %3862 = vst [vmem:[%s308 + $0xc] sm:$0xf] %v3830
        %3863 = vst [vmem:[%s308 + $0x10] sm:$0xf] %v3831
        %3864 = vst [vmem:[%s308 + $0x14] sm:$0xf] %v3832
        %3865 = vst [vmem:[%s308 + $0x18] sm:$0xf] %v3833
        %3866 = vst [vmem:[%s308 + $0x1c] sm:$0xf] %v3834
        %3867 = vst [vmem:[%s308 + $0x20] sm:$0xf] %v3835
        %3868 = vst [vmem:[%s308 + $0x24] sm:$0xf] %v3836
        %3869 = vst [vmem:[%s308 + $0x28] sm:$0xf] %v3837
        %3870 = vst [vmem:[%s308 + $0x2c] sm:$0xf] %v3838
        %3871 = vst [vmem:[%s308 + $0x30] sm:$0xf] %v3839
        %3872 = vst [vmem:[%s308 + $0x34] sm:$0xf] %v3840
        %3873 = vst [vmem:[%s308 + $0x38] sm:$0xf] %v3841
        %3874 = vst [vmem:[%s308 + $0x3c] sm:$0xf] %v3842
        %3875 = vst [vmem:[%s308 + $0x40] sm:$0xf] %v3843
        %3876 = vst [vmem:[%s308 + $0x44] sm:$0xf] %v3844
        %3877 = vst [vmem:[%s308 + $0x48] sm:$0xf] %v3845
        %3878 = vst [vmem:[%s308 + $0x4c] sm:$0xf] %v3846
        %3879 = vst [vmem:[%s308 + $0x50] sm:$0xf] %v3847
        %3880 = vst [vmem:[%s308 + $0x54] sm:$0xf] %v3848
        %3881 = vst [vmem:[%s308 + $0x58] sm:$0xf] %v3849
        %3882 = vst [vmem:[%s308 + $0x5c] sm:$0xf] %v3850
        %3883 = vst [vmem:[%s308 + $0x60] sm:$0xf] %v3851
        %3884 = vst [vmem:[%s308 + $0x64] sm:$0xf] %v3852
        %3885 = vst [vmem:[%s308 + $0x68] sm:$0xf] %v3853
        %3886 = vst [vmem:[%s308 + $0x6c] sm:$0xf] %v3854
        %3887 = vst [vmem:[%s308 + $0x70] sm:$0xf] %v3855
        %3888 = vst [vmem:[%s308 + $0x74] sm:$0xf] %v3856
        %3889 = vst [vmem:[%s308 + $0x78] sm:$0xf] %v3857
        %3890 = vst [vmem:[%s308 + $0x7c] sm:$0xf] %v3858
        %v3891 = vadd.f32 %v3795, %v3796
        %v3892 = vadd.f32 %v3891, %v3797
        %v3893 = vadd.f32 %v3892, %v3798
        %v3894 = vadd.f32 %v3893, %v3799
        %v3895 = vadd.f32 %v3894, %v3800
        %v3896 = vadd.f32 %v3895, %v3801
        %v3897 = vadd.f32 %v3896, %v3802
        %v3898 = vadd.f32 %v3897, %v3803
        %v3899 = vadd.f32 %v3898, %v3804
        %v3900 = vadd.f32 %v3899, %v3805
        %v3901 = vadd.f32 %v3900, %v3806
        %v3902 = vadd.f32 %v3901, %v3807
        %v3903 = vadd.f32 %v3902, %v3808
        %v3904 = vadd.f32 %v3903, %v3809
        %v3905 = vadd.f32 %v3904, %v3810
        %v3906 = vadd.f32 %v3905, %v3811
        %v3907 = vadd.f32 %v3906, %v3812
        %v3908 = vadd.f32 %v3907, %v3813
        %v3909 = vadd.f32 %v3908, %v3814
        %v3910 = vadd.f32 %v3909, %v3815
        %v3911 = vadd.f32 %v3910, %v3816
        %v3912 = vadd.f32 %v3911, %v3817
        %v3913 = vadd.f32 %v3912, %v3818
        %v3914 = vadd.f32 %v3913, %v3819
        %v3915 = vadd.f32 %v3914, %v3820
        %v3916 = vadd.f32 %v3915, %v3821
        %v3917 = vadd.f32 %v3916, %v3822
        %v3918 = vadd.f32 %v3917, %v3823
        %v3919 = vadd.f32 %v3918, %v3824
        %v3920 = vadd.f32 %v3919, %v3825
        %v3921 = vadd.f32 %v3920, %v3826
        %v3922 = vrot.slane %v3921, 4
        %v3923 = vadd.f32 %v3921, %v3922
        %v3924 = vrot.slane %v3923, 2
        %v3925 = vadd.f32 %v3923, %v3924
        %v3926 = vrot.slane %v3925, 1
        %v3927 = vadd.f32 %v3925, %v3926
        %v3928 = vrcp.pop 256.0
        %v3929 = vmul.f32 256.0, %v3928
        %v3930 = vsub.f32 1.0, %v3929
        %v3931 = vmul.f32 %v3928, %v3930
        %v3932 = vadd.f32 %v3928, %v3931
        %vm3933 = vweird.f32 %v3928
        %v3934 = vsel %vm3933, %v3928, %v3932
        %v3935 = vmul.f32 %v3927, %v3934
        %3936 = vst [vmem:[%s314] sm:$0x1] %v3935
        %s3937 = sand.u32 %s146, 1
        %s3938 = scalar_lea.sflag [#allocation5], %s3937
        %s3939 = sand.u32 %s146, 1
        %s3940 = smul.addr %s3939, 128
        %s3941 = scalar_lea.vmem [#allocation9], %s3940
        %s3942 = sand.u32 %s172, 1
        %s3943 = scalar_lea.sflag [#allocation11], %s3942
        %s3944 = sand.u32 %s172, 1
        %s3945 = scalar_lea.vmem [#allocation10], %s3944
        // Predicated region
        $region53: #{tpu_custom_call.1} parent=39 // pred_check
          %p3946 = pneg %p156
        $region54: #{tpu_custom_call.1} parent=39 // pred_check_branch
          %3948 = sbr.rel (%p3946) target = $region56
        $region55: #{tpu_custom_call.1} parent=39 // pred_region
          %3950 = vsyncadd %s3938, 0
          %s3951 = smul.addr %s28, 32
          %s3952 = smul.addr %s3951, 4
          %s3953 = scalar_lea.hbm %s5, %s3952
          %s3954 = sshll.u32 %s3941, 4
          %s3955 = int_to_ptr.vmem [resolvable:$true] %s3954
          %s3956 = sshll.u32 %s3953, 4
          %s3957 = int_to_ptr.hbm [resolvable:$true] %s3956
          %3962 = dma.vmem_to_hbm [thread:$0]  %s3955, 2048, %s3957, %s3938, 64, 64, 4
        $region56: #{tpu_custom_call.1} parent=39 // pred_fallthru
          _
        // Predicated region
        $region57: #{tpu_custom_call.1} parent=39 // pred_check
          %p3963 = pneg %p182
        $region58: #{tpu_custom_call.1} parent=39 // pred_check_branch
          %3965 = sbr.rel (%p3963) target = $region60
        $region59: #{tpu_custom_call.1} parent=39 // pred_region
          %3967 = vsyncadd %s3943, 0
          %s3968 = scalar_lea.hbm %s6, %s28
          %s3970 = sshll.u32 %s3945, 4
          %s3971 = int_to_ptr.vmem [resolvable:$true] %s3970
          %s3972 = sshll.u32 %s3968, 4
          %s3973 = int_to_ptr.hbm [resolvable:$true] %s3972
          %3975 = dma.vmem_to_hbm [thread:$0]  %s3971, 16, %s3973, %s3943
        $region60: #{tpu_custom_call.1} parent=39 // pred_fallthru
          _
      $region40: #{tpu_custom_call.1} parent=5 // pred_fallthru
        _
      %p3976 = scmp.le.s32.totalorder 2, %s23
      // Predicated region
      $region61: #{tpu_custom_call.1} parent=5 // pred_check
        %p3977 = pneg %p3976
      $region62: #{tpu_custom_call.1} parent=5 // pred_check_branch
        %3979 = sbr.rel (%p3977) target = $region64
      $region63: #{tpu_custom_call.1} parent=5 // pred_region
        %s3980 = ssub.s32 %s23, 2
        // Predicated region
        $region65: #{tpu_custom_call.1} parent=63 // pred_check
          %p3981 = pneg %p162
        $region66: #{tpu_custom_call.1} parent=63 // pred_check_branch
          %3983 = sbr.rel (%p3981) target = $region68
        $region67: #{tpu_custom_call.1} parent=63 // pred_region
          %s3984 = sand.u32 %s147, 1
          %s3985 = scalar_lea.sflag [#allocation5], %s3984
          %s3986 = sand.u32 %s147, 1
          %s3987 = smul.addr %s3986, 128
          %s3988 = scalar_lea.vmem [#allocation9], %s3987
          %3990 = dma.done %s3985, 2048
        $region68: #{tpu_custom_call.1} parent=63 // pred_fallthru
          _
        // Predicated region
        $region69: #{tpu_custom_call.1} parent=63 // pred_check
          %p3991 = pneg %p188
        $region70: #{tpu_custom_call.1} parent=63 // pred_check_branch
          %3993 = sbr.rel (%p3991) target = $region72
        $region71: #{tpu_custom_call.1} parent=63 // pred_region
          %s3994 = sand.u32 %s173, 1
          %s3995 = scalar_lea.sflag [#allocation11], %s3994
          %s3996 = sand.u32 %s173, 1
          %s3997 = scalar_lea.vmem [#allocation10], %s3996
          %3999 = dma.done %s3995, 16
        $region72: #{tpu_custom_call.1} parent=63 // pred_fallthru
          _
      $region64: #{tpu_custom_call.1} parent=5 // pred_fallthru
        _
    $region6: #{tpu_custom_call.1} parent=1 // loop_footer
      %s27 = sadd.s32 1, %s23
    $region7: #{tpu_custom_call.1} parent=1 // loop_footer_branch
      %22 = sbr.rel target = $region3
    $region8: #{tpu_custom_call.1} parent=1 // loop_exit
      _
    %4000 = vsyncpa [#allocation4], 1
    %s4001 = scalar_lea.sflag [#allocation4], 1
    %4002 = vsyncpa %s4001, 1
    %4003 = vsyncpa [#allocation7], 1
    %4004 = vsyncpa [#allocation5], 1
    %s4005 = scalar_lea.sflag [#allocation5], 1
    %4006 = vsyncpa %s4005, 1
    %4007 = vsyncpa [#allocation11], 1
    %s4008 = scalar_lea.sflag [#allocation11], 1
    %4009 = vsyncpa %s4008, 1

</llo_original>
